<compile_context>
chip_gen: v7x
topology: tpu7x:2x2x1
jax: 0.10.0
libtpu: 0.0.40
codegen_flags: <defaults>
</compile_context>

<pallas_src>
import functools

import jax
import jax.numpy as jnp
from jax import lax
from jax.experimental import pallas as pl
from jax.experimental.pallas import tpu as pltpu

LANE = 128


def _round_up(n, m):
    return ((n + m - 1) // m) * m


def _pad_axis(a, axis, target):
    pad = target - a.shape[axis]
    if pad <= 0:
        return a
    widths = [(0, 0)] * a.ndim
    widths[axis] = (0, pad)
    return jnp.pad(a, widths)


def _conv_row_toeplitz(w, w_in):
    """w: (OC, C, KH, KW) -> T: (KH, C*w_in, OC*OW) so that
    conv_out[oh, oc*OW+ow] = sum_i Xrow[oh+i, :] @ T[i]  (valid cross-corr)."""
    OC, C, KH, KW = w.shape
    OW = w_in - KW + 1
    j = jnp.arange(w_in)[:, None] - jnp.arange(OW)[None, :]
    valid = (j >= 0) & (j < KW)
    jc = jnp.clip(j, 0, KW - 1)
    wt = jnp.transpose(w, (2, 0, 1, 3))               # (KH, OC, C, KW)
    t = wt[:, :, :, jc]                               # (KH, OC, C, w_in, OW)
    t = jnp.where(valid[None, None, None], t, 0.0)
    t = jnp.transpose(t, (0, 2, 3, 1, 4))             # (KH, C, w_in, OC, OW)
    return t.reshape(KH, C * w_in, OC * OW).astype(jnp.float32)


def _pool_col_mat(w_in, n_ch):
    """Block-diagonal (n_ch*w_in, n_ch*w_in//2) matrix averaging column pairs."""
    ow = w_in // 2
    pw = (0.5 * (jnp.arange(w_in)[:, None] // 2
                 == jnp.arange(ow)[None, :])).astype(jnp.float32)
    return jnp.kron(jnp.eye(n_ch, dtype=jnp.float32), pw)


def _conv_pool_toeplitz(w, w_in, k_pad, n_pad):
    """(KH+1, k_pad, n_pad) matrices folding a valid 5x5 conv AND the following
    2x2 avg-pool:  pooled[r, oc*OWp+owp] = sum_j Xrow[2r+j] @ T[j]."""
    OC, C, KH, KW = w.shape
    OW = w_in - KW + 1
    t = _conv_row_toeplitz(w.astype(jnp.float32), w_in)   # (KH, C*w_in, OC*OW)
    z = jnp.zeros_like(t[:1])
    # row-pool fold: T'[j] = 0.5 * (T[j] + T[j-1])  (zero at the boundaries)
    tp = 0.5 * (jnp.concatenate([t, z], 0) + jnp.concatenate([z, t], 0))
    pc = _pool_col_mat(OW, OC)                            # (OC*OW, OC*OW//2)
    tpc = jnp.einsum('jkn,nm->jkm', tp, pc)
    return _pad_axis(_pad_axis(tpc, 1, k_pad), 2, n_pad)


# -----------------------------------------------------------------------------
# Fused Pallas kernel: whole LeNet5 forward for TB images per grid step.
# Merged row layout: row t*8 + u of every slab belongs to block-local image t;
# x phases hold input rows 4u + phase, p1e/p1o hold pool1 rows 2u / 2u+1,
# pool2 holds rows p (p < 5), h1 lives at row t*8 before compaction.
# -----------------------------------------------------------------------------
def _lenet5_kernel(x_ref, t1_ref, b1_ref, t2_ref, b2_ref,
                   fw1_ref, fb1_ref, fw2_ref, fb2_ref, fw3_ref, fb3_ref,
                   o_ref, *, tb):
    L = tb * 8            # merged rows (8 row-slots per image)
    L1 = L + 7            # rows computed for the pooled conv1 maps
    L2 = L + 5            # rows computed for the pooled conv2 map
    f32 = jnp.float32

    def mm(a, b):
        return jnp.dot(a, b, preferred_element_type=f32)

    x0 = x_ref[0]         # (L + 8, 128) : input rows 4u + 0
    x1 = x_ref[1]         # rows 4u + 1
    x2 = x_ref[2]         # rows 4u + 2
    x3 = x_ref[3]         # rows 4u + 3

    # ---- conv1 + 2x2 avg-pool (rows & cols folded into 6 Toeplitz mats) ----
    p1e = (mm(x0[0:L1], t1_ref[0]) + mm(x1[0:L1], t1_ref[1])
           + mm(x2[0:L1], t1_ref[2]) + mm(x3[0:L1], t1_ref[3])
           + mm(x0[1:L1 + 1], t1_ref[4]) + mm(x1[1:L1 + 1], t1_ref[5])
           + b1_ref[...])                                  # pool1 rows 2u
    p1o = (mm(x2[0:L1], t1_ref[0]) + mm(x3[0:L1], t1_ref[1])
           + mm(x0[1:L1 + 1], t1_ref[2]) + mm(x1[1:L1 + 1], t1_ref[3])
           + mm(x2[1:L1 + 1], t1_ref[4]) + mm(x3[1:L1 + 1], t1_ref[5])
           + b1_ref[...])                                  # pool1 rows 2u+1

    # ---- conv2 + 2x2 avg-pool ----------------------------------------------
    pool2 = b2_ref[...]
    for e in range(3):
        pool2 = (pool2 + mm(p1e[e:e + L2], t2_ref[2 * e])
                 + mm(p1o[e:e + L2], t2_ref[2 * e + 1]))

    # ---- fc1: h1[row t*8] = sum_p pool2[t*8 + p] @ FW1[p] ------------------
    h1 = mm(pool2[0:L], fw1_ref[0])
    for p in range(1, 5):
        h1 = h1 + mm(pool2[p:p + L], fw1_ref[p])
    h1 = h1 + fb1_ref[...]

    # compact row t*8 of every image into a dense (tb, 128) slab with a tiny
    # selection matmul (robust alternative to a strided sublane gather).
    rows = lax.broadcasted_iota(jnp.int32, (tb, L), 0)
    cols = lax.broadcasted_iota(jnp.int32, (tb, L), 1)
    sel = (cols == rows * 8).astype(f32)
    h1 = jnp.maximum(mm(sel, h1), 0.0)

    # ---- fc2 / fc3 on dense (tb, 128) data ----------------------------------
    h2 = jnp.maximum(mm(h1, fw2_ref[...]) + fb2_ref[...], 0.0)
    o_ref[...] = mm(h2, fw3_ref[...]) + fb3_ref[...]       # lane-dense store


# -----------------------------------------------------------------------------
# Wrapper: layout / weight preparation + pallas_call
# -----------------------------------------------------------------------------
def lenet5_forward(x, params):
    (w1, b1, w2, b2, fw1, fb1, fw2, fb2, fw3, fb3) = params
    f32 = jnp.float32
    B, C, H, W = x.shape
    KH = w1.shape[2]                                   # 5
    OC1 = w1.shape[0]                                  # 6
    OH1, OW1 = H - KH + 1, W - KH + 1                  # 28, 28
    PH1, PW1 = OH1 // 2, OW1 // 2                      # 14, 14
    OC2 = w2.shape[0]                                  # 16
    OW2 = PW1 - KH + 1                                 # 10
    PH2, PW2 = (PH1 - KH + 1) // 2, OW2 // 2           # 5, 5
    n_cls = fw3.shape[1]                               # 10
    assert H == 32 and W == 32 and KH == 5, "kernel is specialised to LeNet5/CIFAR"

    k1 = _round_up(C * W, LANE)                        # 128
    k2 = _round_up(OC1 * PW1, LANE)                    # 128
    k3 = _round_up(OC2 * PW2, LANE)                    # 128
    n1 = _round_up(fw1.shape[1], LANE)                 # 128
    n2 = _round_up(fw2.shape[1], LANE)                 # 128
    n3 = _round_up(n_cls, LANE)                        # 128

    # ---- batch tiling: TB images per grid step (multiple of 8) -------------
    B8 = _round_up(B, 8)
    if B8 >= 16:
        TB = min(64, (B8 // 16) * 8)   # >= 2 grid steps -> both v7x TCs busy
    else:
        TB = B8
    G = (B + TB - 1) // TB
    B_pad = G * TB
    L = TB * 8
    Lx = L + 8                         # 8 slack rows per step for the +1 row shift

    # ---- input: NCHW -> row-phase-deinterleaved (4, G*Lx, 128) slabs -------
    # TODO(synk): keep activations in this layout upstream to drop this pass.
    xp = _pad_axis(x.astype(f32), 0, B_pad)
    xr = xp.transpose(0, 2, 1, 3).reshape(B_pad, H, C * W)
    xr = _pad_axis(xr, 2, k1)                                       # (B,32,128)
    xr = xr.reshape(B_pad, H // 4, 4, k1).transpose(0, 2, 1, 3)     # (B,4,8,128)
    xr = xr.reshape(G, TB, 4, H // 4, k1).transpose(2, 0, 1, 3, 4)  # (4,G,TB,8,128)
    xr = xr.reshape(4, G, L, k1)
    xr = jnp.pad(xr, ((0, 0), (0, 0), (0, Lx - L), (0, 0)))
    xr = xr.reshape(4, G * Lx, k1)

    # ---- weights: conv+pool folded Toeplitz stacks, lane-padded fc stack ---
    t1 = _conv_pool_toeplitz(w1, W, k1, k2)            # (6, 128, 128)
    b1p = _pad_axis(jnp.repeat(b1.astype(f32), PW1).reshape(1, -1), 1, k2)
    t2 = _conv_pool_toeplitz(w2, PW1, k2, k3)          # (6, 128, 128)
    b2p = _pad_axis(jnp.repeat(b2.astype(f32), PW2).reshape(1, -1), 1, k3)

    fw1p = fw1.astype(f32).reshape(OC2, PH2, PW2, -1).transpose(1, 0, 2, 3)
    fw1p = fw1p.reshape(PH2, OC2 * PW2, -1)
    fw1p = _pad_axis(_pad_axis(fw1p, 1, k3), 2, n1)    # (5, 128, 128)
    fb1p = _pad_axis(fb1.astype(f32).reshape(1, -1), 1, n1)
    fw2p = _pad_axis(_pad_axis(fw2.astype(f32), 0, n1), 1, n2)
    fb2p = _pad_axis(fb2.astype(f32).reshape(1, -1), 1, n2)
    fw3p = _pad_axis(_pad_axis(fw3.astype(f32), 0, n2), 1, n3)
    fb3p = _pad_axis(fb3.astype(f32).reshape(1, -1), 1, n3)

    def full(a):   # whole-array block, constant index map (VMEM-resident weights)
        return pl.BlockSpec(a.shape, lambda i, n=a.ndim: (0,) * n)

    flops = B_pad * (23 * 8 * 128 * 128 * 2)           # dominant matmul terms
    bytes_accessed = int(xr.size) * 4 + B_pad * n3 * 4 + 1_400_000

    kernel = functools.partial(_lenet5_kernel, tb=TB)
    out = pl.pallas_call(
        kernel,
        out_shape=jax.ShapeDtypeStruct((B_pad, n3), f32),
        grid=(G,),
        in_specs=[
            pl.BlockSpec((4, Lx, k1), lambda i: (0, i, 0)),
            full(t1), full(b1p), full(t2), full(b2p),
            full(fw1p), full(fb1p), full(fw2p), full(fb2p),
            full(fw3p), full(fb3p),
        ],
        out_specs=pl.BlockSpec((TB, n3), lambda i: (i, 0)),
        compiler_params=pltpu.CompilerParams(
            dimension_semantics=("parallel",),
            vmem_limit_bytes=32 * 1024 * 1024),
        cost_estimate=pl.CostEstimate(
            flops=flops, transcendentals=0, bytes_accessed=bytes_accessed),
    )(xr, t1, b1p, t2, b2p, fw1p, fb1p, fw2p, fb2p, fw3p, fb3p)

    return out[:B, :n_cls]


# -----------------------------------------------------------------------------
# Pure-JAX reference (correctness sanity check)
# -----------------------------------------------------------------------------
def _avgpool_ref(x):
    B, C, H, W = x.shape
    return x.reshape(B, C, H // 2, 2, W // 2, 2).mean(axis=(3, 5))


def lenet5_ref(x, params):
    (w1, b1, w2, b2, fw1, fb1, fw2, fb2, fw3, fb3) = params
    dn = ('NCHW', 'OIHW', 'NCHW')
    y = lax.conv_general_dilated(x, w1, (1, 1), 'VALID', dimension_numbers=dn)
    y = y + b1[None, :, None, None]
    y = _avgpool_ref(y)
    y = lax.conv_general_dilated(y, w2, (1, 1), 'VALID', dimension_numbers=dn)
    y = y + b2[None, :, None, None]
    y = _avgpool_ref(y)
    y = y.reshape(y.shape[0], -1)
    y = jnp.maximum(y @ fw1 + fb1, 0.0)
    y = jnp.maximum(y @ fw2 + fb2, 0.0)
    y = y @ fw3 + fb3
    return y


# -----------------------------------------------------------------------------
# Deterministic parameter construction (shapes from the PyTorch __init__)
# -----------------------------------------------------------------------------
def make_params(key):
    keys = jax.random.split(key, 10)

    def rnd(k, shape, scale):
        return (scale * jax.random.normal(k, shape)).astype(jnp.float32)

    w1 = rnd(keys[0], (6, 3, 5, 5), 0.1)
    b1 = rnd(keys[1], (6,), 0.1)
    w2 = rnd(keys[2], (16, 6, 5, 5), 0.1)
    b2 = rnd(keys[3], (16,), 0.1)
    fw1 = rnd(keys[4], (400, 120), 0.05)
    fb1 = rnd(keys[5], (120,), 0.05)
    fw2 = rnd(keys[6], (120, 64), 0.05)
    fb2 = rnd(keys[7], (64,), 0.05)
    fw3 = rnd(keys[8], (64, 10), 0.05)
    fb3 = rnd(keys[9], (10,), 0.05)
    return (w1, b1, w2, b2, fw1, fb1, fw2, fb2, fw3, fb3)


if __name__ == "__main__":
    # CIFAR-10 shaped input (the fc_unit's 16*5*5 input dim implies 3x32x32).
    # batch=16 exercises the batched multi-step grid (TB=8, grid=(2,)).
    root = jax.random.PRNGKey(0)
    kx, kp = jax.random.split(root)
    x = jax.random.normal(kx, (16, 3, 32, 32), dtype=jnp.float32)
    params = make_params(kp)

    fwd = jax.jit(lenet5_forward)
    out = jax.block_until_ready(fwd(x, params))
    assert out.shape == (16, 10), f"unexpected output shape {out.shape}"

    ref = jax.block_until_ready(lenet5_ref(x, params))
    assert jnp.allclose(out, ref, atol=1e-3, rtol=1e-3), \
        "Pallas output mismatch vs JAX reference"

    print("KERNEL_OK")
</pallas_src>

<mosaic_0001>
module attributes {stable_mosaic.version = 11 : i64} {
  func.func @_lenet5_kernel(%arg0: i32, %arg1: memref<4x72x128xf32, #tpu.memory_space<vmem>>, %arg2: memref<6x128x128xf32, #tpu.memory_space<vmem>>, %arg3: memref<1x128xf32, #tpu.memory_space<vmem>>, %arg4: memref<6x128x128xf32, #tpu.memory_space<vmem>>, %arg5: memref<1x128xf32, #tpu.memory_space<vmem>>, %arg6: memref<5x128x128xf32, #tpu.memory_space<vmem>>, %arg7: memref<1x128xf32, #tpu.memory_space<vmem>>, %arg8: memref<128x128xf32, #tpu.memory_space<vmem>>, %arg9: memref<1x128xf32, #tpu.memory_space<vmem>>, %arg10: memref<128x128xf32, #tpu.memory_space<vmem>>, %arg11: memref<1x128xf32, #tpu.memory_space<vmem>>, %arg12: memref<8x128xf32, #tpu.memory_space<vmem>>) attributes {dimension_semantics = [#tpu.dimension_semantics<parallel>], iteration_bounds = array<i64: 2>, scalar_prefetch = 0 : i64, scratch_operands = 0 : i64, tpu.core_type = #tpu.core_type<tc>, window_params = [{transform_indices = @transform_0, window_bounds = array<i64: 4, 72, 128>}, {pipeline_mode = #tpu.pipeline_mode<synchronous>, transform_indices = @transform_1, window_bounds = array<i64: 6, 128, 128>}, {pipeline_mode = #tpu.pipeline_mode<synchronous>, transform_indices = @transform_2, window_bounds = array<i64: 1, 128>}, {pipeline_mode = #tpu.pipeline_mode<synchronous>, transform_indices = @transform_3, window_bounds = array<i64: 6, 128, 128>}, {pipeline_mode = #tpu.pipeline_mode<synchronous>, transform_indices = @transform_4, window_bounds = array<i64: 1, 128>}, {pipeline_mode = #tpu.pipeline_mode<synchronous>, transform_indices = @transform_5, window_bounds = array<i64: 5, 128, 128>}, {pipeline_mode = #tpu.pipeline_mode<synchronous>, transform_indices = @transform_6, window_bounds = array<i64: 1, 128>}, {pipeline_mode = #tpu.pipeline_mode<synchronous>, transform_indices = @transform_7, window_bounds = array<i64: 128, 128>}, {pipeline_mode = #tpu.pipeline_mode<synchronous>, transform_indices = @transform_8, window_bounds = array<i64: 1, 128>}, {pipeline_mode = #tpu.pipeline_mode<synchronous>, transform_indices = @transform_9, window_bounds = array<i64: 128, 128>}, {pipeline_mode = #tpu.pipeline_mode<synchronous>, transform_indices = @transform_10, window_bounds = array<i64: 1, 128>}, {transform_indices = @transform_11, window_bounds = array<i64: 8, 128>}]} {
    %c0 = arith.constant 0 : index
    %c0_0 = arith.constant 0 : index
    %c0_1 = arith.constant 0 : index
    %0 = vector.load %arg1[%c0, %c0_0, %c0_1] : memref<4x72x128xf32, #tpu.memory_space<vmem>>, vector<1x72x128xf32>
    %1 = vector.shape_cast %0 : vector<1x72x128xf32> to vector<72x128xf32>
    %c1 = arith.constant 1 : index
    %c0_2 = arith.constant 0 : index
    %c0_3 = arith.constant 0 : index
    %2 = vector.load %arg1[%c1, %c0_2, %c0_3] : memref<4x72x128xf32, #tpu.memory_space<vmem>>, vector<1x72x128xf32>
    %3 = vector.shape_cast %2 : vector<1x72x128xf32> to vector<72x128xf32>
    %c2 = arith.constant 2 : index
    %c0_4 = arith.constant 0 : index
    %c0_5 = arith.constant 0 : index
    %4 = vector.load %arg1[%c2, %c0_4, %c0_5] : memref<4x72x128xf32, #tpu.memory_space<vmem>>, vector<1x72x128xf32>
    %5 = vector.shape_cast %4 : vector<1x72x128xf32> to vector<72x128xf32>
    %c3 = arith.constant 3 : index
    %c0_6 = arith.constant 0 : index
    %c0_7 = arith.constant 0 : index
    %6 = vector.load %arg1[%c3, %c0_6, %c0_7] : memref<4x72x128xf32, #tpu.memory_space<vmem>>, vector<1x72x128xf32>
    %7 = vector.shape_cast %6 : vector<1x72x128xf32> to vector<72x128xf32>
    %8 = vector.extract_strided_slice %1 {offsets = [0, 0], sizes = [71, 128], strides = [1, 1]} : vector<72x128xf32> to vector<71x128xf32>
    %c0_8 = arith.constant 0 : index
    %c0_9 = arith.constant 0 : index
    %c0_10 = arith.constant 0 : index
    %9 = vector.load %arg2[%c0_8, %c0_9, %c0_10] : memref<6x128x128xf32, #tpu.memory_space<vmem>>, vector<1x128x128xf32>
    %10 = vector.shape_cast %9 : vector<1x128x128xf32> to vector<128x128xf32>
    %cst = arith.constant dense<0.000000e+00> : vector<71x128xf32>
    %11 = tpu.matmul %8, %10, %cst {dimension_numbers = #tpu.dot_dimension_numbers<[1], [0], [0], [1], [0, 0, 1, 1], [], []>} : vector<71x128xf32>, vector<128x128xf32>, vector<71x128xf32> -> vector<71x128xf32>
    %12 = vector.extract_strided_slice %3 {offsets = [0, 0], sizes = [71, 128], strides = [1, 1]} : vector<72x128xf32> to vector<71x128xf32>
    %c1_11 = arith.constant 1 : index
    %c0_12 = arith.constant 0 : index
    %c0_13 = arith.constant 0 : index
    %13 = vector.load %arg2[%c1_11, %c0_12, %c0_13] : memref<6x128x128xf32, #tpu.memory_space<vmem>>, vector<1x128x128xf32>
    %14 = vector.shape_cast %13 : vector<1x128x128xf32> to vector<128x128xf32>
    %cst_14 = arith.constant dense<0.000000e+00> : vector<71x128xf32>
    %15 = tpu.matmul %12, %14, %cst_14 {dimension_numbers = #tpu.dot_dimension_numbers<[1], [0], [0], [1], [0, 0, 1, 1], [], []>} : vector<71x128xf32>, vector<128x128xf32>, vector<71x128xf32> -> vector<71x128xf32>
    %16 = arith.addf %11, %15 : vector<71x128xf32>
    %17 = vector.extract_strided_slice %5 {offsets = [0, 0], sizes = [71, 128], strides = [1, 1]} : vector<72x128xf32> to vector<71x128xf32>
    %c2_15 = arith.constant 2 : index
    %c0_16 = arith.constant 0 : index
    %c0_17 = arith.constant 0 : index
    %18 = vector.load %arg2[%c2_15, %c0_16, %c0_17] : memref<6x128x128xf32, #tpu.memory_space<vmem>>, vector<1x128x128xf32>
    %19 = vector.shape_cast %18 : vector<1x128x128xf32> to vector<128x128xf32>
    %cst_18 = arith.constant dense<0.000000e+00> : vector<71x128xf32>
    %20 = tpu.matmul %17, %19, %cst_18 {dimension_numbers = #tpu.dot_dimension_numbers<[1], [0], [0], [1], [0, 0, 1, 1], [], []>} : vector<71x128xf32>, vector<128x128xf32>, vector<71x128xf32> -> vector<71x128xf32>
    %21 = arith.addf %16, %20 : vector<71x128xf32>
    %22 = vector.extract_strided_slice %7 {offsets = [0, 0], sizes = [71, 128], strides = [1, 1]} : vector<72x128xf32> to vector<71x128xf32>
    %c3_19 = arith.constant 3 : index
    %c0_20 = arith.constant 0 : index
    %c0_21 = arith.constant 0 : index
    %23 = vector.load %arg2[%c3_19, %c0_20, %c0_21] : memref<6x128x128xf32, #tpu.memory_space<vmem>>, vector<1x128x128xf32>
    %24 = vector.shape_cast %23 : vector<1x128x128xf32> to vector<128x128xf32>
    %cst_22 = arith.constant dense<0.000000e+00> : vector<71x128xf32>
    %25 = tpu.matmul %22, %24, %cst_22 {dimension_numbers = #tpu.dot_dimension_numbers<[1], [0], [0], [1], [0, 0, 1, 1], [], []>} : vector<71x128xf32>, vector<128x128xf32>, vector<71x128xf32> -> vector<71x128xf32>
    %26 = arith.addf %21, %25 : vector<71x128xf32>
    %27 = vector.extract_strided_slice %1 {offsets = [1, 0], sizes = [71, 128], strides = [1, 1]} : vector<72x128xf32> to vector<71x128xf32>
    %c4 = arith.constant 4 : index
    %c0_23 = arith.constant 0 : index
    %c0_24 = arith.constant 0 : index
    %28 = vector.load %arg2[%c4, %c0_23, %c0_24] : memref<6x128x128xf32, #tpu.memory_space<vmem>>, vector<1x128x128xf32>
    %29 = vector.shape_cast %28 : vector<1x128x128xf32> to vector<128x128xf32>
    %cst_25 = arith.constant dense<0.000000e+00> : vector<71x128xf32>
    %30 = tpu.matmul %27, %29, %cst_25 {dimension_numbers = #tpu.dot_dimension_numbers<[1], [0], [0], [1], [0, 0, 1, 1], [], []>} : vector<71x128xf32>, vector<128x128xf32>, vector<71x128xf32> -> vector<71x128xf32>
    %31 = arith.addf %26, %30 : vector<71x128xf32>
    %32 = vector.extract_strided_slice %3 {offsets = [1, 0], sizes = [71, 128], strides = [1, 1]} : vector<72x128xf32> to vector<71x128xf32>
    %c5 = arith.constant 5 : index
    %c0_26 = arith.constant 0 : index
    %c0_27 = arith.constant 0 : index
    %33 = vector.load %arg2[%c5, %c0_26, %c0_27] : memref<6x128x128xf32, #tpu.memory_space<vmem>>, vector<1x128x128xf32>
    %34 = vector.shape_cast %33 : vector<1x128x128xf32> to vector<128x128xf32>
    %cst_28 = arith.constant dense<0.000000e+00> : vector<71x128xf32>
    %35 = tpu.matmul %32, %34, %cst_28 {dimension_numbers = #tpu.dot_dimension_numbers<[1], [0], [0], [1], [0, 0, 1, 1], [], []>} : vector<71x128xf32>, vector<128x128xf32>, vector<71x128xf32> -> vector<71x128xf32>
    %36 = arith.addf %31, %35 : vector<71x128xf32>
    %c0_29 = arith.constant 0 : index
    %c0_30 = arith.constant 0 : index
    %37 = vector.load %arg3[%c0_29, %c0_30] : memref<1x128xf32, #tpu.memory_space<vmem>>, vector<1x128xf32>
    %38 = vector.broadcast %37 : vector<1x128xf32> to vector<71x128xf32>
    %39 = arith.addf %36, %38 : vector<71x128xf32>
    %40 = vector.extract_strided_slice %5 {offsets = [0, 0], sizes = [71, 128], strides = [1, 1]} : vector<72x128xf32> to vector<71x128xf32>
    %c0_31 = arith.constant 0 : index
    %c0_32 = arith.constant 0 : index
    %c0_33 = arith.constant 0 : index
    %41 = vector.load %arg2[%c0_31, %c0_32, %c0_33] : memref<6x128x128xf32, #tpu.memory_space<vmem>>, vector<1x128x128xf32>
    %42 = vector.shape_cast %41 : vector<1x128x128xf32> to vector<128x128xf32>
    %cst_34 = arith.constant dense<0.000000e+00> : vector<71x128xf32>
    %43 = tpu.matmul %40, %42, %cst_34 {dimension_numbers = #tpu.dot_dimension_numbers<[1], [0], [0], [1], [0, 0, 1, 1], [], []>} : vector<71x128xf32>, vector<128x128xf32>, vector<71x128xf32> -> vector<71x128xf32>
    %44 = vector.extract_strided_slice %7 {offsets = [0, 0], sizes = [71, 128], strides = [1, 1]} : vector<72x128xf32> to vector<71x128xf32>
    %c1_35 = arith.constant 1 : index
    %c0_36 = arith.constant 0 : index
    %c0_37 = arith.constant 0 : index
    %45 = vector.load %arg2[%c1_35, %c0_36, %c0_37] : memref<6x128x128xf32, #tpu.memory_space<vmem>>, vector<1x128x128xf32>
    %46 = vector.shape_cast %45 : vector<1x128x128xf32> to vector<128x128xf32>
    %cst_38 = arith.constant dense<0.000000e+00> : vector<71x128xf32>
    %47 = tpu.matmul %44, %46, %cst_38 {dimension_numbers = #tpu.dot_dimension_numbers<[1], [0], [0], [1], [0, 0, 1, 1], [], []>} : vector<71x128xf32>, vector<128x128xf32>, vector<71x128xf32> -> vector<71x128xf32>
    %48 = arith.addf %43, %47 : vector<71x128xf32>
    %49 = vector.extract_strided_slice %1 {offsets = [1, 0], sizes = [71, 128], strides = [1, 1]} : vector<72x128xf32> to vector<71x128xf32>
    %c2_39 = arith.constant 2 : index
    %c0_40 = arith.constant 0 : index
    %c0_41 = arith.constant 0 : index
    %50 = vector.load %arg2[%c2_39, %c0_40, %c0_41] : memref<6x128x128xf32, #tpu.memory_space<vmem>>, vector<1x128x128xf32>
    %51 = vector.shape_cast %50 : vector<1x128x128xf32> to vector<128x128xf32>
    %cst_42 = arith.constant dense<0.000000e+00> : vector<71x128xf32>
    %52 = tpu.matmul %49, %51, %cst_42 {dimension_numbers = #tpu.dot_dimension_numbers<[1], [0], [0], [1], [0, 0, 1, 1], [], []>} : vector<71x128xf32>, vector<128x128xf32>, vector<71x128xf32> -> vector<71x128xf32>
    %53 = arith.addf %48, %52 : vector<71x128xf32>
    %54 = vector.extract_strided_slice %3 {offsets = [1, 0], sizes = [71, 128], strides = [1, 1]} : vector<72x128xf32> to vector<71x128xf32>
    %c3_43 = arith.constant 3 : index
    %c0_44 = arith.constant 0 : index
    %c0_45 = arith.constant 0 : index
    %55 = vector.load %arg2[%c3_43, %c0_44, %c0_45] : memref<6x128x128xf32, #tpu.memory_space<vmem>>, vector<1x128x128xf32>
    %56 = vector.shape_cast %55 : vector<1x128x128xf32> to vector<128x128xf32>
    %cst_46 = arith.constant dense<0.000000e+00> : vector<71x128xf32>
    %57 = tpu.matmul %54, %56, %cst_46 {dimension_numbers = #tpu.dot_dimension_numbers<[1], [0], [0], [1], [0, 0, 1, 1], [], []>} : vector<71x128xf32>, vector<128x128xf32>, vector<71x128xf32> -> vector<71x128xf32>
    %58 = arith.addf %53, %57 : vector<71x128xf32>
    %59 = vector.extract_strided_slice %5 {offsets = [1, 0], sizes = [71, 128], strides = [1, 1]} : vector<72x128xf32> to vector<71x128xf32>
    %c4_47 = arith.constant 4 : index
    %c0_48 = arith.constant 0 : index
    %c0_49 = arith.constant 0 : index
    %60 = vector.load %arg2[%c4_47, %c0_48, %c0_49] : memref<6x128x128xf32, #tpu.memory_space<vmem>>, vector<1x128x128xf32>
    %61 = vector.shape_cast %60 : vector<1x128x128xf32> to vector<128x128xf32>
    %cst_50 = arith.constant dense<0.000000e+00> : vector<71x128xf32>
    %62 = tpu.matmul %59, %61, %cst_50 {dimension_numbers = #tpu.dot_dimension_numbers<[1], [0], [0], [1], [0, 0, 1, 1], [], []>} : vector<71x128xf32>, vector<128x128xf32>, vector<71x128xf32> -> vector<71x128xf32>
    %63 = arith.addf %58, %62 : vector<71x128xf32>
    %64 = vector.extract_strided_slice %7 {offsets = [1, 0], sizes = [71, 128], strides = [1, 1]} : vector<72x128xf32> to vector<71x128xf32>
    %c5_51 = arith.constant 5 : index
    %c0_52 = arith.constant 0 : index
    %c0_53 = arith.constant 0 : index
    %65 = vector.load %arg2[%c5_51, %c0_52, %c0_53] : memref<6x128x128xf32, #tpu.memory_space<vmem>>, vector<1x128x128xf32>
    %66 = vector.shape_cast %65 : vector<1x128x128xf32> to vector<128x128xf32>
    %cst_54 = arith.constant dense<0.000000e+00> : vector<71x128xf32>
    %67 = tpu.matmul %64, %66, %cst_54 {dimension_numbers = #tpu.dot_dimension_numbers<[1], [0], [0], [1], [0, 0, 1, 1], [], []>} : vector<71x128xf32>, vector<128x128xf32>, vector<71x128xf32> -> vector<71x128xf32>
    %68 = arith.addf %63, %67 : vector<71x128xf32>
    %c0_55 = arith.constant 0 : index
    %c0_56 = arith.constant 0 : index
    %69 = vector.load %arg3[%c0_55, %c0_56] : memref<1x128xf32, #tpu.memory_space<vmem>>, vector<1x128xf32>
    %70 = vector.broadcast %69 : vector<1x128xf32> to vector<71x128xf32>
    %71 = arith.addf %68, %70 : vector<71x128xf32>
    %c0_57 = arith.constant 0 : index
    %c0_58 = arith.constant 0 : index
    %72 = vector.load %arg5[%c0_57, %c0_58] : memref<1x128xf32, #tpu.memory_space<vmem>>, vector<1x128xf32>
    %73 = vector.extract_strided_slice %39 {offsets = [0, 0], sizes = [69, 128], strides = [1, 1]} : vector<71x128xf32> to vector<69x128xf32>
    %c0_59 = arith.constant 0 : index
    %c0_60 = arith.constant 0 : index
    %c0_61 = arith.constant 0 : index
    %74 = vector.load %arg4[%c0_59, %c0_60, %c0_61] : memref<6x128x128xf32, #tpu.memory_space<vmem>>, vector<1x128x128xf32>
    %75 = vector.shape_cast %74 : vector<1x128x128xf32> to vector<128x128xf32>
    %cst_62 = arith.constant dense<0.000000e+00> : vector<69x128xf32>
    %76 = tpu.matmul %73, %75, %cst_62 {dimension_numbers = #tpu.dot_dimension_numbers<[1], [0], [0], [1], [0, 0, 1, 1], [], []>} : vector<69x128xf32>, vector<128x128xf32>, vector<69x128xf32> -> vector<69x128xf32>
    %77 = vector.broadcast %72 : vector<1x128xf32> to vector<69x128xf32>
    %78 = arith.addf %77, %76 : vector<69x128xf32>
    %79 = vector.extract_strided_slice %71 {offsets = [0, 0], sizes = [69, 128], strides = [1, 1]} : vector<71x128xf32> to vector<69x128xf32>
    %c1_63 = arith.constant 1 : index
    %c0_64 = arith.constant 0 : index
    %c0_65 = arith.constant 0 : index
    %80 = vector.load %arg4[%c1_63, %c0_64, %c0_65] : memref<6x128x128xf32, #tpu.memory_space<vmem>>, vector<1x128x128xf32>
    %81 = vector.shape_cast %80 : vector<1x128x128xf32> to vector<128x128xf32>
    %cst_66 = arith.constant dense<0.000000e+00> : vector<69x128xf32>
    %82 = tpu.matmul %79, %81, %cst_66 {dimension_numbers = #tpu.dot_dimension_numbers<[1], [0], [0], [1], [0, 0, 1, 1], [], []>} : vector<69x128xf32>, vector<128x128xf32>, vector<69x128xf32> -> vector<69x128xf32>
    %83 = arith.addf %78, %82 : vector<69x128xf32>
    %84 = vector.extract_strided_slice %39 {offsets = [1, 0], sizes = [69, 128], strides = [1, 1]} : vector<71x128xf32> to vector<69x128xf32>
    %c2_67 = arith.constant 2 : index
    %c0_68 = arith.constant 0 : index
    %c0_69 = arith.constant 0 : index
    %85 = vector.load %arg4[%c2_67, %c0_68, %c0_69] : memref<6x128x128xf32, #tpu.memory_space<vmem>>, vector<1x128x128xf32>
    %86 = vector.shape_cast %85 : vector<1x128x128xf32> to vector<128x128xf32>
    %cst_70 = arith.constant dense<0.000000e+00> : vector<69x128xf32>
    %87 = tpu.matmul %84, %86, %cst_70 {dimension_numbers = #tpu.dot_dimension_numbers<[1], [0], [0], [1], [0, 0, 1, 1], [], []>} : vector<69x128xf32>, vector<128x128xf32>, vector<69x128xf32> -> vector<69x128xf32>
    %88 = arith.addf %83, %87 : vector<69x128xf32>
    %89 = vector.extract_strided_slice %71 {offsets = [1, 0], sizes = [69, 128], strides = [1, 1]} : vector<71x128xf32> to vector<69x128xf32>
    %c3_71 = arith.constant 3 : index
    %c0_72 = arith.constant 0 : index
    %c0_73 = arith.constant 0 : index
    %90 = vector.load %arg4[%c3_71, %c0_72, %c0_73] : memref<6x128x128xf32, #tpu.memory_space<vmem>>, vector<1x128x128xf32>
    %91 = vector.shape_cast %90 : vector<1x128x128xf32> to vector<128x128xf32>
    %cst_74 = arith.constant dense<0.000000e+00> : vector<69x128xf32>
    %92 = tpu.matmul %89, %91, %cst_74 {dimension_numbers = #tpu.dot_dimension_numbers<[1], [0], [0], [1], [0, 0, 1, 1], [], []>} : vector<69x128xf32>, vector<128x128xf32>, vector<69x128xf32> -> vector<69x128xf32>
    %93 = arith.addf %88, %92 : vector<69x128xf32>
    %94 = vector.extract_strided_slice %39 {offsets = [2, 0], sizes = [69, 128], strides = [1, 1]} : vector<71x128xf32> to vector<69x128xf32>
    %c4_75 = arith.constant 4 : index
    %c0_76 = arith.constant 0 : index
    %c0_77 = arith.constant 0 : index
    %95 = vector.load %arg4[%c4_75, %c0_76, %c0_77] : memref<6x128x128xf32, #tpu.memory_space<vmem>>, vector<1x128x128xf32>
    %96 = vector.shape_cast %95 : vector<1x128x128xf32> to vector<128x128xf32>
    %cst_78 = arith.constant dense<0.000000e+00> : vector<69x128xf32>
    %97 = tpu.matmul %94, %96, %cst_78 {dimension_numbers = #tpu.dot_dimension_numbers<[1], [0], [0], [1], [0, 0, 1, 1], [], []>} : vector<69x128xf32>, vector<128x128xf32>, vector<69x128xf32> -> vector<69x128xf32>
    %98 = arith.addf %93, %97 : vector<69x128xf32>
    %99 = vector.extract_strided_slice %71 {offsets = [2, 0], sizes = [69, 128], strides = [1, 1]} : vector<71x128xf32> to vector<69x128xf32>
    %c5_79 = arith.constant 5 : index
    %c0_80 = arith.constant 0 : index
    %c0_81 = arith.constant 0 : index
    %100 = vector.load %arg4[%c5_79, %c0_80, %c0_81] : memref<6x128x128xf32, #tpu.memory_space<vmem>>, vector<1x128x128xf32>
    %101 = vector.shape_cast %100 : vector<1x128x128xf32> to vector<128x128xf32>
    %cst_82 = arith.constant dense<0.000000e+00> : vector<69x128xf32>
    %102 = tpu.matmul %99, %101, %cst_82 {dimension_numbers = #tpu.dot_dimension_numbers<[1], [0], [0], [1], [0, 0, 1, 1], [], []>} : vector<69x128xf32>, vector<128x128xf32>, vector<69x128xf32> -> vector<69x128xf32>
    %103 = arith.addf %98, %102 : vector<69x128xf32>
    %104 = vector.extract_strided_slice %103 {offsets = [0, 0], sizes = [64, 128], strides = [1, 1]} : vector<69x128xf32> to vector<64x128xf32>
    %c0_83 = arith.constant 0 : index
    %c0_84 = arith.constant 0 : index
    %c0_85 = arith.constant 0 : index
    %105 = vector.load %arg6[%c0_83, %c0_84, %c0_85] : memref<5x128x128xf32, #tpu.memory_space<vmem>>, vector<1x128x128xf32>
    %106 = vector.shape_cast %105 : vector<1x128x128xf32> to vector<128x128xf32>
    %cst_86 = arith.constant dense<0.000000e+00> : vector<64x128xf32>
    %107 = tpu.matmul %104, %106, %cst_86 {dimension_numbers = #tpu.dot_dimension_numbers<[1], [0], [0], [1], [0, 0, 1, 1], [], []>} : vector<64x128xf32>, vector<128x128xf32>, vector<64x128xf32> -> vector<64x128xf32>
    %108 = vector.extract_strided_slice %103 {offsets = [1, 0], sizes = [64, 128], strides = [1, 1]} : vector<69x128xf32> to vector<64x128xf32>
    %c1_87 = arith.constant 1 : index
    %c0_88 = arith.constant 0 : index
    %c0_89 = arith.constant 0 : index
    %109 = vector.load %arg6[%c1_87, %c0_88, %c0_89] : memref<5x128x128xf32, #tpu.memory_space<vmem>>, vector<1x128x128xf32>
    %110 = vector.shape_cast %109 : vector<1x128x128xf32> to vector<128x128xf32>
    %cst_90 = arith.constant dense<0.000000e+00> : vector<64x128xf32>
    %111 = tpu.matmul %108, %110, %cst_90 {dimension_numbers = #tpu.dot_dimension_numbers<[1], [0], [0], [1], [0, 0, 1, 1], [], []>} : vector<64x128xf32>, vector<128x128xf32>, vector<64x128xf32> -> vector<64x128xf32>
    %112 = arith.addf %107, %111 : vector<64x128xf32>
    %113 = vector.extract_strided_slice %103 {offsets = [2, 0], sizes = [64, 128], strides = [1, 1]} : vector<69x128xf32> to vector<64x128xf32>
    %c2_91 = arith.constant 2 : index
    %c0_92 = arith.constant 0 : index
    %c0_93 = arith.constant 0 : index
    %114 = vector.load %arg6[%c2_91, %c0_92, %c0_93] : memref<5x128x128xf32, #tpu.memory_space<vmem>>, vector<1x128x128xf32>
    %115 = vector.shape_cast %114 : vector<1x128x128xf32> to vector<128x128xf32>
    %cst_94 = arith.constant dense<0.000000e+00> : vector<64x128xf32>
    %116 = tpu.matmul %113, %115, %cst_94 {dimension_numbers = #tpu.dot_dimension_numbers<[1], [0], [0], [1], [0, 0, 1, 1], [], []>} : vector<64x128xf32>, vector<128x128xf32>, vector<64x128xf32> -> vector<64x128xf32>
    %117 = arith.addf %112, %116 : vector<64x128xf32>
    %118 = vector.extract_strided_slice %103 {offsets = [3, 0], sizes = [64, 128], strides = [1, 1]} : vector<69x128xf32> to vector<64x128xf32>
    %c3_95 = arith.constant 3 : index
    %c0_96 = arith.constant 0 : index
    %c0_97 = arith.constant 0 : index
    %119 = vector.load %arg6[%c3_95, %c0_96, %c0_97] : memref<5x128x128xf32, #tpu.memory_space<vmem>>, vector<1x128x128xf32>
    %120 = vector.shape_cast %119 : vector<1x128x128xf32> to vector<128x128xf32>
    %cst_98 = arith.constant dense<0.000000e+00> : vector<64x128xf32>
    %121 = tpu.matmul %118, %120, %cst_98 {dimension_numbers = #tpu.dot_dimension_numbers<[1], [0], [0], [1], [0, 0, 1, 1], [], []>} : vector<64x128xf32>, vector<128x128xf32>, vector<64x128xf32> -> vector<64x128xf32>
    %122 = arith.addf %117, %121 : vector<64x128xf32>
    %123 = vector.extract_strided_slice %103 {offsets = [4, 0], sizes = [64, 128], strides = [1, 1]} : vector<69x128xf32> to vector<64x128xf32>
    %c4_99 = arith.constant 4 : index
    %c0_100 = arith.constant 0 : index
    %c0_101 = arith.constant 0 : index
    %124 = vector.load %arg6[%c4_99, %c0_100, %c0_101] : memref<5x128x128xf32, #tpu.memory_space<vmem>>, vector<1x128x128xf32>
    %125 = vector.shape_cast %124 : vector<1x128x128xf32> to vector<128x128xf32>
    %cst_102 = arith.constant dense<0.000000e+00> : vector<64x128xf32>
    %126 = tpu.matmul %123, %125, %cst_102 {dimension_numbers = #tpu.dot_dimension_numbers<[1], [0], [0], [1], [0, 0, 1, 1], [], []>} : vector<64x128xf32>, vector<128x128xf32>, vector<64x128xf32> -> vector<64x128xf32>
    %127 = arith.addf %122, %126 : vector<64x128xf32>
    %c0_103 = arith.constant 0 : index
    %c0_104 = arith.constant 0 : index
    %128 = vector.load %arg7[%c0_103, %c0_104] : memref<1x128xf32, #tpu.memory_space<vmem>>, vector<1x128xf32>
    %129 = vector.broadcast %128 : vector<1x128xf32> to vector<64x128xf32>
    %130 = arith.addf %127, %129 : vector<64x128xf32>
    %131 = tpu.iota {dimensions = array<i32: 0>} : vector<8x64xi32>
    %132 = tpu.iota {dimensions = array<i32: 1>} : vector<8x64xi32>
    %c8_i32 = arith.constant 8 : i32
    %133 = vector.broadcast %c8_i32 : i32 to vector<8x64xi32>
    %134 = arith.muli %131, %133 : vector<8x64xi32>
    %135 = arith.cmpi eq, %132, %134 : vector<8x64xi32>
    %136 = arith.extui %135 : vector<8x64xi1> to vector<8x64xi32>
    %137 = arith.sitofp %136 : vector<8x64xi32> to vector<8x64xf32>
    %cst_105 = arith.constant dense<0.000000e+00> : vector<8x128xf32>
    %138 = tpu.matmul %137, %130, %cst_105 {dimension_numbers = #tpu.dot_dimension_numbers<[1], [0], [0], [1], [0, 0, 1, 1], [], []>} : vector<8x64xf32>, vector<64x128xf32>, vector<8x128xf32> -> vector<8x128xf32>
    %cst_106 = arith.constant 0.000000e+00 : f32
    %139 = vector.broadcast %cst_106 : f32 to vector<8x128xf32>
    %140 = arith.maximumf %138, %139 : vector<8x128xf32>
    %c0_107 = arith.constant 0 : index
    %c0_108 = arith.constant 0 : index
    %141 = vector.load %arg8[%c0_107, %c0_108] : memref<128x128xf32, #tpu.memory_space<vmem>>, vector<128x128xf32>
    %cst_109 = arith.constant dense<0.000000e+00> : vector<8x128xf32>
    %142 = tpu.matmul %140, %141, %cst_109 {dimension_numbers = #tpu.dot_dimension_numbers<[1], [0], [0], [1], [0, 0, 1, 1], [], []>} : vector<8x128xf32>, vector<128x128xf32>, vector<8x128xf32> -> vector<8x128xf32>
    %c0_110 = arith.constant 0 : index
    %c0_111 = arith.constant 0 : index
    %143 = vector.load %arg9[%c0_110, %c0_111] : memref<1x128xf32, #tpu.memory_space<vmem>>, vector<1x128xf32>
    %144 = vector.broadcast %143 : vector<1x128xf32> to vector<8x128xf32>
    %145 = arith.addf %142, %144 : vector<8x128xf32>
    %cst_112 = arith.constant 0.000000e+00 : f32
    %146 = vector.broadcast %cst_112 : f32 to vector<8x128xf32>
    %147 = arith.maximumf %145, %146 : vector<8x128xf32>
    %c0_113 = arith.constant 0 : index
    %c0_114 = arith.constant 0 : index
    %148 = vector.load %arg10[%c0_113, %c0_114] : memref<128x128xf32, #tpu.memory_space<vmem>>, vector<128x128xf32>
    %cst_115 = arith.constant dense<0.000000e+00> : vector<8x128xf32>
    %149 = tpu.matmul %147, %148, %cst_115 {dimension_numbers = #tpu.dot_dimension_numbers<[1], [0], [0], [1], [0, 0, 1, 1], [], []>} : vector<8x128xf32>, vector<128x128xf32>, vector<8x128xf32> -> vector<8x128xf32>
    %c0_116 = arith.constant 0 : index
    %c0_117 = arith.constant 0 : index
    %150 = vector.load %arg11[%c0_116, %c0_117] : memref<1x128xf32, #tpu.memory_space<vmem>>, vector<1x128xf32>
    %151 = vector.broadcast %150 : vector<1x128xf32> to vector<8x128xf32>
    %152 = arith.addf %149, %151 : vector<8x128xf32>
    %c0_118 = arith.constant 0 : index
    %c0_119 = arith.constant 0 : index
    %153 = vector.load %arg12[%c0_118, %c0_119] : memref<8x128xf32, #tpu.memory_space<vmem>>, vector<8x128xf32>
    tpu.vector_store %arg12[%c0_118, %c0_119], %152 {strides = array<i32>} : memref<8x128xf32, #tpu.memory_space<vmem>>, vector<8x128xf32>,
    return
  }
  func.func @transform_0(%arg0: i32) -> (i32, i32, i32) {
    %c0_i32 = arith.constant 0 : i32
    %c0_i32_0 = arith.constant 0 : i32
    %c0_i32_1 = arith.constant 0 : i32
    return %c0_i32, %arg0, %c0_i32_0 : i32, i32, i32
  }
  func.func @transform_1(%arg0: i32) -> (i32, i32, i32) {
    %c0_i32 = arith.constant 0 : i32
    %c0_i32_0 = arith.constant 0 : i32
    %c0_i32_1 = arith.constant 0 : i32
    %c0_i32_2 = arith.constant 0 : i32
    return %c0_i32, %c0_i32_0, %c0_i32_1 : i32, i32, i32
  }
  func.func @transform_2(%arg0: i32) -> (i32, i32) {
    %c0_i32 = arith.constant 0 : i32
    %c0_i32_0 = arith.constant 0 : i32
    %c0_i32_1 = arith.constant 0 : i32
    return %c0_i32, %c0_i32_0 : i32, i32
  }
  func.func @transform_3(%arg0: i32) -> (i32, i32, i32) {
    %c0_i32 = arith.constant 0 : i32
    %c0_i32_0 = arith.constant 0 : i32
    %c0_i32_1 = arith.constant 0 : i32
    %c0_i32_2 = arith.constant 0 : i32
    return %c0_i32, %c0_i32_0, %c0_i32_1 : i32, i32, i32
  }
  func.func @transform_4(%arg0: i32) -> (i32, i32) {
    %c0_i32 = arith.constant 0 : i32
    %c0_i32_0 = arith.constant 0 : i32
    %c0_i32_1 = arith.constant 0 : i32
    return %c0_i32, %c0_i32_0 : i32, i32
  }
  func.func @transform_5(%arg0: i32) -> (i32, i32, i32) {
    %c0_i32 = arith.constant 0 : i32
    %c0_i32_0 = arith.constant 0 : i32
    %c0_i32_1 = arith.constant 0 : i32
    %c0_i32_2 = arith.constant 0 : i32
    return %c0_i32, %c0_i32_0, %c0_i32_1 : i32, i32, i32
  }
  func.func @transform_6(%arg0: i32) -> (i32, i32) {
    %c0_i32 = arith.constant 0 : i32
    %c0_i32_0 = arith.constant 0 : i32
    %c0_i32_1 = arith.constant 0 : i32
    return %c0_i32, %c0_i32_0 : i32, i32
  }
  func.func @transform_7(%arg0: i32) -> (i32, i32) {
    %c0_i32 = arith.constant 0 : i32
    %c0_i32_0 = arith.constant 0 : i32
    %c0_i32_1 = arith.constant 0 : i32
    return %c0_i32, %c0_i32_0 : i32, i32
  }
  func.func @transform_8(%arg0: i32) -> (i32, i32) {
    %c0_i32 = arith.constant 0 : i32
    %c0_i32_0 = arith.constant 0 : i32
    %c0_i32_1 = arith.constant 0 : i32
    return %c0_i32, %c0_i32_0 : i32, i32
  }
  func.func @transform_9(%arg0: i32) -> (i32, i32) {
    %c0_i32 = arith.constant 0 : i32
    %c0_i32_0 = arith.constant 0 : i32
    %c0_i32_1 = arith.constant 0 : i32
    return %c0_i32, %c0_i32_0 : i32, i32
  }
  func.func @transform_10(%arg0: i32) -> (i32, i32) {
    %c0_i32 = arith.constant 0 : i32
    %c0_i32_0 = arith.constant 0 : i32
    %c0_i32_1 = arith.constant 0 : i32
    return %c0_i32, %c0_i32_0 : i32, i32
  }
  func.func @transform_11(%arg0: i32) -> (i32, i32) {
    %c0_i32 = arith.constant 0 : i32
    %c0_i32_0 = arith.constant 0 : i32
    return %arg0, %c0_i32 : i32, i32
  }
}

</mosaic_0001>

<llo_original>
// kernel: lenet5_forward.1
$region0: #{lenet5_forward.1}
  #allocation0 [shape = 'u32[]', space=smem, size = 0x4, offset = 0x4, fixed_abs, tag = 'smem constant byte address 0x4 - core index']
  #allocation1 [shape = 'u32[144,128]{1,0:T(1,128)}', space=vmem, size = 0x12000, scoped, tag = 'internal scratch']
  %s0 = inlined_call_operand.vmem [shape: f32[4,144,128], index: 0, kind: input, shape index: {}]
  %s1 = inlined_call_operand.vmem [shape: f32[6,128,128], index: 1, kind: input, shape index: {}]
  %s2 = inlined_call_operand.vmem [shape: f32[1,128], index: 2, kind: input, shape index: {}]
  %s3 = inlined_call_operand.vmem [shape: f32[6,128,128], index: 3, kind: input, shape index: {}]
  %s4 = inlined_call_operand.vmem [shape: f32[1,128], index: 4, kind: input, shape index: {}]
  %s5 = inlined_call_operand.vmem [shape: f32[5,128,128], index: 5, kind: input, shape index: {}]
  %s6 = inlined_call_operand.vmem [shape: f32[1,128], index: 6, kind: input, shape index: {}]
  %s7 = inlined_call_operand.vmem [shape: f32[128,128], index: 7, kind: input, shape index: {}]
  %s8 = inlined_call_operand.vmem [shape: f32[1,128], index: 8, kind: input, shape index: {}]
  %s9 = inlined_call_operand.vmem [shape: f32[128,128], index: 9, kind: input, shape index: {}]
  %s10 = inlined_call_operand.vmem [shape: f32[1,128], index: 10, kind: input, shape index: {}]
  %s11 = inlined_call_operand.hbm [shape: f32[16,128], index: 11, kind: output, shape index: {}]
  %s12 = sld [smem:[#allocation0]]
  $region115: #{lenet5_forward.1} parent=0
    _
  %s14 = ssub.s32 1, %s12
  %s15 = scalar_select 0, %s14, %s12
  $region1: #{lenet5_forward.1} parent=0
    #allocation2 [shape = 'u8[294912]{0}', space=vmem, size = 0x48000, scoped, tag = 'input window, operand 0']
    #allocation3 [shape = 'u8[8192]{0}', space=vmem, size = 0x2000, scoped, tag = 'output window, operand 0']
    #allocation4 [shape = 's32[2]{0}', space=sflag, size = 0x8, scoped, tag = 'scoped memory for lenet5_forward.1']
    %16 = vsyncpa [#allocation4], 0
    %s17 = scalar_lea.sflag [#allocation4], 1
    %18 = vsyncpa %s17, 0
    loop: start=0, step=1, limit=4
    $region2: #{lenet5_forward.1} parent=1 // loop_pre_header
      _
    $region3: #{lenet5_forward.1} parent=1 // loop_header
      %s20 = sphi 0, %s24
      %p21 = scmp.ge.s32.totalorder %s20, 4
      %s30 = sphi 0, %s32
      %s33 = sphi 0, %s30
      %s34 = sphi 0, %s33
      %s50 = sphi 0, %s34
      %s54 = sphi 0, %s54
      %s56 = sphi 0, %s54
      %s57 = sphi 0, %s56
      %s71 = sphi 0, %s57
      %s75 = sphi 0, %s75
      %s77 = sphi 0, %s75
      %s78 = sphi 0, %s77
      %s92 = sphi 0, %s78
      %s96 = sphi 0, %s96
      %s98 = sphi 0, %s96
      %s99 = sphi 0, %s98
      %s113 = sphi 0, %s99
      %s117 = sphi 0, %s117
      %s119 = sphi 0, %s117
      %s120 = sphi 0, %s119
      %s134 = sphi 0, %s120
      %s138 = sphi 0, %s138
      %s140 = sphi 0, %s138
      %s141 = sphi 0, %s140
      %s155 = sphi 0, %s141
      %s159 = sphi 0, %s159
      %s161 = sphi 0, %s159
      %s162 = sphi 0, %s161
      %s176 = sphi 0, %s162
      %s180 = sphi 0, %s180
      %s182 = sphi 0, %s180
      %s183 = sphi 0, %s182
      %s197 = sphi 0, %s183
      %s201 = sphi 0, %s201
      %s203 = sphi 0, %s201
      %s204 = sphi 0, %s203
      %s218 = sphi 0, %s204
      %s222 = sphi 0, %s222
      %s224 = sphi 0, %s222
      %s225 = sphi 0, %s224
      %s239 = sphi 0, %s225
      %s243 = sphi 0, %s243
      %s245 = sphi 0, %s243
      %s246 = sphi 0, %s245
      %s260 = sphi 0, %s246
      %s266 = sphi 0, %s268
      %s269 = sphi 0, %s266
      %s270 = sphi 0, %s269
      %s286 = sphi 0, %s270
    $region4: #{lenet5_forward.1} parent=1 // loop_header_branch
      %23 = sbr.rel (%p21) target = $region8
    $region5: #{lenet5_forward.1} parent=1 // loop_body
      %s25 = ssub.s32 %s20, 1
      %s26 = ssub.s32 %s20, 2
      %s27 = sadd.s32 %s20, 1
      %s28 = ssub.s32 %s20, %s27
      %p29 = scmp.eq.s32.totalorder %s28, 0
      %s31 = sadd.s32 %s30, 1
      %s32 = scalar_select %p29, %s30, %s31
      %p35 = pneg %p29
      %p36 = scmp.eq.s32.totalorder %s20, 1
      %p37 = por %p35, %p36
      %p38 = scmp.ne.s32.totalorder %s30, %s33
      %p39 = scmp.eq.s32.totalorder %s20, 0
      %p40 = por %p38, %p39
      %p41 = scmp.ne.s32.totalorder %s30, %s33
      %p42 = scmp.eq.s32.totalorder %s25, 1
      %p43 = por %p41, %p42
      %p44 = scmp.ne.s32.totalorder %s33, %s34
      %p45 = scmp.eq.s32.totalorder %s25, 0
      %p46 = por %p44, %p45
      %p47 = scmp.ne.s32.totalorder %s33, %s34
      %p48 = scmp.eq.s32.totalorder %s26, 1
      %p49 = por %p47, %p48
      %p51 = scmp.ne.s32.totalorder %s34, %s50
      %p52 = scmp.eq.s32.totalorder %s26, 0
      %p53 = por %p51, %p52
      %s55 = sadd.s32 %s54, 1
      %p58 = scmp.eq.s32.totalorder %s20, 1
      %p59 = scmp.ne.s32.totalorder %s54, %s56
      %p60 = scmp.eq.s32.totalorder %s20, 0
      %p61 = por %p59, %p60
      %p62 = scmp.ne.s32.totalorder %s54, %s56
      %p63 = scmp.eq.s32.totalorder %s25, 1
      %p64 = por %p62, %p63
      %p65 = scmp.ne.s32.totalorder %s56, %s57
      %p66 = scmp.eq.s32.totalorder %s25, 0
      %p67 = por %p65, %p66
      %p68 = scmp.ne.s32.totalorder %s56, %s57
      %p69 = scmp.eq.s32.totalorder %s26, 1
      %p70 = por %p68, %p69
      %p72 = scmp.ne.s32.totalorder %s57, %s71
      %p73 = scmp.eq.s32.totalorder %s26, 0
      %p74 = por %p72, %p73
      %s76 = sadd.s32 %s75, 1
      %p79 = scmp.eq.s32.totalorder %s20, 1
      %p80 = scmp.ne.s32.totalorder %s75, %s77
      %p81 = scmp.eq.s32.totalorder %s20, 0
      %p82 = por %p80, %p81
      %p83 = scmp.ne.s32.totalorder %s75, %s77
      %p84 = scmp.eq.s32.totalorder %s25, 1
      %p85 = por %p83, %p84
      %p86 = scmp.ne.s32.totalorder %s77, %s78
      %p87 = scmp.eq.s32.totalorder %s25, 0
      %p88 = por %p86, %p87
      %p89 = scmp.ne.s32.totalorder %s77, %s78
      %p90 = scmp.eq.s32.totalorder %s26, 1
      %p91 = por %p89, %p90
      %p93 = scmp.ne.s32.totalorder %s78, %s92
      %p94 = scmp.eq.s32.totalorder %s26, 0
      %p95 = por %p93, %p94
      %s97 = sadd.s32 %s96, 1
      %p100 = scmp.eq.s32.totalorder %s20, 1
      %p101 = scmp.ne.s32.totalorder %s96, %s98
      %p102 = scmp.eq.s32.totalorder %s20, 0
      %p103 = por %p101, %p102
      %p104 = scmp.ne.s32.totalorder %s96, %s98
      %p105 = scmp.eq.s32.totalorder %s25, 1
      %p106 = por %p104, %p105
      %p107 = scmp.ne.s32.totalorder %s98, %s99
      %p108 = scmp.eq.s32.totalorder %s25, 0
      %p109 = por %p107, %p108
      %p110 = scmp.ne.s32.totalorder %s98, %s99
      %p111 = scmp.eq.s32.totalorder %s26, 1
      %p112 = por %p110, %p111
      %p114 = scmp.ne.s32.totalorder %s99, %s113
      %p115 = scmp.eq.s32.totalorder %s26, 0
      %p116 = por %p114, %p115
      %s118 = sadd.s32 %s117, 1
      %p121 = scmp.eq.s32.totalorder %s20, 1
      %p122 = scmp.ne.s32.totalorder %s117, %s119
      %p123 = scmp.eq.s32.totalorder %s20, 0
      %p124 = por %p122, %p123
      %p125 = scmp.ne.s32.totalorder %s117, %s119
      %p126 = scmp.eq.s32.totalorder %s25, 1
      %p127 = por %p125, %p126
      %p128 = scmp.ne.s32.totalorder %s119, %s120
      %p129 = scmp.eq.s32.totalorder %s25, 0
      %p130 = por %p128, %p129
      %p131 = scmp.ne.s32.totalorder %s119, %s120
      %p132 = scmp.eq.s32.totalorder %s26, 1
      %p133 = por %p131, %p132
      %p135 = scmp.ne.s32.totalorder %s120, %s134
      %p136 = scmp.eq.s32.totalorder %s26, 0
      %p137 = por %p135, %p136
      %s139 = sadd.s32 %s138, 1
      %p142 = scmp.eq.s32.totalorder %s20, 1
      %p143 = scmp.ne.s32.totalorder %s138, %s140
      %p144 = scmp.eq.s32.totalorder %s20, 0
      %p145 = por %p143, %p144
      %p146 = scmp.ne.s32.totalorder %s138, %s140
      %p147 = scmp.eq.s32.totalorder %s25, 1
      %p148 = por %p146, %p147
      %p149 = scmp.ne.s32.totalorder %s140, %s141
      %p150 = scmp.eq.s32.totalorder %s25, 0
      %p151 = por %p149, %p150
      %p152 = scmp.ne.s32.totalorder %s140, %s141
      %p153 = scmp.eq.s32.totalorder %s26, 1
      %p154 = por %p152, %p153
      %p156 = scmp.ne.s32.totalorder %s141, %s155
      %p157 = scmp.eq.s32.totalorder %s26, 0
      %p158 = por %p156, %p157
      %s160 = sadd.s32 %s159, 1
      %p163 = scmp.eq.s32.totalorder %s20, 1
      %p164 = scmp.ne.s32.totalorder %s159, %s161
      %p165 = scmp.eq.s32.totalorder %s20, 0
      %p166 = por %p164, %p165
      %p167 = scmp.ne.s32.totalorder %s159, %s161
      %p168 = scmp.eq.s32.totalorder %s25, 1
      %p169 = por %p167, %p168
      %p170 = scmp.ne.s32.totalorder %s161, %s162
      %p171 = scmp.eq.s32.totalorder %s25, 0
      %p172 = por %p170, %p171
      %p173 = scmp.ne.s32.totalorder %s161, %s162
      %p174 = scmp.eq.s32.totalorder %s26, 1
      %p175 = por %p173, %p174
      %p177 = scmp.ne.s32.totalorder %s162, %s176
      %p178 = scmp.eq.s32.totalorder %s26, 0
      %p179 = por %p177, %p178
      %s181 = sadd.s32 %s180, 1
      %p184 = scmp.eq.s32.totalorder %s20, 1
      %p185 = scmp.ne.s32.totalorder %s180, %s182
      %p186 = scmp.eq.s32.totalorder %s20, 0
      %p187 = por %p185, %p186
      %p188 = scmp.ne.s32.totalorder %s180, %s182
      %p189 = scmp.eq.s32.totalorder %s25, 1
      %p190 = por %p188, %p189
      %p191 = scmp.ne.s32.totalorder %s182, %s183
      %p192 = scmp.eq.s32.totalorder %s25, 0
      %p193 = por %p191, %p192
      %p194 = scmp.ne.s32.totalorder %s182, %s183
      %p195 = scmp.eq.s32.totalorder %s26, 1
      %p196 = por %p194, %p195
      %p198 = scmp.ne.s32.totalorder %s183, %s197
      %p199 = scmp.eq.s32.totalorder %s26, 0
      %p200 = por %p198, %p199
      %s202 = sadd.s32 %s201, 1
      %p205 = scmp.eq.s32.totalorder %s20, 1
      %p206 = scmp.ne.s32.totalorder %s201, %s203
      %p207 = scmp.eq.s32.totalorder %s20, 0
      %p208 = por %p206, %p207
      %p209 = scmp.ne.s32.totalorder %s201, %s203
      %p210 = scmp.eq.s32.totalorder %s25, 1
      %p211 = por %p209, %p210
      %p212 = scmp.ne.s32.totalorder %s203, %s204
      %p213 = scmp.eq.s32.totalorder %s25, 0
      %p214 = por %p212, %p213
      %p215 = scmp.ne.s32.totalorder %s203, %s204
      %p216 = scmp.eq.s32.totalorder %s26, 1
      %p217 = por %p215, %p216
      %p219 = scmp.ne.s32.totalorder %s204, %s218
      %p220 = scmp.eq.s32.totalorder %s26, 0
      %p221 = por %p219, %p220
      %s223 = sadd.s32 %s222, 1
      %p226 = scmp.eq.s32.totalorder %s20, 1
      %p227 = scmp.ne.s32.totalorder %s222, %s224
      %p228 = scmp.eq.s32.totalorder %s20, 0
      %p229 = por %p227, %p228
      %p230 = scmp.ne.s32.totalorder %s222, %s224
      %p231 = scmp.eq.s32.totalorder %s25, 1
      %p232 = por %p230, %p231
      %p233 = scmp.ne.s32.totalorder %s224, %s225
      %p234 = scmp.eq.s32.totalorder %s25, 0
      %p235 = por %p233, %p234
      %p236 = scmp.ne.s32.totalorder %s224, %s225
      %p237 = scmp.eq.s32.totalorder %s26, 1
      %p238 = por %p236, %p237
      %p240 = scmp.ne.s32.totalorder %s225, %s239
      %p241 = scmp.eq.s32.totalorder %s26, 0
      %p242 = por %p240, %p241
      %s244 = sadd.s32 %s243, 1
      %p247 = scmp.eq.s32.totalorder %s20, 1
      %p248 = scmp.ne.s32.totalorder %s243, %s245
      %p249 = scmp.eq.s32.totalorder %s20, 0
      %p250 = por %p248, %p249
      %p251 = scmp.ne.s32.totalorder %s243, %s245
      %p252 = scmp.eq.s32.totalorder %s25, 1
      %p253 = por %p251, %p252
      %p254 = scmp.ne.s32.totalorder %s245, %s246
      %p255 = scmp.eq.s32.totalorder %s25, 0
      %p256 = por %p254, %p255
      %p257 = scmp.ne.s32.totalorder %s245, %s246
      %p258 = scmp.eq.s32.totalorder %s26, 1
      %p259 = por %p257, %p258
      %p261 = scmp.ne.s32.totalorder %s246, %s260
      %p262 = scmp.eq.s32.totalorder %s26, 0
      %p263 = por %p261, %p262
      %s264 = ssub.s32 %s20, %s27
      %p265 = scmp.eq.s32.totalorder %s264, 0
      %s267 = sadd.s32 %s266, 1
      %s268 = scalar_select %p265, %s266, %s267
      %p271 = pneg %p265
      %p272 = scmp.eq.s32.totalorder %s20, 1
      %p273 = por %p271, %p272
      %p274 = scmp.ne.s32.totalorder %s266, %s269
      %p275 = scmp.eq.s32.totalorder %s20, 0
      %p276 = por %p274, %p275
      %p277 = scmp.ne.s32.totalorder %s266, %s269
      %p278 = scmp.eq.s32.totalorder %s25, 1
      %p279 = por %p277, %p278
      %p280 = scmp.ne.s32.totalorder %s269, %s270
      %p281 = scmp.eq.s32.totalorder %s25, 0
      %p282 = por %p280, %p281
      %p283 = scmp.ne.s32.totalorder %s269, %s270
      %p284 = scmp.eq.s32.totalorder %s26, 1
      %p285 = por %p283, %p284
      %p287 = scmp.ne.s32.totalorder %s270, %s286
      %p288 = scmp.eq.s32.totalorder %s26, 0
      %p289 = por %p287, %p288
      %p290 = scmp.le.s32.totalorder 1, %s20
      %p291 = scmp.lt.s32.totalorder %s20, 3
      %p292 = pnand %p290, %p291
      %p293 = pneg %p292
      // Predicated region
      $region9: #{lenet5_forward.1} parent=5 // pred_check
        _
      $region10: #{lenet5_forward.1} parent=5 // pred_check_branch
        %295 = sbr.rel (%p292) target = $region12
      $region11: #{lenet5_forward.1} parent=5 // pred_region
        %s296 = ssub.s32 %s20, 1
        // Predicated region
        $region13: #{lenet5_forward.1} parent=11 // pred_check
          %p297 = pneg %p67
        $region14: #{lenet5_forward.1} parent=11 // pred_check_branch
          %299 = sbr.rel (%p297) target = $region16
        $region15: #{lenet5_forward.1} parent=11 // pred_region
          _
        $region16: #{lenet5_forward.1} parent=11 // pred_fallthru
          _
        // Predicated region
        $region17: #{lenet5_forward.1} parent=11 // pred_check
          %p300 = pneg %p88
        $region18: #{lenet5_forward.1} parent=11 // pred_check_branch
          %302 = sbr.rel (%p300) target = $region20
        $region19: #{lenet5_forward.1} parent=11 // pred_region
          _
        $region20: #{lenet5_forward.1} parent=11 // pred_fallthru
          _
        // Predicated region
        $region21: #{lenet5_forward.1} parent=11 // pred_check
          %p303 = pneg %p109
        $region22: #{lenet5_forward.1} parent=11 // pred_check_branch
          %305 = sbr.rel (%p303) target = $region24
        $region23: #{lenet5_forward.1} parent=11 // pred_region
          _
        $region24: #{lenet5_forward.1} parent=11 // pred_fallthru
          _
        // Predicated region
        $region25: #{lenet5_forward.1} parent=11 // pred_check
          %p306 = pneg %p130
        $region26: #{lenet5_forward.1} parent=11 // pred_check_branch
          %308 = sbr.rel (%p306) target = $region28
        $region27: #{lenet5_forward.1} parent=11 // pred_region
          _
        $region28: #{lenet5_forward.1} parent=11 // pred_fallthru
          _
        // Predicated region
        $region29: #{lenet5_forward.1} parent=11 // pred_check
          %p309 = pneg %p151
        $region30: #{lenet5_forward.1} parent=11 // pred_check_branch
          %311 = sbr.rel (%p309) target = $region32
        $region31: #{lenet5_forward.1} parent=11 // pred_region
          _
        $region32: #{lenet5_forward.1} parent=11 // pred_fallthru
          _
        // Predicated region
        $region33: #{lenet5_forward.1} parent=11 // pred_check
          %p312 = pneg %p172
        $region34: #{lenet5_forward.1} parent=11 // pred_check_branch
          %314 = sbr.rel (%p312) target = $region36
        $region35: #{lenet5_forward.1} parent=11 // pred_region
          _
        $region36: #{lenet5_forward.1} parent=11 // pred_fallthru
          _
        // Predicated region
        $region37: #{lenet5_forward.1} parent=11 // pred_check
          %p315 = pneg %p193
        $region38: #{lenet5_forward.1} parent=11 // pred_check_branch
          %317 = sbr.rel (%p315) target = $region40
        $region39: #{lenet5_forward.1} parent=11 // pred_region
          _
        $region40: #{lenet5_forward.1} parent=11 // pred_fallthru
          _
        // Predicated region
        $region41: #{lenet5_forward.1} parent=11 // pred_check
          %p318 = pneg %p214
        $region42: #{lenet5_forward.1} parent=11 // pred_check_branch
          %320 = sbr.rel (%p318) target = $region44
        $region43: #{lenet5_forward.1} parent=11 // pred_region
          _
        $region44: #{lenet5_forward.1} parent=11 // pred_fallthru
          _
        // Predicated region
        $region45: #{lenet5_forward.1} parent=11 // pred_check
          %p321 = pneg %p235
        $region46: #{lenet5_forward.1} parent=11 // pred_check_branch
          %323 = sbr.rel (%p321) target = $region48
        $region47: #{lenet5_forward.1} parent=11 // pred_region
          _
        $region48: #{lenet5_forward.1} parent=11 // pred_fallthru
          _
        // Predicated region
        $region49: #{lenet5_forward.1} parent=11 // pred_check
          %p324 = pneg %p256
        $region50: #{lenet5_forward.1} parent=11 // pred_check_branch
          %326 = sbr.rel (%p324) target = $region52
        $region51: #{lenet5_forward.1} parent=11 // pred_region
          _
        $region52: #{lenet5_forward.1} parent=11 // pred_fallthru
          _
      $region12: #{lenet5_forward.1} parent=5 // pred_fallthru
        _
      %p327 = scmp.lt.s32.totalorder %s20, 2
      // Predicated region
      $region53: #{lenet5_forward.1} parent=5 // pred_check
        %p328 = pneg %p327
      $region54: #{lenet5_forward.1} parent=5 // pred_check_branch
        %330 = sbr.rel (%p328) target = $region56
      $region55: #{lenet5_forward.1} parent=5 // pred_region
        // Predicated region
        $region57: #{lenet5_forward.1} parent=55 // pred_check
          %p331 = pneg %p40
        $region58: #{lenet5_forward.1} parent=55 // pred_check_branch
          %333 = sbr.rel (%p331) target = $region60
        $region59: #{lenet5_forward.1} parent=55 // pred_region
          %s334 = sand.u32 %s30, 1
          %s335 = sand.u32 %s30, 1
          %s336 = smul.addr %s335, 288
          %s337 = scalar_lea.vmem [#allocation2], %s336
          %s338 = smul.u32 9, %s20
          %s339 = smul.addr %s338, 8
          %s340 = scalar_lea.vmem %s0, %s339
          // Predicated region
          $region61: #{lenet5_forward.1} parent=59 // pred_check
            _
          $region62: #{lenet5_forward.1} parent=59 // pred_check_branch
            %342 = sbr.rel (0) target = $region64
          $region63: #{lenet5_forward.1} parent=59 // pred_region
            // Predicated region
            $region65: #{lenet5_forward.1} parent=63 // pred_check
              _
            $region66: #{lenet5_forward.1} parent=63 // pred_check_branch
              %344 = sbr.rel (0) target = $region68
            $region67: #{lenet5_forward.1} parent=63 // pred_region
              // Predicated region
              $region80: #{lenet5_forward.1} parent=67 // pred_check
                _
              $region81: #{lenet5_forward.1} parent=67 // pred_check_branch
                %429 = sbr.rel (0) target = $region83
              $region82: #{lenet5_forward.1} parent=67 // pred_region
                loop: start=0, step=1, limit=1
                $region84: #{lenet5_forward.1} parent=82 // loop_pre_header
                  _
                $region85: #{lenet5_forward.1} parent=82 // loop_header
                  %s431 = sphi 0, %s435
                  %p432 = scmp.ge.s32.totalorder %s431, 1
                  %s436 = sphi %s340, %s340
                  %s437 = sphi %s337, %s337
                $region86: #{lenet5_forward.1} parent=82 // loop_header_branch
                  %434 = sbr.rel (%p432) target = $region90
                $region87: #{lenet5_forward.1} parent=82 // loop_body
                  %v438 = vld [vmem:[%s436] sm:$0xff]
                  %439 = vst [vmem:[%s437] sm:$0xff] %v438
                  %v440 = vld [vmem:[%s436 + $0x8] sm:$0xff]
                  %441 = vst [vmem:[%s437 + $0x8] sm:$0xff] %v440
                  %v442 = vld [vmem:[%s436 + $0x10] sm:$0xff]
                  %443 = vst [vmem:[%s437 + $0x10] sm:$0xff] %v442
                  %v444 = vld [vmem:[%s436 + $0x18] sm:$0xff]
                  %445 = vst [vmem:[%s437 + $0x18] sm:$0xff] %v444
                  %v446 = vld [vmem:[%s436 + $0x20] sm:$0xff]
                  %447 = vst [vmem:[%s437 + $0x20] sm:$0xff] %v446
                  %v448 = vld [vmem:[%s436 + $0x28] sm:$0xff]
                  %449 = vst [vmem:[%s437 + $0x28] sm:$0xff] %v448
                  %v450 = vld [vmem:[%s436 + $0x30] sm:$0xff]
                  %451 = vst [vmem:[%s437 + $0x30] sm:$0xff] %v450
                  %v452 = vld [vmem:[%s436 + $0x38] sm:$0xff]
                  %453 = vst [vmem:[%s437 + $0x38] sm:$0xff] %v452
                  %v454 = vld [vmem:[%s436 + $0x40] sm:$0xff]
                  %455 = vst [vmem:[%s437 + $0x40] sm:$0xff] %v454
                  %v456 = vld [vmem:[%s436 + $0x90] sm:$0xff]
                  %457 = vst [vmem:[%s437 + $0x48] sm:$0xff] %v456
                  %v458 = vld [vmem:[%s436 + $0x98] sm:$0xff]
                  %459 = vst [vmem:[%s437 + $0x50] sm:$0xff] %v458
                  %v460 = vld [vmem:[%s436 + $0xa0] sm:$0xff]
                  %461 = vst [vmem:[%s437 + $0x58] sm:$0xff] %v460
                  %v462 = vld [vmem:[%s436 + $0xa8] sm:$0xff]
                  %463 = vst [vmem:[%s437 + $0x60] sm:$0xff] %v462
                  %v464 = vld [vmem:[%s436 + $0xb0] sm:$0xff]
                  %465 = vst [vmem:[%s437 + $0x68] sm:$0xff] %v464
                  %v466 = vld [vmem:[%s436 + $0xb8] sm:$0xff]
                  %467 = vst [vmem:[%s437 + $0x70] sm:$0xff] %v466
                  %v468 = vld [vmem:[%s436 + $0xc0] sm:$0xff]
                  %469 = vst [vmem:[%s437 + $0x78] sm:$0xff] %v468
                  %v470 = vld [vmem:[%s436 + $0xc8] sm:$0xff]
                  %471 = vst [vmem:[%s437 + $0x80] sm:$0xff] %v470
                  %v472 = vld [vmem:[%s436 + $0xd0] sm:$0xff]
                  %473 = vst [vmem:[%s437 + $0x88] sm:$0xff] %v472
                  %v474 = vld [vmem:[%s436 + $0x120] sm:$0xff]
                  %475 = vst [vmem:[%s437 + $0x90] sm:$0xff] %v474
                  %v476 = vld [vmem:[%s436 + $0x128] sm:$0xff]
                  %477 = vst [vmem:[%s437 + $0x98] sm:$0xff] %v476
                  %v478 = vld [vmem:[%s436 + $0x130] sm:$0xff]
                  %479 = vst [vmem:[%s437 + $0xa0] sm:$0xff] %v478
                  %v480 = vld [vmem:[%s436 + $0x138] sm:$0xff]
                  %481 = vst [vmem:[%s437 + $0xa8] sm:$0xff] %v480
                  %v482 = vld [vmem:[%s436 + $0x140] sm:$0xff]
                  %483 = vst [vmem:[%s437 + $0xb0] sm:$0xff] %v482
                  %v484 = vld [vmem:[%s436 + $0x148] sm:$0xff]
                  %485 = vst [vmem:[%s437 + $0xb8] sm:$0xff] %v484
                  %v486 = vld [vmem:[%s436 + $0x150] sm:$0xff]
                  %487 = vst [vmem:[%s437 + $0xc0] sm:$0xff] %v486
                  %v488 = vld [vmem:[%s436 + $0x158] sm:$0xff]
                  %489 = vst [vmem:[%s437 + $0xc8] sm:$0xff] %v488
                  %v490 = vld [vmem:[%s436 + $0x160] sm:$0xff]
                  %491 = vst [vmem:[%s437 + $0xd0] sm:$0xff] %v490
                  %v492 = vld [vmem:[%s436 + $0x1b0] sm:$0xff]
                  %493 = vst [vmem:[%s437 + $0xd8] sm:$0xff] %v492
                  %v494 = vld [vmem:[%s436 + $0x1b8] sm:$0xff]
                  %495 = vst [vmem:[%s437 + $0xe0] sm:$0xff] %v494
                  %v496 = vld [vmem:[%s436 + $0x1c0] sm:$0xff]
                  %497 = vst [vmem:[%s437 + $0xe8] sm:$0xff] %v496
                  %v498 = vld [vmem:[%s436 + $0x1c8] sm:$0xff]
                  %499 = vst [vmem:[%s437 + $0xf0] sm:$0xff] %v498
                  %v500 = vld [vmem:[%s436 + $0x1d0] sm:$0xff]
                  %501 = vst [vmem:[%s437 + $0xf8] sm:$0xff] %v500
                  %v502 = vld [vmem:[%s436 + $0x1d8] sm:$0xff]
                  %503 = vst [vmem:[%s437 + $0x100] sm:$0xff] %v502
                  %v504 = vld [vmem:[%s436 + $0x1e0] sm:$0xff]
                  %505 = vst [vmem:[%s437 + $0x108] sm:$0xff] %v504
                  %v506 = vld [vmem:[%s436 + $0x1e8] sm:$0xff]
                  %507 = vst [vmem:[%s437 + $0x110] sm:$0xff] %v506
                  %v508 = vld [vmem:[%s436 + $0x1f0] sm:$0xff]
                  %509 = vst [vmem:[%s437 + $0x118] sm:$0xff] %v508
                $region88: #{lenet5_forward.1} parent=82 // loop_footer
                  %s435 = sadd.s32 1, %s431
                $region89: #{lenet5_forward.1} parent=82 // loop_footer_branch
                  %430 = sbr.rel target = $region85
                $region90: #{lenet5_forward.1} parent=82 // loop_exit
                  _
              $region83: #{lenet5_forward.1} parent=67 // pred_fallthru
                _
              // Predicated region
              $region91: #{lenet5_forward.1} parent=67 // pred_check
                _
              $region92: #{lenet5_forward.1} parent=67 // pred_check_branch
                %511 = sbr.rel target = $region94
              $region93: #{lenet5_forward.1} parent=67 // pred_region
                _
              $region94: #{lenet5_forward.1} parent=67 // pred_fallthru
                _
            $region68: #{lenet5_forward.1} parent=63 // pred_fallthru
              _
            // Predicated region
            $region69: #{lenet5_forward.1} parent=63 // pred_check
              _
            $region70: #{lenet5_forward.1} parent=63 // pred_check_branch
              %346 = sbr.rel target = $region72
            $region71: #{lenet5_forward.1} parent=63 // pred_region
              loop: start=0, step=1, limit=1
              $region73: #{lenet5_forward.1} parent=71 // loop_pre_header
                _
              $region74: #{lenet5_forward.1} parent=71 // loop_header
                %s349 = sphi 0, %s353
                %p350 = scmp.ge.s32.totalorder %s349, 1
                %s354 = sphi %s340, %s340
                %s355 = sphi %s337, %s337
              $region75: #{lenet5_forward.1} parent=71 // loop_header_branch
                %352 = sbr.rel (%p350) target = $region79
              $region76: #{lenet5_forward.1} parent=71 // loop_body
                %v356 = vld [vmem:[%s354] sm:$0xff]
                %357 = vst [vmem:[%s355] sm:$0xff] %v356
                %v358 = vld [vmem:[%s354 + $0x8] sm:$0xff]
                %359 = vst [vmem:[%s355 + $0x8] sm:$0xff] %v358
                %v360 = vld [vmem:[%s354 + $0x10] sm:$0xff]
                %361 = vst [vmem:[%s355 + $0x10] sm:$0xff] %v360
                %v362 = vld [vmem:[%s354 + $0x18] sm:$0xff]
                %363 = vst [vmem:[%s355 + $0x18] sm:$0xff] %v362
                %v364 = vld [vmem:[%s354 + $0x20] sm:$0xff]
                %365 = vst [vmem:[%s355 + $0x20] sm:$0xff] %v364
                %v366 = vld [vmem:[%s354 + $0x28] sm:$0xff]
                %367 = vst [vmem:[%s355 + $0x28] sm:$0xff] %v366
                %v368 = vld [vmem:[%s354 + $0x30] sm:$0xff]
                %369 = vst [vmem:[%s355 + $0x30] sm:$0xff] %v368
                %v370 = vld [vmem:[%s354 + $0x38] sm:$0xff]
                %371 = vst [vmem:[%s355 + $0x38] sm:$0xff] %v370
                %v372 = vld [vmem:[%s354 + $0x40] sm:$0xff]
                %373 = vst [vmem:[%s355 + $0x40] sm:$0xff] %v372
                %v374 = vld [vmem:[%s354 + $0x90] sm:$0xff]
                %375 = vst [vmem:[%s355 + $0x48] sm:$0xff] %v374
                %v376 = vld [vmem:[%s354 + $0x98] sm:$0xff]
                %377 = vst [vmem:[%s355 + $0x50] sm:$0xff] %v376
                %v378 = vld [vmem:[%s354 + $0xa0] sm:$0xff]
                %379 = vst [vmem:[%s355 + $0x58] sm:$0xff] %v378
                %v380 = vld [vmem:[%s354 + $0xa8] sm:$0xff]
                %381 = vst [vmem:[%s355 + $0x60] sm:$0xff] %v380
                %v382 = vld [vmem:[%s354 + $0xb0] sm:$0xff]
                %383 = vst [vmem:[%s355 + $0x68] sm:$0xff] %v382
                %v384 = vld [vmem:[%s354 + $0xb8] sm:$0xff]
                %385 = vst [vmem:[%s355 + $0x70] sm:$0xff] %v384
                %v386 = vld [vmem:[%s354 + $0xc0] sm:$0xff]
                %387 = vst [vmem:[%s355 + $0x78] sm:$0xff] %v386
                %v388 = vld [vmem:[%s354 + $0xc8] sm:$0xff]
                %389 = vst [vmem:[%s355 + $0x80] sm:$0xff] %v388
                %v390 = vld [vmem:[%s354 + $0xd0] sm:$0xff]
                %391 = vst [vmem:[%s355 + $0x88] sm:$0xff] %v390
                %v392 = vld [vmem:[%s354 + $0x120] sm:$0xff]
                %393 = vst [vmem:[%s355 + $0x90] sm:$0xff] %v392
                %v394 = vld [vmem:[%s354 + $0x128] sm:$0xff]
                %395 = vst [vmem:[%s355 + $0x98] sm:$0xff] %v394
                %v396 = vld [vmem:[%s354 + $0x130] sm:$0xff]
                %397 = vst [vmem:[%s355 + $0xa0] sm:$0xff] %v396
                %v398 = vld [vmem:[%s354 + $0x138] sm:$0xff]
                %399 = vst [vmem:[%s355 + $0xa8] sm:$0xff] %v398
                %v400 = vld [vmem:[%s354 + $0x140] sm:$0xff]
                %401 = vst [vmem:[%s355 + $0xb0] sm:$0xff] %v400
                %v402 = vld [vmem:[%s354 + $0x148] sm:$0xff]
                %403 = vst [vmem:[%s355 + $0xb8] sm:$0xff] %v402
                %v404 = vld [vmem:[%s354 + $0x150] sm:$0xff]
                %405 = vst [vmem:[%s355 + $0xc0] sm:$0xff] %v404
                %v406 = vld [vmem:[%s354 + $0x158] sm:$0xff]
                %407 = vst [vmem:[%s355 + $0xc8] sm:$0xff] %v406
                %v408 = vld [vmem:[%s354 + $0x160] sm:$0xff]
                %409 = vst [vmem:[%s355 + $0xd0] sm:$0xff] %v408
                %v410 = vld [vmem:[%s354 + $0x1b0] sm:$0xff]
                %411 = vst [vmem:[%s355 + $0xd8] sm:$0xff] %v410
                %v412 = vld [vmem:[%s354 + $0x1b8] sm:$0xff]
                %413 = vst [vmem:[%s355 + $0xe0] sm:$0xff] %v412
                %v414 = vld [vmem:[%s354 + $0x1c0] sm:$0xff]
                %415 = vst [vmem:[%s355 + $0xe8] sm:$0xff] %v414
                %v416 = vld [vmem:[%s354 + $0x1c8] sm:$0xff]
                %417 = vst [vmem:[%s355 + $0xf0] sm:$0xff] %v416
                %v418 = vld [vmem:[%s354 + $0x1d0] sm:$0xff]
                %419 = vst [vmem:[%s355 + $0xf8] sm:$0xff] %v418
                %v420 = vld [vmem:[%s354 + $0x1d8] sm:$0xff]
                %421 = vst [vmem:[%s355 + $0x100] sm:$0xff] %v420
                %v422 = vld [vmem:[%s354 + $0x1e0] sm:$0xff]
                %423 = vst [vmem:[%s355 + $0x108] sm:$0xff] %v422
                %v424 = vld [vmem:[%s354 + $0x1e8] sm:$0xff]
                %425 = vst [vmem:[%s355 + $0x110] sm:$0xff] %v424
                %v426 = vld [vmem:[%s354 + $0x1f0] sm:$0xff]
                %427 = vst [vmem:[%s355 + $0x118] sm:$0xff] %v426
              $region77: #{lenet5_forward.1} parent=71 // loop_footer
                %s353 = sadd.s32 1, %s349
              $region78: #{lenet5_forward.1} parent=71 // loop_footer_branch
                %348 = sbr.rel target = $region74
              $region79: #{lenet5_forward.1} parent=71 // loop_exit
                _
            $region72: #{lenet5_forward.1} parent=63 // pred_fallthru
              _
          $region64: #{lenet5_forward.1} parent=59 // pred_fallthru
            _
          %512 = vnop
        $region60: #{lenet5_forward.1} parent=55 // pred_fallthru
          _
      $region56: #{lenet5_forward.1} parent=5 // pred_fallthru
        _
      %p513 = scmp.le.s32.totalorder 1, %s20
      %p514 = scmp.lt.s32.totalorder %s20, 3
      %p515 = pnand %p513, %p514
      %p516 = pneg %p515
      // Predicated region
      $region95: #{lenet5_forward.1} parent=5 // pred_check
        _
      $region96: #{lenet5_forward.1} parent=5 // pred_check_branch
        %518 = sbr.rel (%p515) target = $region98
      $region97: #{lenet5_forward.1} parent=5 // pred_region
        %s519 = ssub.s32 %s20, 1
        %s520 = sand.u32 %s33, 1
        %s521 = sand.u32 %s33, 1
        %s522 = smul.addr %s521, 288
        %s523 = scalar_lea.vmem [#allocation2], %s522
        // Predicated region
        $region99: #{lenet5_forward.1} parent=97 // pred_check
          %p524 = pneg %p46
        $region100: #{lenet5_forward.1} parent=97 // pred_check_branch
          %526 = sbr.rel (%p524) target = $region102
        $region101: #{lenet5_forward.1} parent=97 // pred_region
          _
        $region102: #{lenet5_forward.1} parent=97 // pred_fallthru
          _
        %s527 = sand.u32 %s33, 1
        %s528 = sand.u32 %s33, 1
        %s529 = smul.addr %s528, 288
        %s530 = scalar_lea.vmem [#allocation2], %s529
        %p531 = pneg %p46
        %p532 = pneg %p43
        %p533 = pneg %p67
        %p534 = pneg %p64
        %p535 = pneg %p88
        %p536 = pneg %p85
        %p537 = pneg %p109
        %p538 = pneg %p106
        %p539 = pneg %p130
        %p540 = pneg %p127
        %p541 = pneg %p151
        %p542 = pneg %p148
        %p543 = pneg %p172
        %p544 = pneg %p169
        %p545 = pneg %p193
        %p546 = pneg %p190
        %p547 = pneg %p214
        %p548 = pneg %p211
        %p549 = pneg %p235
        %p550 = pneg %p232
        %p551 = pneg %p256
        %p552 = pneg %p253
        %p553 = pneg %p282
        %p554 = pneg %p279
        %s555 = sand.u32 %s269, 1
        %s556 = scalar_lea.sflag [#allocation4], %s555
        %s557 = sand.u32 %s269, 1
        %s558 = smul.addr %s557, 8
        %s559 = scalar_lea.vmem [#allocation3], %s558
        %s560 = smul.u32 9, %s25
        %v561 = vld [vmem:[%s523] sm:$0xff]
        %v562 = vld [vmem:[%s523 + $0x8] sm:$0xff]
        %v563 = vld [vmem:[%s523 + $0x10] sm:$0xff]
        %v564 = vld [vmem:[%s523 + $0x18] sm:$0xff]
        %v565 = vld [vmem:[%s523 + $0x20] sm:$0xff]
        %v566 = vld [vmem:[%s523 + $0x28] sm:$0xff]
        %v567 = vld [vmem:[%s523 + $0x30] sm:$0xff]
        %v568 = vld [vmem:[%s523 + $0x38] sm:$0xff]
        %v569 = vld [vmem:[%s523 + $0x40] sm:$0xff]
        %s570 = scalar_lea.vmem %s523, 72 [#allocation2]
        %v571 = vld [vmem:[%s570] sm:$0xff]
        %v572 = vld [vmem:[%s570 + $0x8] sm:$0xff]
        %v573 = vld [vmem:[%s570 + $0x10] sm:$0xff]
        %v574 = vld [vmem:[%s570 + $0x18] sm:$0xff]
        %v575 = vld [vmem:[%s570 + $0x20] sm:$0xff]
        %v576 = vld [vmem:[%s570 + $0x28] sm:$0xff]
        %v577 = vld [vmem:[%s570 + $0x30] sm:$0xff]
        %v578 = vld [vmem:[%s570 + $0x38] sm:$0xff]
        %v579 = vld [vmem:[%s570 + $0x40] sm:$0xff]
        %s580 = scalar_lea.vmem %s523, 144 [#allocation2]
        %v581 = vld [vmem:[%s580] sm:$0xff]
        %v582 = vld [vmem:[%s580 + $0x8] sm:$0xff]
        %v583 = vld [vmem:[%s580 + $0x10] sm:$0xff]
        %v584 = vld [vmem:[%s580 + $0x18] sm:$0xff]
        %v585 = vld [vmem:[%s580 + $0x20] sm:$0xff]
        %v586 = vld [vmem:[%s580 + $0x28] sm:$0xff]
        %v587 = vld [vmem:[%s580 + $0x30] sm:$0xff]
        %v588 = vld [vmem:[%s580 + $0x38] sm:$0xff]
        %v589 = vld [vmem:[%s580 + $0x40] sm:$0xff]
        %s590 = scalar_lea.vmem %s523, 216 [#allocation2]
        %v591 = vld [vmem:[%s590] sm:$0xff]
        %v592 = vld [vmem:[%s590 + $0x8] sm:$0xff]
        %v593 = vld [vmem:[%s590 + $0x10] sm:$0xff]
        %v594 = vld [vmem:[%s590 + $0x18] sm:$0xff]
        %v595 = vld [vmem:[%s590 + $0x20] sm:$0xff]
        %v596 = vld [vmem:[%s590 + $0x28] sm:$0xff]
        %v597 = vld [vmem:[%s590 + $0x30] sm:$0xff]
        %v598 = vld [vmem:[%s590 + $0x38] sm:$0xff]
        %v599 = vld [vmem:[%s590 + $0x40] sm:$0xff]
        %v600 = vld [vmem:[%s1] sm:$0xff]
        %v601 = vld [vmem:[%s1 + $0x8] sm:$0xff]
        %v602 = vld [vmem:[%s1 + $0x10] sm:$0xff]
        %v603 = vld [vmem:[%s1 + $0x18] sm:$0xff]
        %v604 = vld [vmem:[%s1 + $0x20] sm:$0xff]
        %v605 = vld [vmem:[%s1 + $0x28] sm:$0xff]
        %v606 = vld [vmem:[%s1 + $0x30] sm:$0xff]
        %v607 = vld [vmem:[%s1 + $0x38] sm:$0xff]
        %v608 = vld [vmem:[%s1 + $0x40] sm:$0xff]
        %v609 = vld [vmem:[%s1 + $0x48] sm:$0xff]
        %v610 = vld [vmem:[%s1 + $0x50] sm:$0xff]
        %v611 = vld [vmem:[%s1 + $0x58] sm:$0xff]
        %v612 = vld [vmem:[%s1 + $0x60] sm:$0xff]
        %v613 = vld [vmem:[%s1 + $0x68] sm:$0xff]
        %v614 = vld [vmem:[%s1 + $0x70] sm:$0xff]
        %v615 = vld [vmem:[%s1 + $0x78] sm:$0xff]
        %s616 = scalar_lea.vmem %s1, 128
        %v617 = vld [vmem:[%s616] sm:$0xff]
        %v618 = vld [vmem:[%s616 + $0x8] sm:$0xff]
        %v619 = vld [vmem:[%s616 + $0x10] sm:$0xff]
        %v620 = vld [vmem:[%s616 + $0x18] sm:$0xff]
        %v621 = vld [vmem:[%s616 + $0x20] sm:$0xff]
        %v622 = vld [vmem:[%s616 + $0x28] sm:$0xff]
        %v623 = vld [vmem:[%s616 + $0x30] sm:$0xff]
        %v624 = vld [vmem:[%s616 + $0x38] sm:$0xff]
        %v625 = vld [vmem:[%s616 + $0x40] sm:$0xff]
        %v626 = vld [vmem:[%s616 + $0x48] sm:$0xff]
        %v627 = vld [vmem:[%s616 + $0x50] sm:$0xff]
        %v628 = vld [vmem:[%s616 + $0x58] sm:$0xff]
        %v629 = vld [vmem:[%s616 + $0x60] sm:$0xff]
        %v630 = vld [vmem:[%s616 + $0x68] sm:$0xff]
        %v631 = vld [vmem:[%s616 + $0x70] sm:$0xff]
        %v632 = vld [vmem:[%s616 + $0x78] sm:$0xff]
        %633 = vmatprep.subr.mxu0 0.0
        %634 = vmatpush1.msra.mxu0 %v617
        %635 = vmatprep.subr.mxu0 0.0
        %636 = vmatpush1.msra.mxu0 %v618
        %637 = vmatprep.subr.mxu0 0.0
        %638 = vmatpush1.msra.mxu0 %v619
        %639 = vmatprep.subr.mxu0 0.0
        %640 = vmatpush1.msra.mxu0 %v620
        %641 = vmatprep.subr.mxu0 0.0
        %642 = vmatpush1.msra.mxu0 %v621
        %643 = vmatprep.subr.mxu0 0.0
        %644 = vmatpush1.msra.mxu0 %v622
        %645 = vmatprep.subr.mxu0 0.0
        %646 = vmatpush1.msra.mxu0 %v623
        %647 = vmatprep.subr.mxu0 0.0
        %648 = vmatpush1.msra.mxu0 %v624
        %649 = vmatprep.subr.mxu0 0.0
        %650 = vmatpush1.msra.mxu0 %v625
        %651 = vmatprep.subr.mxu0 0.0
        %652 = vmatpush1.msra.mxu0 %v626
        %653 = vmatprep.subr.mxu0 0.0
        %654 = vmatpush1.msra.mxu0 %v627
        %655 = vmatprep.subr.mxu0 0.0
        %656 = vmatpush1.msra.mxu0 %v628
        %657 = vmatprep.subr.mxu0 0.0
        %658 = vmatpush1.msra.mxu0 %v629
        %659 = vmatprep.subr.mxu0 0.0
        %660 = vmatpush1.msra.mxu0 %v630
        %661 = vmatprep.subr.mxu0 0.0
        %662 = vmatpush1.msra.mxu0 %v631
        %663 = vmatprep.subr.mxu0 0.0
        %664 = vmatpush1.msra.mxu0 %v632
        %665 = vmatprep.subr.mxu0 0.0
        %666 = vmatpush1.msra.mxu0 0.0
        %667 = vmatprep.subr.mxu0 0.0
        %668 = vmatpush1.msra.mxu0 0.0
        %669 = vmatprep.subr.mxu0 0.0
        %670 = vmatpush1.msra.mxu0 0.0
        %671 = vmatprep.subr.mxu0 0.0
        %672 = vmatpush1.msra.mxu0 0.0
        %673 = vmatprep.subr.mxu0 0.0
        %674 = vmatpush1.msra.mxu0 0.0
        %675 = vmatprep.subr.mxu0 0.0
        %676 = vmatpush1.msra.mxu0 0.0
        %677 = vmatprep.subr.mxu0 0.0
        %678 = vmatpush1.msra.mxu0 0.0
        %679 = vmatprep.subr.mxu0 0.0
        %680 = vmatpush1.msra.mxu0 0.0
        %681 = vmatprep.subr.mxu0 0.0
        %682 = vmatpush1.msra.mxu0 0.0
        %683 = vmatprep.subr.mxu0 0.0
        %684 = vmatpush1.msra.mxu0 0.0
        %685 = vmatprep.subr.mxu0 0.0
        %686 = vmatpush1.msra.mxu0 0.0
        %687 = vmatprep.subr.mxu0 0.0
        %688 = vmatpush1.msra.mxu0 0.0
        %689 = vmatprep.subr.mxu0 0.0
        %690 = vmatpush1.msra.mxu0 0.0
        %691 = vmatprep.subr.mxu0 0.0
        %692 = vmatpush1.msra.mxu0 0.0
        %693 = vmatprep.subr.mxu0 0.0
        %694 = vmatpush1.msra.mxu0 0.0
        %695 = vmatprep.subr.mxu0 0.0
        %696 = vmatpush1.msra.mxu0 0.0
        %697 = vmatprep.mubr.f32.mxu0 0.0
        %698 = vmatmul.mubr.f32.gmra.mrb[0].mxu0 %v571
        %v699 = vpop.f32.mrb[0].mxu0
        %v700 = vadd.f32 0.0, %v699
        %v701 = vpop.f32.mrb[0].mxu0
        %702 = vmatprep.mubr.f32.mxu0 0.0
        %703 = vmatmul.mubr.f32.gmra.mrb[0].mxu0 %v572
        %v704 = vpop.f32.mrb[0].mxu0
        %v705 = vadd.f32 0.0, %v704
        %v706 = vpop.f32.mrb[0].mxu0
        %707 = vmatprep.mubr.f32.mxu0 0.0
        %708 = vmatmul.mubr.f32.gmra.mrb[0].mxu0 %v573
        %v709 = vpop.f32.mrb[0].mxu0
        %v710 = vadd.f32 0.0, %v709
        %v711 = vpop.f32.mrb[0].mxu0
        %712 = vmatprep.mubr.f32.mxu0 0.0
        %713 = vmatmul.mubr.f32.gmra.mrb[0].mxu0 %v574
        %v714 = vpop.f32.mrb[0].mxu0
        %v715 = vadd.f32 0.0, %v714
        %v716 = vpop.f32.mrb[0].mxu0
        %717 = vmatprep.mubr.f32.mxu0 0.0
        %718 = vmatmul.mubr.f32.gmra.mrb[0].mxu0 %v575
        %v719 = vpop.f32.mrb[0].mxu0
        %v720 = vadd.f32 0.0, %v719
        %v721 = vpop.f32.mrb[0].mxu0
        %722 = vmatprep.mubr.f32.mxu0 0.0
        %723 = vmatmul.mubr.f32.gmra.mrb[0].mxu0 %v576
        %v724 = vpop.f32.mrb[0].mxu0
        %v725 = vadd.f32 0.0, %v724
        %v726 = vpop.f32.mrb[0].mxu0
        %727 = vmatprep.mubr.f32.mxu0 0.0
        %728 = vmatmul.mubr.f32.gmra.mrb[0].mxu0 %v577
        %v729 = vpop.f32.mrb[0].mxu0
        %v730 = vadd.f32 0.0, %v729
        %v731 = vpop.f32.mrb[0].mxu0
        %732 = vmatprep.mubr.f32.mxu0 0.0
        %733 = vmatmul.mubr.f32.gmra.mrb[0].mxu0 %v578
        %v734 = vpop.f32.mrb[0].mxu0
        %v735 = vadd.f32 0.0, %v734
        %v736 = vpop.f32.mrb[0].mxu0
        %737 = vmatprep.mubr.f32.mxu0 0.0
        %738 = vmatmul.mubr.f32.gmra.mrb[0].mxu0 %v579
        %v739 = vpop.f32.mrb[0].mxu0
        %v740 = vadd.f32 0.0, %v739
        %v741 = vpop.f32.mrb[0].mxu0
        %742 = vdwg.mxu0
        %743 = vmatprep.subr.mxu0 0.0
        %744 = vmatpush1.msra.mxu0 %v600
        %745 = vmatprep.subr.mxu0 0.0
        %746 = vmatpush1.msra.mxu0 %v601
        %747 = vmatprep.subr.mxu0 0.0
        %748 = vmatpush1.msra.mxu0 %v602
        %749 = vmatprep.subr.mxu0 0.0
        %750 = vmatpush1.msra.mxu0 %v603
        %751 = vmatprep.subr.mxu0 0.0
        %752 = vmatpush1.msra.mxu0 %v604
        %753 = vmatprep.subr.mxu0 0.0
        %754 = vmatpush1.msra.mxu0 %v605
        %755 = vmatprep.subr.mxu0 0.0
        %756 = vmatpush1.msra.mxu0 %v606
        %757 = vmatprep.subr.mxu0 0.0
        %758 = vmatpush1.msra.mxu0 %v607
        %759 = vmatprep.subr.mxu0 0.0
        %760 = vmatpush1.msra.mxu0 %v608
        %761 = vmatprep.subr.mxu0 0.0
        %762 = vmatpush1.msra.mxu0 %v609
        %763 = vmatprep.subr.mxu0 0.0
        %764 = vmatpush1.msra.mxu0 %v610
        %765 = vmatprep.subr.mxu0 0.0
        %766 = vmatpush1.msra.mxu0 %v611
        %767 = vmatprep.subr.mxu0 0.0
        %768 = vmatpush1.msra.mxu0 %v612
        %769 = vmatprep.subr.mxu0 0.0
        %770 = vmatpush1.msra.mxu0 %v613
        %771 = vmatprep.subr.mxu0 0.0
        %772 = vmatpush1.msra.mxu0 %v614
        %773 = vmatprep.subr.mxu0 0.0
        %774 = vmatpush1.msra.mxu0 %v615
        %775 = vmatprep.subr.mxu0 0.0
        %776 = vmatpush1.msra.mxu0 0.0
        %777 = vmatprep.subr.mxu0 0.0
        %778 = vmatpush1.msra.mxu0 0.0
        %779 = vmatprep.subr.mxu0 0.0
        %780 = vmatpush1.msra.mxu0 0.0
        %781 = vmatprep.subr.mxu0 0.0
        %782 = vmatpush1.msra.mxu0 0.0
        %783 = vmatprep.subr.mxu0 0.0
        %784 = vmatpush1.msra.mxu0 0.0
        %785 = vmatprep.subr.mxu0 0.0
        %786 = vmatpush1.msra.mxu0 0.0
        %787 = vmatprep.subr.mxu0 0.0
        %788 = vmatpush1.msra.mxu0 0.0
        %789 = vmatprep.subr.mxu0 0.0
        %790 = vmatpush1.msra.mxu0 0.0
        %791 = vmatprep.subr.mxu0 0.0
        %792 = vmatpush1.msra.mxu0 0.0
        %793 = vmatprep.subr.mxu0 0.0
        %794 = vmatpush1.msra.mxu0 0.0
        %795 = vmatprep.subr.mxu0 0.0
        %796 = vmatpush1.msra.mxu0 0.0
        %797 = vmatprep.subr.mxu0 0.0
        %798 = vmatpush1.msra.mxu0 0.0
        %799 = vmatprep.subr.mxu0 0.0
        %800 = vmatpush1.msra.mxu0 0.0
        %801 = vmatprep.subr.mxu0 0.0
        %802 = vmatpush1.msra.mxu0 0.0
        %803 = vmatprep.subr.mxu0 0.0
        %804 = vmatpush1.msra.mxu0 0.0
        %805 = vmatprep.subr.mxu0 0.0
        %806 = vmatpush1.msra.mxu0 0.0
        %807 = vmatprep.mubr.f32.mxu0 0.0
        %808 = vmatmul.mubr.f32.gmra.mrb[0].mxu0 %v561
        %v809 = vpop.f32.mrb[0].mxu0
        %v810 = vadd.f32 %v700, %v809
        %v811 = vpop.f32.mrb[0].mxu0
        %812 = vmatprep.mubr.f32.mxu0 0.0
        %813 = vmatmul.mubr.f32.gmra.mrb[0].mxu0 %v562
        %v814 = vpop.f32.mrb[0].mxu0
        %v815 = vadd.f32 %v705, %v814
        %v816 = vpop.f32.mrb[0].mxu0
        %817 = vmatprep.mubr.f32.mxu0 0.0
        %818 = vmatmul.mubr.f32.gmra.mrb[0].mxu0 %v563
        %v819 = vpop.f32.mrb[0].mxu0
        %v820 = vadd.f32 %v710, %v819
        %v821 = vpop.f32.mrb[0].mxu0
        %822 = vmatprep.mubr.f32.mxu0 0.0
        %823 = vmatmul.mubr.f32.gmra.mrb[0].mxu0 %v564
        %v824 = vpop.f32.mrb[0].mxu0
        %v825 = vadd.f32 %v715, %v824
        %v826 = vpop.f32.mrb[0].mxu0
        %827 = vmatprep.mubr.f32.mxu0 0.0
        %828 = vmatmul.mubr.f32.gmra.mrb[0].mxu0 %v565
        %v829 = vpop.f32.mrb[0].mxu0
        %v830 = vadd.f32 %v720, %v829
        %v831 = vpop.f32.mrb[0].mxu0
        %832 = vmatprep.mubr.f32.mxu0 0.0
        %833 = vmatmul.mubr.f32.gmra.mrb[0].mxu0 %v566
        %v834 = vpop.f32.mrb[0].mxu0
        %v835 = vadd.f32 %v725, %v834
        %v836 = vpop.f32.mrb[0].mxu0
        %837 = vmatprep.mubr.f32.mxu0 0.0
        %838 = vmatmul.mubr.f32.gmra.mrb[0].mxu0 %v567
        %v839 = vpop.f32.mrb[0].mxu0
        %v840 = vadd.f32 %v730, %v839
        %v841 = vpop.f32.mrb[0].mxu0
        %842 = vmatprep.mubr.f32.mxu0 0.0
        %843 = vmatmul.mubr.f32.gmra.mrb[0].mxu0 %v568
        %v844 = vpop.f32.mrb[0].mxu0
        %v845 = vadd.f32 %v735, %v844
        %v846 = vpop.f32.mrb[0].mxu0
        %847 = vmatprep.mubr.f32.mxu0 0.0
        %848 = vmatmul.mubr.f32.gmra.mrb[0].mxu0 %v569
        %v849 = vpop.f32.mrb[0].mxu0
        %v850 = vadd.f32 %v740, %v849
        %v851 = vpop.f32.mrb[0].mxu0
        %852 = vdwg.mxu0
        %s853 = scalar_lea.vmem %s1, 256
        %v854 = vld [vmem:[%s853] sm:$0xff]
        %v855 = vld [vmem:[%s853 + $0x8] sm:$0xff]
        %v856 = vld [vmem:[%s853 + $0x10] sm:$0xff]
        %v857 = vld [vmem:[%s853 + $0x18] sm:$0xff]
        %v858 = vld [vmem:[%s853 + $0x20] sm:$0xff]
        %v859 = vld [vmem:[%s853 + $0x28] sm:$0xff]
        %v860 = vld [vmem:[%s853 + $0x30] sm:$0xff]
        %v861 = vld [vmem:[%s853 + $0x38] sm:$0xff]
        %v862 = vld [vmem:[%s853 + $0x40] sm:$0xff]
        %v863 = vld [vmem:[%s853 + $0x48] sm:$0xff]
        %v864 = vld [vmem:[%s853 + $0x50] sm:$0xff]
        %v865 = vld [vmem:[%s853 + $0x58] sm:$0xff]
        %v866 = vld [vmem:[%s853 + $0x60] sm:$0xff]
        %v867 = vld [vmem:[%s853 + $0x68] sm:$0xff]
        %v868 = vld [vmem:[%s853 + $0x70] sm:$0xff]
        %v869 = vld [vmem:[%s853 + $0x78] sm:$0xff]
        %870 = vmatprep.subr.mxu0 0.0
        %871 = vmatpush1.msra.mxu0 %v854
        %872 = vmatprep.subr.mxu0 0.0
        %873 = vmatpush1.msra.mxu0 %v855
        %874 = vmatprep.subr.mxu0 0.0
        %875 = vmatpush1.msra.mxu0 %v856
        %876 = vmatprep.subr.mxu0 0.0
        %877 = vmatpush1.msra.mxu0 %v857
        %878 = vmatprep.subr.mxu0 0.0
        %879 = vmatpush1.msra.mxu0 %v858
        %880 = vmatprep.subr.mxu0 0.0
        %881 = vmatpush1.msra.mxu0 %v859
        %882 = vmatprep.subr.mxu0 0.0
        %883 = vmatpush1.msra.mxu0 %v860
        %884 = vmatprep.subr.mxu0 0.0
        %885 = vmatpush1.msra.mxu0 %v861
        %886 = vmatprep.subr.mxu0 0.0
        %887 = vmatpush1.msra.mxu0 %v862
        %888 = vmatprep.subr.mxu0 0.0
        %889 = vmatpush1.msra.mxu0 %v863
        %890 = vmatprep.subr.mxu0 0.0
        %891 = vmatpush1.msra.mxu0 %v864
        %892 = vmatprep.subr.mxu0 0.0
        %893 = vmatpush1.msra.mxu0 %v865
        %894 = vmatprep.subr.mxu0 0.0
        %895 = vmatpush1.msra.mxu0 %v866
        %896 = vmatprep.subr.mxu0 0.0
        %897 = vmatpush1.msra.mxu0 %v867
        %898 = vmatprep.subr.mxu0 0.0
        %899 = vmatpush1.msra.mxu0 %v868
        %900 = vmatprep.subr.mxu0 0.0
        %901 = vmatpush1.msra.mxu0 %v869
        %902 = vmatprep.subr.mxu0 0.0
        %903 = vmatpush1.msra.mxu0 0.0
        %904 = vmatprep.subr.mxu0 0.0
        %905 = vmatpush1.msra.mxu0 0.0
        %906 = vmatprep.subr.mxu0 0.0
        %907 = vmatpush1.msra.mxu0 0.0
        %908 = vmatprep.subr.mxu0 0.0
        %909 = vmatpush1.msra.mxu0 0.0
        %910 = vmatprep.subr.mxu0 0.0
        %911 = vmatpush1.msra.mxu0 0.0
        %912 = vmatprep.subr.mxu0 0.0
        %913 = vmatpush1.msra.mxu0 0.0
        %914 = vmatprep.subr.mxu0 0.0
        %915 = vmatpush1.msra.mxu0 0.0
        %916 = vmatprep.subr.mxu0 0.0
        %917 = vmatpush1.msra.mxu0 0.0
        %918 = vmatprep.subr.mxu0 0.0
        %919 = vmatpush1.msra.mxu0 0.0
        %920 = vmatprep.subr.mxu0 0.0
        %921 = vmatpush1.msra.mxu0 0.0
        %922 = vmatprep.subr.mxu0 0.0
        %923 = vmatpush1.msra.mxu0 0.0
        %924 = vmatprep.subr.mxu0 0.0
        %925 = vmatpush1.msra.mxu0 0.0
        %926 = vmatprep.subr.mxu0 0.0
        %927 = vmatpush1.msra.mxu0 0.0
        %928 = vmatprep.subr.mxu0 0.0
        %929 = vmatpush1.msra.mxu0 0.0
        %930 = vmatprep.subr.mxu0 0.0
        %931 = vmatpush1.msra.mxu0 0.0
        %932 = vmatprep.subr.mxu0 0.0
        %933 = vmatpush1.msra.mxu0 0.0
        %934 = vmatprep.mubr.f32.mxu0 0.0
        %935 = vmatmul.mubr.f32.gmra.mrb[0].mxu0 %v581
        %v936 = vpop.f32.mrb[0].mxu0
        %v937 = vadd.f32 0.0, %v936
        %v938 = vpop.f32.mrb[0].mxu0
        %939 = vmatprep.mubr.f32.mxu0 0.0
        %940 = vmatmul.mubr.f32.gmra.mrb[0].mxu0 %v582
        %v941 = vpop.f32.mrb[0].mxu0
        %v942 = vadd.f32 0.0, %v941
        %v943 = vpop.f32.mrb[0].mxu0
        %944 = vmatprep.mubr.f32.mxu0 0.0
        %945 = vmatmul.mubr.f32.gmra.mrb[0].mxu0 %v583
        %v946 = vpop.f32.mrb[0].mxu0
        %v947 = vadd.f32 0.0, %v946
        %v948 = vpop.f32.mrb[0].mxu0
        %949 = vmatprep.mubr.f32.mxu0 0.0
        %950 = vmatmul.mubr.f32.gmra.mrb[0].mxu0 %v584
        %v951 = vpop.f32.mrb[0].mxu0
        %v952 = vadd.f32 0.0, %v951
        %v953 = vpop.f32.mrb[0].mxu0
        %954 = vmatprep.mubr.f32.mxu0 0.0
        %955 = vmatmul.mubr.f32.gmra.mrb[0].mxu0 %v585
        %v956 = vpop.f32.mrb[0].mxu0
        %v957 = vadd.f32 0.0, %v956
        %v958 = vpop.f32.mrb[0].mxu0
        %959 = vmatprep.mubr.f32.mxu0 0.0
        %960 = vmatmul.mubr.f32.gmra.mrb[0].mxu0 %v586
        %v961 = vpop.f32.mrb[0].mxu0
        %v962 = vadd.f32 0.0, %v961
        %v963 = vpop.f32.mrb[0].mxu0
        %964 = vmatprep.mubr.f32.mxu0 0.0
        %965 = vmatmul.mubr.f32.gmra.mrb[0].mxu0 %v587
        %v966 = vpop.f32.mrb[0].mxu0
        %v967 = vadd.f32 0.0, %v966
        %v968 = vpop.f32.mrb[0].mxu0
        %969 = vmatprep.mubr.f32.mxu0 0.0
        %970 = vmatmul.mubr.f32.gmra.mrb[0].mxu0 %v588
        %v971 = vpop.f32.mrb[0].mxu0
        %v972 = vadd.f32 0.0, %v971
        %v973 = vpop.f32.mrb[0].mxu0
        %974 = vmatprep.mubr.f32.mxu0 0.0
        %975 = vmatmul.mubr.f32.gmra.mrb[0].mxu0 %v589
        %v976 = vpop.f32.mrb[0].mxu0
        %v977 = vadd.f32 0.0, %v976
        %v978 = vpop.f32.mrb[0].mxu0
        %979 = vdwg.mxu0
        %v980 = vadd.f32 %v810, %v937
        %v981 = vadd.f32 %v815, %v942
        %v982 = vadd.f32 %v820, %v947
        %v983 = vadd.f32 %v825, %v952
        %v984 = vadd.f32 %v830, %v957
        %v985 = vadd.f32 %v835, %v962
        %v986 = vadd.f32 %v840, %v967
        %v987 = vadd.f32 %v845, %v972
        %v988 = vadd.f32 %v850, %v977
        %s989 = scalar_lea.vmem %s1, 384
        %v990 = vld [vmem:[%s989] sm:$0xff]
        %v991 = vld [vmem:[%s989 + $0x8] sm:$0xff]
        %v992 = vld [vmem:[%s989 + $0x10] sm:$0xff]
        %v993 = vld [vmem:[%s989 + $0x18] sm:$0xff]
        %v994 = vld [vmem:[%s989 + $0x20] sm:$0xff]
        %v995 = vld [vmem:[%s989 + $0x28] sm:$0xff]
        %v996 = vld [vmem:[%s989 + $0x30] sm:$0xff]
        %v997 = vld [vmem:[%s989 + $0x38] sm:$0xff]
        %v998 = vld [vmem:[%s989 + $0x40] sm:$0xff]
        %v999 = vld [vmem:[%s989 + $0x48] sm:$0xff]
        %v1000 = vld [vmem:[%s989 + $0x50] sm:$0xff]
        %v1001 = vld [vmem:[%s989 + $0x58] sm:$0xff]
        %v1002 = vld [vmem:[%s989 + $0x60] sm:$0xff]
        %v1003 = vld [vmem:[%s989 + $0x68] sm:$0xff]
        %v1004 = vld [vmem:[%s989 + $0x70] sm:$0xff]
        %v1005 = vld [vmem:[%s989 + $0x78] sm:$0xff]
        %1006 = vmatprep.subr.mxu0 0.0
        %1007 = vmatpush1.msra.mxu0 %v990
        %1008 = vmatprep.subr.mxu0 0.0
        %1009 = vmatpush1.msra.mxu0 %v991
        %1010 = vmatprep.subr.mxu0 0.0
        %1011 = vmatpush1.msra.mxu0 %v992
        %1012 = vmatprep.subr.mxu0 0.0
        %1013 = vmatpush1.msra.mxu0 %v993
        %1014 = vmatprep.subr.mxu0 0.0
        %1015 = vmatpush1.msra.mxu0 %v994
        %1016 = vmatprep.subr.mxu0 0.0
        %1017 = vmatpush1.msra.mxu0 %v995
        %1018 = vmatprep.subr.mxu0 0.0
        %1019 = vmatpush1.msra.mxu0 %v996
        %1020 = vmatprep.subr.mxu0 0.0
        %1021 = vmatpush1.msra.mxu0 %v997
        %1022 = vmatprep.subr.mxu0 0.0
        %1023 = vmatpush1.msra.mxu0 %v998
        %1024 = vmatprep.subr.mxu0 0.0
        %1025 = vmatpush1.msra.mxu0 %v999
        %1026 = vmatprep.subr.mxu0 0.0
        %1027 = vmatpush1.msra.mxu0 %v1000
        %1028 = vmatprep.subr.mxu0 0.0
        %1029 = vmatpush1.msra.mxu0 %v1001
        %1030 = vmatprep.subr.mxu0 0.0
        %1031 = vmatpush1.msra.mxu0 %v1002
        %1032 = vmatprep.subr.mxu0 0.0
        %1033 = vmatpush1.msra.mxu0 %v1003
        %1034 = vmatprep.subr.mxu0 0.0
        %1035 = vmatpush1.msra.mxu0 %v1004
        %1036 = vmatprep.subr.mxu0 0.0
        %1037 = vmatpush1.msra.mxu0 %v1005
        %1038 = vmatprep.subr.mxu0 0.0
        %1039 = vmatpush1.msra.mxu0 0.0
        %1040 = vmatprep.subr.mxu0 0.0
        %1041 = vmatpush1.msra.mxu0 0.0
        %1042 = vmatprep.subr.mxu0 0.0
        %1043 = vmatpush1.msra.mxu0 0.0
        %1044 = vmatprep.subr.mxu0 0.0
        %1045 = vmatpush1.msra.mxu0 0.0
        %1046 = vmatprep.subr.mxu0 0.0
        %1047 = vmatpush1.msra.mxu0 0.0
        %1048 = vmatprep.subr.mxu0 0.0
        %1049 = vmatpush1.msra.mxu0 0.0
        %1050 = vmatprep.subr.mxu0 0.0
        %1051 = vmatpush1.msra.mxu0 0.0
        %1052 = vmatprep.subr.mxu0 0.0
        %1053 = vmatpush1.msra.mxu0 0.0
        %1054 = vmatprep.subr.mxu0 0.0
        %1055 = vmatpush1.msra.mxu0 0.0
        %1056 = vmatprep.subr.mxu0 0.0
        %1057 = vmatpush1.msra.mxu0 0.0
        %1058 = vmatprep.subr.mxu0 0.0
        %1059 = vmatpush1.msra.mxu0 0.0
        %1060 = vmatprep.subr.mxu0 0.0
        %1061 = vmatpush1.msra.mxu0 0.0
        %1062 = vmatprep.subr.mxu0 0.0
        %1063 = vmatpush1.msra.mxu0 0.0
        %1064 = vmatprep.subr.mxu0 0.0
        %1065 = vmatpush1.msra.mxu0 0.0
        %1066 = vmatprep.subr.mxu0 0.0
        %1067 = vmatpush1.msra.mxu0 0.0
        %1068 = vmatprep.subr.mxu0 0.0
        %1069 = vmatpush1.msra.mxu0 0.0
        %1070 = vmatprep.mubr.f32.mxu0 0.0
        %1071 = vmatmul.mubr.f32.gmra.mrb[0].mxu0 %v591
        %v1072 = vpop.f32.mrb[0].mxu0
        %v1073 = vadd.f32 0.0, %v1072
        %v1074 = vpop.f32.mrb[0].mxu0
        %1075 = vmatprep.mubr.f32.mxu0 0.0
        %1076 = vmatmul.mubr.f32.gmra.mrb[0].mxu0 %v592
        %v1077 = vpop.f32.mrb[0].mxu0
        %v1078 = vadd.f32 0.0, %v1077
        %v1079 = vpop.f32.mrb[0].mxu0
        %1080 = vmatprep.mubr.f32.mxu0 0.0
        %1081 = vmatmul.mubr.f32.gmra.mrb[0].mxu0 %v593
        %v1082 = vpop.f32.mrb[0].mxu0
        %v1083 = vadd.f32 0.0, %v1082
        %v1084 = vpop.f32.mrb[0].mxu0
        %1085 = vmatprep.mubr.f32.mxu0 0.0
        %1086 = vmatmul.mubr.f32.gmra.mrb[0].mxu0 %v594
        %v1087 = vpop.f32.mrb[0].mxu0
        %v1088 = vadd.f32 0.0, %v1087
        %v1089 = vpop.f32.mrb[0].mxu0
        %1090 = vmatprep.mubr.f32.mxu0 0.0
        %1091 = vmatmul.mubr.f32.gmra.mrb[0].mxu0 %v595
        %v1092 = vpop.f32.mrb[0].mxu0
        %v1093 = vadd.f32 0.0, %v1092
        %v1094 = vpop.f32.mrb[0].mxu0
        %1095 = vmatprep.mubr.f32.mxu0 0.0
        %1096 = vmatmul.mubr.f32.gmra.mrb[0].mxu0 %v596
        %v1097 = vpop.f32.mrb[0].mxu0
        %v1098 = vadd.f32 0.0, %v1097
        %v1099 = vpop.f32.mrb[0].mxu0
        %1100 = vmatprep.mubr.f32.mxu0 0.0
        %1101 = vmatmul.mubr.f32.gmra.mrb[0].mxu0 %v597
        %v1102 = vpop.f32.mrb[0].mxu0
        %v1103 = vadd.f32 0.0, %v1102
        %v1104 = vpop.f32.mrb[0].mxu0
        %1105 = vmatprep.mubr.f32.mxu0 0.0
        %1106 = vmatmul.mubr.f32.gmra.mrb[0].mxu0 %v598
        %v1107 = vpop.f32.mrb[0].mxu0
        %v1108 = vadd.f32 0.0, %v1107
        %v1109 = vpop.f32.mrb[0].mxu0
        %1110 = vmatprep.mubr.f32.mxu0 0.0
        %1111 = vmatmul.mubr.f32.gmra.mrb[0].mxu0 %v599
        %v1112 = vpop.f32.mrb[0].mxu0
        %v1113 = vadd.f32 0.0, %v1112
        %v1114 = vpop.f32.mrb[0].mxu0
        %1115 = vdwg.mxu0
        %v1116 = vadd.f32 %v980, %v1073
        %v1117 = vadd.f32 %v981, %v1078
        %v1118 = vadd.f32 %v982, %v1083
        %v1119 = vadd.f32 %v983, %v1088
        %v1120 = vadd.f32 %v984, %v1093
        %v1121 = vadd.f32 %v985, %v1098
        %v1122 = vadd.f32 %v986, %v1103
        %v1123 = vadd.f32 %v987, %v1108
        %v1124 = vadd.f32 %v988, %v1113
        %s1125 = scalar_lea.vmem %s1, 512
        %v1126 = vld [vmem:[%s1125] sm:$0xff]
        %v1127 = vld [vmem:[%s1125 + $0x8] sm:$0xff]
        %v1128 = vld [vmem:[%s1125 + $0x10] sm:$0xff]
        %v1129 = vld [vmem:[%s1125 + $0x18] sm:$0xff]
        %v1130 = vld [vmem:[%s1125 + $0x20] sm:$0xff]
        %v1131 = vld [vmem:[%s1125 + $0x28] sm:$0xff]
        %v1132 = vld [vmem:[%s1125 + $0x30] sm:$0xff]
        %v1133 = vld [vmem:[%s1125 + $0x38] sm:$0xff]
        %v1134 = vld [vmem:[%s1125 + $0x40] sm:$0xff]
        %v1135 = vld [vmem:[%s1125 + $0x48] sm:$0xff]
        %v1136 = vld [vmem:[%s1125 + $0x50] sm:$0xff]
        %v1137 = vld [vmem:[%s1125 + $0x58] sm:$0xff]
        %v1138 = vld [vmem:[%s1125 + $0x60] sm:$0xff]
        %v1139 = vld [vmem:[%s1125 + $0x68] sm:$0xff]
        %v1140 = vld [vmem:[%s1125 + $0x70] sm:$0xff]
        %v1141 = vld [vmem:[%s1125 + $0x78] sm:$0xff]
        %vm1151 = vcmask 1046528
        %v1152 = vrot.slane %v561, 1
        %v1153 = vrot.slane %v562, 1
        %v1154 = vsel %vm1151, %v1152, %v1153
        %v1155 = vrot.slane %v563, 1
        %v1156 = vsel %vm1151, %v1153, %v1155
        %v1157 = vrot.slane %v564, 1
        %v1158 = vsel %vm1151, %v1155, %v1157
        %v1159 = vrot.slane %v565, 1
        %v1160 = vsel %vm1151, %v1157, %v1159
        %v1161 = vrot.slane %v566, 1
        %v1162 = vsel %vm1151, %v1159, %v1161
        %v1163 = vrot.slane %v567, 1
        %v1164 = vsel %vm1151, %v1161, %v1163
        %v1165 = vrot.slane %v568, 1
        %v1166 = vsel %vm1151, %v1163, %v1165
        %v1167 = vrot.slane %v569, 1
        %v1168 = vsel %vm1151, %v1165, %v1167
        %1178 = vmatprep.subr.mxu0 0.0
        %1179 = vmatpush1.msra.mxu0 %v1126
        %1180 = vmatprep.subr.mxu0 0.0
        %1181 = vmatpush1.msra.mxu0 %v1127
        %1182 = vmatprep.subr.mxu0 0.0
        %1183 = vmatpush1.msra.mxu0 %v1128
        %1184 = vmatprep.subr.mxu0 0.0
        %1185 = vmatpush1.msra.mxu0 %v1129
        %1186 = vmatprep.subr.mxu0 0.0
        %1187 = vmatpush1.msra.mxu0 %v1130
        %1188 = vmatprep.subr.mxu0 0.0
        %1189 = vmatpush1.msra.mxu0 %v1131
        %1190 = vmatprep.subr.mxu0 0.0
        %1191 = vmatpush1.msra.mxu0 %v1132
        %1192 = vmatprep.subr.mxu0 0.0
        %1193 = vmatpush1.msra.mxu0 %v1133
        %1194 = vmatprep.subr.mxu0 0.0
        %1195 = vmatpush1.msra.mxu0 %v1134
        %1196 = vmatprep.subr.mxu0 0.0
        %1197 = vmatpush1.msra.mxu0 %v1135
        %1198 = vmatprep.subr.mxu0 0.0
        %1199 = vmatpush1.msra.mxu0 %v1136
        %1200 = vmatprep.subr.mxu0 0.0
        %1201 = vmatpush1.msra.mxu0 %v1137
        %1202 = vmatprep.subr.mxu0 0.0
        %1203 = vmatpush1.msra.mxu0 %v1138
        %1204 = vmatprep.subr.mxu0 0.0
        %1205 = vmatpush1.msra.mxu0 %v1139
        %1206 = vmatprep.subr.mxu0 0.0
        %1207 = vmatpush1.msra.mxu0 %v1140
        %1208 = vmatprep.subr.mxu0 0.0
        %1209 = vmatpush1.msra.mxu0 %v1141
        %1210 = vmatprep.subr.mxu0 0.0
        %1211 = vmatpush1.msra.mxu0 0.0
        %1212 = vmatprep.subr.mxu0 0.0
        %1213 = vmatpush1.msra.mxu0 0.0
        %1214 = vmatprep.subr.mxu0 0.0
        %1215 = vmatpush1.msra.mxu0 0.0
        %1216 = vmatprep.subr.mxu0 0.0
        %1217 = vmatpush1.msra.mxu0 0.0
        %1218 = vmatprep.subr.mxu0 0.0
        %1219 = vmatpush1.msra.mxu0 0.0
        %1220 = vmatprep.subr.mxu0 0.0
        %1221 = vmatpush1.msra.mxu0 0.0
        %1222 = vmatprep.subr.mxu0 0.0
        %1223 = vmatpush1.msra.mxu0 0.0
        %1224 = vmatprep.subr.mxu0 0.0
        %1225 = vmatpush1.msra.mxu0 0.0
        %1226 = vmatprep.subr.mxu0 0.0
        %1227 = vmatpush1.msra.mxu0 0.0
        %1228 = vmatprep.subr.mxu0 0.0
        %1229 = vmatpush1.msra.mxu0 0.0
        %1230 = vmatprep.subr.mxu0 0.0
        %1231 = vmatpush1.msra.mxu0 0.0
        %1232 = vmatprep.subr.mxu0 0.0
        %1233 = vmatpush1.msra.mxu0 0.0
        %1234 = vmatprep.subr.mxu0 0.0
        %1235 = vmatpush1.msra.mxu0 0.0
        %1236 = vmatprep.subr.mxu0 0.0
        %1237 = vmatpush1.msra.mxu0 0.0
        %1238 = vmatprep.subr.mxu0 0.0
        %1239 = vmatpush1.msra.mxu0 0.0
        %1240 = vmatprep.subr.mxu0 0.0
        %1241 = vmatpush1.msra.mxu0 0.0
        %1242 = vmatprep.mubr.f32.mxu0 0.0
        %1243 = vmatmul.mubr.f32.gmra.mrb[0].mxu0 %v1154
        %v1244 = vpop.f32.mrb[0].mxu0
        %v1245 = vadd.f32 0.0, %v1244
        %v1246 = vpop.f32.mrb[0].mxu0
        %1247 = vmatprep.mubr.f32.mxu0 0.0
        %1248 = vmatmul.mubr.f32.gmra.mrb[0].mxu0 %v1156
        %v1249 = vpop.f32.mrb[0].mxu0
        %v1250 = vadd.f32 0.0, %v1249
        %v1251 = vpop.f32.mrb[0].mxu0
        %1252 = vmatprep.mubr.f32.mxu0 0.0
        %1253 = vmatmul.mubr.f32.gmra.mrb[0].mxu0 %v1158
        %v1254 = vpop.f32.mrb[0].mxu0
        %v1255 = vadd.f32 0.0, %v1254
        %v1256 = vpop.f32.mrb[0].mxu0
        %1257 = vmatprep.mubr.f32.mxu0 0.0
        %1258 = vmatmul.mubr.f32.gmra.mrb[0].mxu0 %v1160
        %v1259 = vpop.f32.mrb[0].mxu0
        %v1260 = vadd.f32 0.0, %v1259
        %v1261 = vpop.f32.mrb[0].mxu0
        %1262 = vmatprep.mubr.f32.mxu0 0.0
        %1263 = vmatmul.mubr.f32.gmra.mrb[0].mxu0 %v1162
        %v1264 = vpop.f32.mrb[0].mxu0
        %v1265 = vadd.f32 0.0, %v1264
        %v1266 = vpop.f32.mrb[0].mxu0
        %1267 = vmatprep.mubr.f32.mxu0 0.0
        %1268 = vmatmul.mubr.f32.gmra.mrb[0].mxu0 %v1164
        %v1269 = vpop.f32.mrb[0].mxu0
        %v1270 = vadd.f32 0.0, %v1269
        %v1271 = vpop.f32.mrb[0].mxu0
        %1272 = vmatprep.mubr.f32.mxu0 0.0
        %1273 = vmatmul.mubr.f32.gmra.mrb[0].mxu0 %v1166
        %v1274 = vpop.f32.mrb[0].mxu0
        %v1275 = vadd.f32 0.0, %v1274
        %v1276 = vpop.f32.mrb[0].mxu0
        %1277 = vmatprep.mubr.f32.mxu0 0.0
        %1278 = vmatmul.mubr.f32.gmra.mrb[0].mxu0 %v1168
        %v1279 = vpop.f32.mrb[0].mxu0
        %v1280 = vadd.f32 0.0, %v1279
        %v1281 = vpop.f32.mrb[0].mxu0
        %1282 = vmatprep.mubr.f32.mxu0 0.0
        %1283 = vmatmul.mubr.f32.gmra.mrb[0].mxu0 %v1167
        %v1284 = vpop.f32.mrb[0].mxu0
        %v1285 = vadd.f32 0.0, %v1284
        %v1286 = vpop.f32.mrb[0].mxu0
        %1287 = vdwg.mxu0
        %v1288 = vadd.f32 %v1116, %v1245
        %v1289 = vadd.f32 %v1117, %v1250
        %v1290 = vadd.f32 %v1118, %v1255
        %v1291 = vadd.f32 %v1119, %v1260
        %v1292 = vadd.f32 %v1120, %v1265
        %v1293 = vadd.f32 %v1121, %v1270
        %v1294 = vadd.f32 %v1122, %v1275
        %v1295 = vadd.f32 %v1123, %v1280
        %v1296 = vadd.f32 %v1124, %v1285
        %s1297 = scalar_lea.vmem %s1, 640
        %v1298 = vld [vmem:[%s1297] sm:$0xff]
        %v1299 = vld [vmem:[%s1297 + $0x8] sm:$0xff]
        %v1300 = vld [vmem:[%s1297 + $0x10] sm:$0xff]
        %v1301 = vld [vmem:[%s1297 + $0x18] sm:$0xff]
        %v1302 = vld [vmem:[%s1297 + $0x20] sm:$0xff]
        %v1303 = vld [vmem:[%s1297 + $0x28] sm:$0xff]
        %v1304 = vld [vmem:[%s1297 + $0x30] sm:$0xff]
        %v1305 = vld [vmem:[%s1297 + $0x38] sm:$0xff]
        %v1306 = vld [vmem:[%s1297 + $0x40] sm:$0xff]
        %v1307 = vld [vmem:[%s1297 + $0x48] sm:$0xff]
        %v1308 = vld [vmem:[%s1297 + $0x50] sm:$0xff]
        %v1309 = vld [vmem:[%s1297 + $0x58] sm:$0xff]
        %v1310 = vld [vmem:[%s1297 + $0x60] sm:$0xff]
        %v1311 = vld [vmem:[%s1297 + $0x68] sm:$0xff]
        %v1312 = vld [vmem:[%s1297 + $0x70] sm:$0xff]
        %v1313 = vld [vmem:[%s1297 + $0x78] sm:$0xff]
        %v1323 = vrot.slane %v571, 1
        %v1324 = vrot.slane %v572, 1
        %v1325 = vsel %vm1151, %v1323, %v1324
        %v1326 = vrot.slane %v573, 1
        %v1327 = vsel %vm1151, %v1324, %v1326
        %v1328 = vrot.slane %v574, 1
        %v1329 = vsel %vm1151, %v1326, %v1328
        %v1330 = vrot.slane %v575, 1
        %v1331 = vsel %vm1151, %v1328, %v1330
        %v1332 = vrot.slane %v576, 1
        %v1333 = vsel %vm1151, %v1330, %v1332
        %v1334 = vrot.slane %v577, 1
        %v1335 = vsel %vm1151, %v1332, %v1334
        %v1336 = vrot.slane %v578, 1
        %v1337 = vsel %vm1151, %v1334, %v1336
        %v1338 = vrot.slane %v579, 1
        %v1339 = vsel %vm1151, %v1336, %v1338
        %1349 = vmatprep.subr.mxu0 0.0
        %1350 = vmatpush1.msra.mxu0 %v1298
        %1351 = vmatprep.subr.mxu0 0.0
        %1352 = vmatpush1.msra.mxu0 %v1299
        %1353 = vmatprep.subr.mxu0 0.0
        %1354 = vmatpush1.msra.mxu0 %v1300
        %1355 = vmatprep.subr.mxu0 0.0
        %1356 = vmatpush1.msra.mxu0 %v1301
        %1357 = vmatprep.subr.mxu0 0.0
        %1358 = vmatpush1.msra.mxu0 %v1302
        %1359 = vmatprep.subr.mxu0 0.0
        %1360 = vmatpush1.msra.mxu0 %v1303
        %1361 = vmatprep.subr.mxu0 0.0
        %1362 = vmatpush1.msra.mxu0 %v1304
        %1363 = vmatprep.subr.mxu0 0.0
        %1364 = vmatpush1.msra.mxu0 %v1305
        %1365 = vmatprep.subr.mxu0 0.0
        %1366 = vmatpush1.msra.mxu0 %v1306
        %1367 = vmatprep.subr.mxu0 0.0
        %1368 = vmatpush1.msra.mxu0 %v1307
        %1369 = vmatprep.subr.mxu0 0.0
        %1370 = vmatpush1.msra.mxu0 %v1308
        %1371 = vmatprep.subr.mxu0 0.0
        %1372 = vmatpush1.msra.mxu0 %v1309
        %1373 = vmatprep.subr.mxu0 0.0
        %1374 = vmatpush1.msra.mxu0 %v1310
        %1375 = vmatprep.subr.mxu0 0.0
        %1376 = vmatpush1.msra.mxu0 %v1311
        %1377 = vmatprep.subr.mxu0 0.0
        %1378 = vmatpush1.msra.mxu0 %v1312
        %1379 = vmatprep.subr.mxu0 0.0
        %1380 = vmatpush1.msra.mxu0 %v1313
        %1381 = vmatprep.subr.mxu0 0.0
        %1382 = vmatpush1.msra.mxu0 0.0
        %1383 = vmatprep.subr.mxu0 0.0
        %1384 = vmatpush1.msra.mxu0 0.0
        %1385 = vmatprep.subr.mxu0 0.0
        %1386 = vmatpush1.msra.mxu0 0.0
        %1387 = vmatprep.subr.mxu0 0.0
        %1388 = vmatpush1.msra.mxu0 0.0
        %1389 = vmatprep.subr.mxu0 0.0
        %1390 = vmatpush1.msra.mxu0 0.0
        %1391 = vmatprep.subr.mxu0 0.0
        %1392 = vmatpush1.msra.mxu0 0.0
        %1393 = vmatprep.subr.mxu0 0.0
        %1394 = vmatpush1.msra.mxu0 0.0
        %1395 = vmatprep.subr.mxu0 0.0
        %1396 = vmatpush1.msra.mxu0 0.0
        %1397 = vmatprep.subr.mxu0 0.0
        %1398 = vmatpush1.msra.mxu0 0.0
        %1399 = vmatprep.subr.mxu0 0.0
        %1400 = vmatpush1.msra.mxu0 0.0
        %1401 = vmatprep.subr.mxu0 0.0
        %1402 = vmatpush1.msra.mxu0 0.0
        %1403 = vmatprep.subr.mxu0 0.0
        %1404 = vmatpush1.msra.mxu0 0.0
        %1405 = vmatprep.subr.mxu0 0.0
        %1406 = vmatpush1.msra.mxu0 0.0
        %1407 = vmatprep.subr.mxu0 0.0
        %1408 = vmatpush1.msra.mxu0 0.0
        %1409 = vmatprep.subr.mxu0 0.0
        %1410 = vmatpush1.msra.mxu0 0.0
        %1411 = vmatprep.subr.mxu0 0.0
        %1412 = vmatpush1.msra.mxu0 0.0
        %1413 = vmatprep.mubr.f32.mxu0 0.0
        %1414 = vmatmul.mubr.f32.gmra.mrb[0].mxu0 %v1325
        %v1415 = vpop.f32.mrb[0].mxu0
        %v1416 = vadd.f32 0.0, %v1415
        %v1417 = vpop.f32.mrb[0].mxu0
        %1418 = vmatprep.mubr.f32.mxu0 0.0
        %1419 = vmatmul.mubr.f32.gmra.mrb[0].mxu0 %v1327
        %v1420 = vpop.f32.mrb[0].mxu0
        %v1421 = vadd.f32 0.0, %v1420
        %v1422 = vpop.f32.mrb[0].mxu0
        %1423 = vmatprep.mubr.f32.mxu0 0.0
        %1424 = vmatmul.mubr.f32.gmra.mrb[0].mxu0 %v1329
        %v1425 = vpop.f32.mrb[0].mxu0
        %v1426 = vadd.f32 0.0, %v1425
        %v1427 = vpop.f32.mrb[0].mxu0
        %1428 = vmatprep.mubr.f32.mxu0 0.0
        %1429 = vmatmul.mubr.f32.gmra.mrb[0].mxu0 %v1331
        %v1430 = vpop.f32.mrb[0].mxu0
        %v1431 = vadd.f32 0.0, %v1430
        %v1432 = vpop.f32.mrb[0].mxu0
        %1433 = vmatprep.mubr.f32.mxu0 0.0
        %1434 = vmatmul.mubr.f32.gmra.mrb[0].mxu0 %v1333
        %v1435 = vpop.f32.mrb[0].mxu0
        %v1436 = vadd.f32 0.0, %v1435
        %v1437 = vpop.f32.mrb[0].mxu0
        %1438 = vmatprep.mubr.f32.mxu0 0.0
        %1439 = vmatmul.mubr.f32.gmra.mrb[0].mxu0 %v1335
        %v1440 = vpop.f32.mrb[0].mxu0
        %v1441 = vadd.f32 0.0, %v1440
        %v1442 = vpop.f32.mrb[0].mxu0
        %1443 = vmatprep.mubr.f32.mxu0 0.0
        %1444 = vmatmul.mubr.f32.gmra.mrb[0].mxu0 %v1337
        %v1445 = vpop.f32.mrb[0].mxu0
        %v1446 = vadd.f32 0.0, %v1445
        %v1447 = vpop.f32.mrb[0].mxu0
        %1448 = vmatprep.mubr.f32.mxu0 0.0
        %1449 = vmatmul.mubr.f32.gmra.mrb[0].mxu0 %v1339
        %v1450 = vpop.f32.mrb[0].mxu0
        %v1451 = vadd.f32 0.0, %v1450
        %v1452 = vpop.f32.mrb[0].mxu0
        %1453 = vmatprep.mubr.f32.mxu0 0.0
        %1454 = vmatmul.mubr.f32.gmra.mrb[0].mxu0 %v1338
        %v1455 = vpop.f32.mrb[0].mxu0
        %v1456 = vadd.f32 0.0, %v1455
        %v1457 = vpop.f32.mrb[0].mxu0
        %1458 = vdwg.mxu0
        %v1459 = vadd.f32 %v1288, %v1416
        %v1460 = vadd.f32 %v1289, %v1421
        %v1461 = vadd.f32 %v1290, %v1426
        %v1462 = vadd.f32 %v1291, %v1431
        %v1463 = vadd.f32 %v1292, %v1436
        %v1464 = vadd.f32 %v1293, %v1441
        %v1465 = vadd.f32 %v1294, %v1446
        %v1466 = vadd.f32 %v1295, %v1451
        %v1467 = vadd.f32 %v1296, %v1456
        %v1468 = vld [vmem:[%s2] sm:$0x1]
        %v1470 = vlaneseq
        %v1471 = vshrl.u32 %v1470, 7
        %v1472 = vsub.s32 0, %v1471
        %v1473 = vrot.slane %v1468, %v1472
        %v1475 = vadd.f32 %v1459, %v1473
        %v1476 = vadd.f32 %v1460, %v1473
        %v1477 = vadd.f32 %v1461, %v1473
        %v1478 = vadd.f32 %v1462, %v1473
        %v1479 = vadd.f32 %v1463, %v1473
        %v1480 = vadd.f32 %v1464, %v1473
        %v1481 = vadd.f32 %v1465, %v1473
        %v1482 = vadd.f32 %v1466, %v1473
        %v1483 = vadd.f32 %v1467, %v1473
        %1484 = vmatprep.subr.mxu0 0.0
        %1485 = vmatpush1.msra.mxu0 %v617
        %1486 = vmatprep.subr.mxu0 0.0
        %1487 = vmatpush1.msra.mxu0 %v618
        %1488 = vmatprep.subr.mxu0 0.0
        %1489 = vmatpush1.msra.mxu0 %v619
        %1490 = vmatprep.subr.mxu0 0.0
        %1491 = vmatpush1.msra.mxu0 %v620
        %1492 = vmatprep.subr.mxu0 0.0
        %1493 = vmatpush1.msra.mxu0 %v621
        %1494 = vmatprep.subr.mxu0 0.0
        %1495 = vmatpush1.msra.mxu0 %v622
        %1496 = vmatprep.subr.mxu0 0.0
        %1497 = vmatpush1.msra.mxu0 %v623
        %1498 = vmatprep.subr.mxu0 0.0
        %1499 = vmatpush1.msra.mxu0 %v624
        %1500 = vmatprep.subr.mxu0 0.0
        %1501 = vmatpush1.msra.mxu0 %v625
        %1502 = vmatprep.subr.mxu0 0.0
        %1503 = vmatpush1.msra.mxu0 %v626
        %1504 = vmatprep.subr.mxu0 0.0
        %1505 = vmatpush1.msra.mxu0 %v627
        %1506 = vmatprep.subr.mxu0 0.0
        %1507 = vmatpush1.msra.mxu0 %v628
        %1508 = vmatprep.subr.mxu0 0.0
        %1509 = vmatpush1.msra.mxu0 %v629
        %1510 = vmatprep.subr.mxu0 0.0
        %1511 = vmatpush1.msra.mxu0 %v630
        %1512 = vmatprep.subr.mxu0 0.0
        %1513 = vmatpush1.msra.mxu0 %v631
        %1514 = vmatprep.subr.mxu0 0.0
        %1515 = vmatpush1.msra.mxu0 %v632
        %1516 = vmatprep.subr.mxu0 0.0
        %1517 = vmatpush1.msra.mxu0 0.0
        %1518 = vmatprep.subr.mxu0 0.0
        %1519 = vmatpush1.msra.mxu0 0.0
        %1520 = vmatprep.subr.mxu0 0.0
        %1521 = vmatpush1.msra.mxu0 0.0
        %1522 = vmatprep.subr.mxu0 0.0
        %1523 = vmatpush1.msra.mxu0 0.0
        %1524 = vmatprep.subr.mxu0 0.0
        %1525 = vmatpush1.msra.mxu0 0.0
        %1526 = vmatprep.subr.mxu0 0.0
        %1527 = vmatpush1.msra.mxu0 0.0
        %1528 = vmatprep.subr.mxu0 0.0
        %1529 = vmatpush1.msra.mxu0 0.0
        %1530 = vmatprep.subr.mxu0 0.0
        %1531 = vmatpush1.msra.mxu0 0.0
        %1532 = vmatprep.subr.mxu0 0.0
        %1533 = vmatpush1.msra.mxu0 0.0
        %1534 = vmatprep.subr.mxu0 0.0
        %1535 = vmatpush1.msra.mxu0 0.0
        %1536 = vmatprep.subr.mxu0 0.0
        %1537 = vmatpush1.msra.mxu0 0.0
        %1538 = vmatprep.subr.mxu0 0.0
        %1539 = vmatpush1.msra.mxu0 0.0
        %1540 = vmatprep.subr.mxu0 0.0
        %1541 = vmatpush1.msra.mxu0 0.0
        %1542 = vmatprep.subr.mxu0 0.0
        %1543 = vmatpush1.msra.mxu0 0.0
        %1544 = vmatprep.subr.mxu0 0.0
        %1545 = vmatpush1.msra.mxu0 0.0
        %1546 = vmatprep.subr.mxu0 0.0
        %1547 = vmatpush1.msra.mxu0 0.0
        %1548 = vmatprep.mubr.f32.mxu0 0.0
        %1549 = vmatmul.mubr.f32.gmra.mrb[0].mxu0 %v591
        %v1550 = vpop.f32.mrb[0].mxu0
        %v1551 = vadd.f32 0.0, %v1550
        %v1552 = vpop.f32.mrb[0].mxu0
        %1553 = vmatprep.mubr.f32.mxu0 0.0
        %1554 = vmatmul.mubr.f32.gmra.mrb[0].mxu0 %v592
        %v1555 = vpop.f32.mrb[0].mxu0
        %v1556 = vadd.f32 0.0, %v1555
        %v1557 = vpop.f32.mrb[0].mxu0
        %1558 = vmatprep.mubr.f32.mxu0 0.0
        %1559 = vmatmul.mubr.f32.gmra.mrb[0].mxu0 %v593
        %v1560 = vpop.f32.mrb[0].mxu0
        %v1561 = vadd.f32 0.0, %v1560
        %v1562 = vpop.f32.mrb[0].mxu0
        %1563 = vmatprep.mubr.f32.mxu0 0.0
        %1564 = vmatmul.mubr.f32.gmra.mrb[0].mxu0 %v594
        %v1565 = vpop.f32.mrb[0].mxu0
        %v1566 = vadd.f32 0.0, %v1565
        %v1567 = vpop.f32.mrb[0].mxu0
        %1568 = vmatprep.mubr.f32.mxu0 0.0
        %1569 = vmatmul.mubr.f32.gmra.mrb[0].mxu0 %v595
        %v1570 = vpop.f32.mrb[0].mxu0
        %v1571 = vadd.f32 0.0, %v1570
        %v1572 = vpop.f32.mrb[0].mxu0
        %1573 = vmatprep.mubr.f32.mxu0 0.0
        %1574 = vmatmul.mubr.f32.gmra.mrb[0].mxu0 %v596
        %v1575 = vpop.f32.mrb[0].mxu0
        %v1576 = vadd.f32 0.0, %v1575
        %v1577 = vpop.f32.mrb[0].mxu0
        %1578 = vmatprep.mubr.f32.mxu0 0.0
        %1579 = vmatmul.mubr.f32.gmra.mrb[0].mxu0 %v597
        %v1580 = vpop.f32.mrb[0].mxu0
        %v1581 = vadd.f32 0.0, %v1580
        %v1582 = vpop.f32.mrb[0].mxu0
        %1583 = vmatprep.mubr.f32.mxu0 0.0
        %1584 = vmatmul.mubr.f32.gmra.mrb[0].mxu0 %v598
        %v1585 = vpop.f32.mrb[0].mxu0
        %v1586 = vadd.f32 0.0, %v1585
        %v1587 = vpop.f32.mrb[0].mxu0
        %1588 = vmatprep.mubr.f32.mxu0 0.0
        %1589 = vmatmul.mubr.f32.gmra.mrb[0].mxu0 %v599
        %v1590 = vpop.f32.mrb[0].mxu0
        %v1591 = vadd.f32 0.0, %v1590
        %v1592 = vpop.f32.mrb[0].mxu0
        %1593 = vdwg.mxu0
        %1594 = vmatprep.subr.mxu0 0.0
        %1595 = vmatpush1.msra.mxu0 %v600
        %1596 = vmatprep.subr.mxu0 0.0
        %1597 = vmatpush1.msra.mxu0 %v601
        %1598 = vmatprep.subr.mxu0 0.0
        %1599 = vmatpush1.msra.mxu0 %v602
        %1600 = vmatprep.subr.mxu0 0.0
        %1601 = vmatpush1.msra.mxu0 %v603
        %1602 = vmatprep.subr.mxu0 0.0
        %1603 = vmatpush1.msra.mxu0 %v604
        %1604 = vmatprep.subr.mxu0 0.0
        %1605 = vmatpush1.msra.mxu0 %v605
        %1606 = vmatprep.subr.mxu0 0.0
        %1607 = vmatpush1.msra.mxu0 %v606
        %1608 = vmatprep.subr.mxu0 0.0
        %1609 = vmatpush1.msra.mxu0 %v607
        %1610 = vmatprep.subr.mxu0 0.0
        %1611 = vmatpush1.msra.mxu0 %v608
        %1612 = vmatprep.subr.mxu0 0.0
        %1613 = vmatpush1.msra.mxu0 %v609
        %1614 = vmatprep.subr.mxu0 0.0
        %1615 = vmatpush1.msra.mxu0 %v610
        %1616 = vmatprep.subr.mxu0 0.0
        %1617 = vmatpush1.msra.mxu0 %v611
        %1618 = vmatprep.subr.mxu0 0.0
        %1619 = vmatpush1.msra.mxu0 %v612
        %1620 = vmatprep.subr.mxu0 0.0
        %1621 = vmatpush1.msra.mxu0 %v613
        %1622 = vmatprep.subr.mxu0 0.0
        %1623 = vmatpush1.msra.mxu0 %v614
        %1624 = vmatprep.subr.mxu0 0.0
        %1625 = vmatpush1.msra.mxu0 %v615
        %1626 = vmatprep.subr.mxu0 0.0
        %1627 = vmatpush1.msra.mxu0 0.0
        %1628 = vmatprep.subr.mxu0 0.0
        %1629 = vmatpush1.msra.mxu0 0.0
        %1630 = vmatprep.subr.mxu0 0.0
        %1631 = vmatpush1.msra.mxu0 0.0
        %1632 = vmatprep.subr.mxu0 0.0
        %1633 = vmatpush1.msra.mxu0 0.0
        %1634 = vmatprep.subr.mxu0 0.0
        %1635 = vmatpush1.msra.mxu0 0.0
        %1636 = vmatprep.subr.mxu0 0.0
        %1637 = vmatpush1.msra.mxu0 0.0
        %1638 = vmatprep.subr.mxu0 0.0
        %1639 = vmatpush1.msra.mxu0 0.0
        %1640 = vmatprep.subr.mxu0 0.0
        %1641 = vmatpush1.msra.mxu0 0.0
        %1642 = vmatprep.subr.mxu0 0.0
        %1643 = vmatpush1.msra.mxu0 0.0
        %1644 = vmatprep.subr.mxu0 0.0
        %1645 = vmatpush1.msra.mxu0 0.0
        %1646 = vmatprep.subr.mxu0 0.0
        %1647 = vmatpush1.msra.mxu0 0.0
        %1648 = vmatprep.subr.mxu0 0.0
        %1649 = vmatpush1.msra.mxu0 0.0
        %1650 = vmatprep.subr.mxu0 0.0
        %1651 = vmatpush1.msra.mxu0 0.0
        %1652 = vmatprep.subr.mxu0 0.0
        %1653 = vmatpush1.msra.mxu0 0.0
        %1654 = vmatprep.subr.mxu0 0.0
        %1655 = vmatpush1.msra.mxu0 0.0
        %1656 = vmatprep.subr.mxu0 0.0
        %1657 = vmatpush1.msra.mxu0 0.0
        %1658 = vmatprep.mubr.f32.mxu0 0.0
        %1659 = vmatmul.mubr.f32.gmra.mrb[0].mxu0 %v581
        %v1660 = vpop.f32.mrb[0].mxu0
        %v1661 = vadd.f32 %v1551, %v1660
        %v1662 = vpop.f32.mrb[0].mxu0
        %1663 = vmatprep.mubr.f32.mxu0 0.0
        %1664 = vmatmul.mubr.f32.gmra.mrb[0].mxu0 %v582
        %v1665 = vpop.f32.mrb[0].mxu0
        %v1666 = vadd.f32 %v1556, %v1665
        %v1667 = vpop.f32.mrb[0].mxu0
        %1668 = vmatprep.mubr.f32.mxu0 0.0
        %1669 = vmatmul.mubr.f32.gmra.mrb[0].mxu0 %v583
        %v1670 = vpop.f32.mrb[0].mxu0
        %v1671 = vadd.f32 %v1561, %v1670
        %v1672 = vpop.f32.mrb[0].mxu0
        %1673 = vmatprep.mubr.f32.mxu0 0.0
        %1674 = vmatmul.mubr.f32.gmra.mrb[0].mxu0 %v584
        %v1675 = vpop.f32.mrb[0].mxu0
        %v1676 = vadd.f32 %v1566, %v1675
        %v1677 = vpop.f32.mrb[0].mxu0
        %1678 = vmatprep.mubr.f32.mxu0 0.0
        %1679 = vmatmul.mubr.f32.gmra.mrb[0].mxu0 %v585
        %v1680 = vpop.f32.mrb[0].mxu0
        %v1681 = vadd.f32 %v1571, %v1680
        %v1682 = vpop.f32.mrb[0].mxu0
        %1683 = vmatprep.mubr.f32.mxu0 0.0
        %1684 = vmatmul.mubr.f32.gmra.mrb[0].mxu0 %v586
        %v1685 = vpop.f32.mrb[0].mxu0
        %v1686 = vadd.f32 %v1576, %v1685
        %v1687 = vpop.f32.mrb[0].mxu0
        %1688 = vmatprep.mubr.f32.mxu0 0.0
        %1689 = vmatmul.mubr.f32.gmra.mrb[0].mxu0 %v587
        %v1690 = vpop.f32.mrb[0].mxu0
        %v1691 = vadd.f32 %v1581, %v1690
        %v1692 = vpop.f32.mrb[0].mxu0
        %1693 = vmatprep.mubr.f32.mxu0 0.0
        %1694 = vmatmul.mubr.f32.gmra.mrb[0].mxu0 %v588
        %v1695 = vpop.f32.mrb[0].mxu0
        %v1696 = vadd.f32 %v1586, %v1695
        %v1697 = vpop.f32.mrb[0].mxu0
        %1698 = vmatprep.mubr.f32.mxu0 0.0
        %1699 = vmatmul.mubr.f32.gmra.mrb[0].mxu0 %v589
        %v1700 = vpop.f32.mrb[0].mxu0
        %v1701 = vadd.f32 %v1591, %v1700
        %v1702 = vpop.f32.mrb[0].mxu0
        %1703 = vdwg.mxu0
        %1704 = vmatprep.subr.mxu0 0.0
        %1705 = vmatpush1.msra.mxu0 %v854
        %1706 = vmatprep.subr.mxu0 0.0
        %1707 = vmatpush1.msra.mxu0 %v855
        %1708 = vmatprep.subr.mxu0 0.0
        %1709 = vmatpush1.msra.mxu0 %v856
        %1710 = vmatprep.subr.mxu0 0.0
        %1711 = vmatpush1.msra.mxu0 %v857
        %1712 = vmatprep.subr.mxu0 0.0
        %1713 = vmatpush1.msra.mxu0 %v858
        %1714 = vmatprep.subr.mxu0 0.0
        %1715 = vmatpush1.msra.mxu0 %v859
        %1716 = vmatprep.subr.mxu0 0.0
        %1717 = vmatpush1.msra.mxu0 %v860
        %1718 = vmatprep.subr.mxu0 0.0
        %1719 = vmatpush1.msra.mxu0 %v861
        %1720 = vmatprep.subr.mxu0 0.0
        %1721 = vmatpush1.msra.mxu0 %v862
        %1722 = vmatprep.subr.mxu0 0.0
        %1723 = vmatpush1.msra.mxu0 %v863
        %1724 = vmatprep.subr.mxu0 0.0
        %1725 = vmatpush1.msra.mxu0 %v864
        %1726 = vmatprep.subr.mxu0 0.0
        %1727 = vmatpush1.msra.mxu0 %v865
        %1728 = vmatprep.subr.mxu0 0.0
        %1729 = vmatpush1.msra.mxu0 %v866
        %1730 = vmatprep.subr.mxu0 0.0
        %1731 = vmatpush1.msra.mxu0 %v867
        %1732 = vmatprep.subr.mxu0 0.0
        %1733 = vmatpush1.msra.mxu0 %v868
        %1734 = vmatprep.subr.mxu0 0.0
        %1735 = vmatpush1.msra.mxu0 %v869
        %1736 = vmatprep.subr.mxu0 0.0
        %1737 = vmatpush1.msra.mxu0 0.0
        %1738 = vmatprep.subr.mxu0 0.0
        %1739 = vmatpush1.msra.mxu0 0.0
        %1740 = vmatprep.subr.mxu0 0.0
        %1741 = vmatpush1.msra.mxu0 0.0
        %1742 = vmatprep.subr.mxu0 0.0
        %1743 = vmatpush1.msra.mxu0 0.0
        %1744 = vmatprep.subr.mxu0 0.0
        %1745 = vmatpush1.msra.mxu0 0.0
        %1746 = vmatprep.subr.mxu0 0.0
        %1747 = vmatpush1.msra.mxu0 0.0
        %1748 = vmatprep.subr.mxu0 0.0
        %1749 = vmatpush1.msra.mxu0 0.0
        %1750 = vmatprep.subr.mxu0 0.0
        %1751 = vmatpush1.msra.mxu0 0.0
        %1752 = vmatprep.subr.mxu0 0.0
        %1753 = vmatpush1.msra.mxu0 0.0
        %1754 = vmatprep.subr.mxu0 0.0
        %1755 = vmatpush1.msra.mxu0 0.0
        %1756 = vmatprep.subr.mxu0 0.0
        %1757 = vmatpush1.msra.mxu0 0.0
        %1758 = vmatprep.subr.mxu0 0.0
        %1759 = vmatpush1.msra.mxu0 0.0
        %1760 = vmatprep.subr.mxu0 0.0
        %1761 = vmatpush1.msra.mxu0 0.0
        %1762 = vmatprep.subr.mxu0 0.0
        %1763 = vmatpush1.msra.mxu0 0.0
        %1764 = vmatprep.subr.mxu0 0.0
        %1765 = vmatpush1.msra.mxu0 0.0
        %1766 = vmatprep.subr.mxu0 0.0
        %1767 = vmatpush1.msra.mxu0 0.0
        %1768 = vmatprep.mubr.f32.mxu0 0.0
        %1769 = vmatmul.mubr.f32.gmra.mrb[0].mxu0 %v1154
        %v1770 = vpop.f32.mrb[0].mxu0
        %v1771 = vadd.f32 0.0, %v1770
        %v1772 = vpop.f32.mrb[0].mxu0
        %1773 = vmatprep.mubr.f32.mxu0 0.0
        %1774 = vmatmul.mubr.f32.gmra.mrb[0].mxu0 %v1156
        %v1775 = vpop.f32.mrb[0].mxu0
        %v1776 = vadd.f32 0.0, %v1775
        %v1777 = vpop.f32.mrb[0].mxu0
        %1778 = vmatprep.mubr.f32.mxu0 0.0
        %1779 = vmatmul.mubr.f32.gmra.mrb[0].mxu0 %v1158
        %v1780 = vpop.f32.mrb[0].mxu0
        %v1781 = vadd.f32 0.0, %v1780
        %v1782 = vpop.f32.mrb[0].mxu0
        %1783 = vmatprep.mubr.f32.mxu0 0.0
        %1784 = vmatmul.mubr.f32.gmra.mrb[0].mxu0 %v1160
        %v1785 = vpop.f32.mrb[0].mxu0
        %v1786 = vadd.f32 0.0, %v1785
        %v1787 = vpop.f32.mrb[0].mxu0
        %1788 = vmatprep.mubr.f32.mxu0 0.0
        %1789 = vmatmul.mubr.f32.gmra.mrb[0].mxu0 %v1162
        %v1790 = vpop.f32.mrb[0].mxu0
        %v1791 = vadd.f32 0.0, %v1790
        %v1792 = vpop.f32.mrb[0].mxu0
        %1793 = vmatprep.mubr.f32.mxu0 0.0
        %1794 = vmatmul.mubr.f32.gmra.mrb[0].mxu0 %v1164
        %v1795 = vpop.f32.mrb[0].mxu0
        %v1796 = vadd.f32 0.0, %v1795
        %v1797 = vpop.f32.mrb[0].mxu0
        %1798 = vmatprep.mubr.f32.mxu0 0.0
        %1799 = vmatmul.mubr.f32.gmra.mrb[0].mxu0 %v1166
        %v1800 = vpop.f32.mrb[0].mxu0
        %v1801 = vadd.f32 0.0, %v1800
        %v1802 = vpop.f32.mrb[0].mxu0
        %1803 = vmatprep.mubr.f32.mxu0 0.0
        %1804 = vmatmul.mubr.f32.gmra.mrb[0].mxu0 %v1168
        %v1805 = vpop.f32.mrb[0].mxu0
        %v1806 = vadd.f32 0.0, %v1805
        %v1807 = vpop.f32.mrb[0].mxu0
        %1808 = vmatprep.mubr.f32.mxu0 0.0
        %1809 = vmatmul.mubr.f32.gmra.mrb[0].mxu0 %v1167
        %v1810 = vpop.f32.mrb[0].mxu0
        %v1811 = vadd.f32 0.0, %v1810
        %v1812 = vpop.f32.mrb[0].mxu0
        %1813 = vdwg.mxu0
        %v1814 = vadd.f32 %v1661, %v1771
        %v1815 = vadd.f32 %v1666, %v1776
        %v1816 = vadd.f32 %v1671, %v1781
        %v1817 = vadd.f32 %v1676, %v1786
        %v1818 = vadd.f32 %v1681, %v1791
        %v1819 = vadd.f32 %v1686, %v1796
        %v1820 = vadd.f32 %v1691, %v1801
        %v1821 = vadd.f32 %v1696, %v1806
        %v1822 = vadd.f32 %v1701, %v1811
        %1823 = vmatprep.subr.mxu0 0.0
        %1824 = vmatpush1.msra.mxu0 %v990
        %1825 = vmatprep.subr.mxu0 0.0
        %1826 = vmatpush1.msra.mxu0 %v991
        %1827 = vmatprep.subr.mxu0 0.0
        %1828 = vmatpush1.msra.mxu0 %v992
        %1829 = vmatprep.subr.mxu0 0.0
        %1830 = vmatpush1.msra.mxu0 %v993
        %1831 = vmatprep.subr.mxu0 0.0
        %1832 = vmatpush1.msra.mxu0 %v994
        %1833 = vmatprep.subr.mxu0 0.0
        %1834 = vmatpush1.msra.mxu0 %v995
        %1835 = vmatprep.subr.mxu0 0.0
        %1836 = vmatpush1.msra.mxu0 %v996
        %1837 = vmatprep.subr.mxu0 0.0
        %1838 = vmatpush1.msra.mxu0 %v997
        %1839 = vmatprep.subr.mxu0 0.0
        %1840 = vmatpush1.msra.mxu0 %v998
        %1841 = vmatprep.subr.mxu0 0.0
        %1842 = vmatpush1.msra.mxu0 %v999
        %1843 = vmatprep.subr.mxu0 0.0
        %1844 = vmatpush1.msra.mxu0 %v1000
        %1845 = vmatprep.subr.mxu0 0.0
        %1846 = vmatpush1.msra.mxu0 %v1001
        %1847 = vmatprep.subr.mxu0 0.0
        %1848 = vmatpush1.msra.mxu0 %v1002
        %1849 = vmatprep.subr.mxu0 0.0
        %1850 = vmatpush1.msra.mxu0 %v1003
        %1851 = vmatprep.subr.mxu0 0.0
        %1852 = vmatpush1.msra.mxu0 %v1004
        %1853 = vmatprep.subr.mxu0 0.0
        %1854 = vmatpush1.msra.mxu0 %v1005
        %1855 = vmatprep.subr.mxu0 0.0
        %1856 = vmatpush1.msra.mxu0 0.0
        %1857 = vmatprep.subr.mxu0 0.0
        %1858 = vmatpush1.msra.mxu0 0.0
        %1859 = vmatprep.subr.mxu0 0.0
        %1860 = vmatpush1.msra.mxu0 0.0
        %1861 = vmatprep.subr.mxu0 0.0
        %1862 = vmatpush1.msra.mxu0 0.0
        %1863 = vmatprep.subr.mxu0 0.0
        %1864 = vmatpush1.msra.mxu0 0.0
        %1865 = vmatprep.subr.mxu0 0.0
        %1866 = vmatpush1.msra.mxu0 0.0
        %1867 = vmatprep.subr.mxu0 0.0
        %1868 = vmatpush1.msra.mxu0 0.0
        %1869 = vmatprep.subr.mxu0 0.0
        %1870 = vmatpush1.msra.mxu0 0.0
        %1871 = vmatprep.subr.mxu0 0.0
        %1872 = vmatpush1.msra.mxu0 0.0
        %1873 = vmatprep.subr.mxu0 0.0
        %1874 = vmatpush1.msra.mxu0 0.0
        %1875 = vmatprep.subr.mxu0 0.0
        %1876 = vmatpush1.msra.mxu0 0.0
        %1877 = vmatprep.subr.mxu0 0.0
        %1878 = vmatpush1.msra.mxu0 0.0
        %1879 = vmatprep.subr.mxu0 0.0
        %1880 = vmatpush1.msra.mxu0 0.0
        %1881 = vmatprep.subr.mxu0 0.0
        %1882 = vmatpush1.msra.mxu0 0.0
        %1883 = vmatprep.subr.mxu0 0.0
        %1884 = vmatpush1.msra.mxu0 0.0
        %1885 = vmatprep.subr.mxu0 0.0
        %1886 = vmatpush1.msra.mxu0 0.0
        %1887 = vmatprep.mubr.f32.mxu0 0.0
        %1888 = vmatmul.mubr.f32.gmra.mrb[0].mxu0 %v1325
        %v1889 = vpop.f32.mrb[0].mxu0
        %v1890 = vadd.f32 0.0, %v1889
        %v1891 = vpop.f32.mrb[0].mxu0
        %1892 = vmatprep.mubr.f32.mxu0 0.0
        %1893 = vmatmul.mubr.f32.gmra.mrb[0].mxu0 %v1327
        %v1894 = vpop.f32.mrb[0].mxu0
        %v1895 = vadd.f32 0.0, %v1894
        %v1896 = vpop.f32.mrb[0].mxu0
        %1897 = vmatprep.mubr.f32.mxu0 0.0
        %1898 = vmatmul.mubr.f32.gmra.mrb[0].mxu0 %v1329
        %v1899 = vpop.f32.mrb[0].mxu0
        %v1900 = vadd.f32 0.0, %v1899
        %v1901 = vpop.f32.mrb[0].mxu0
        %1902 = vmatprep.mubr.f32.mxu0 0.0
        %1903 = vmatmul.mubr.f32.gmra.mrb[0].mxu0 %v1331
        %v1904 = vpop.f32.mrb[0].mxu0
        %v1905 = vadd.f32 0.0, %v1904
        %v1906 = vpop.f32.mrb[0].mxu0
        %1907 = vmatprep.mubr.f32.mxu0 0.0
        %1908 = vmatmul.mubr.f32.gmra.mrb[0].mxu0 %v1333
        %v1909 = vpop.f32.mrb[0].mxu0
        %v1910 = vadd.f32 0.0, %v1909
        %v1911 = vpop.f32.mrb[0].mxu0
        %1912 = vmatprep.mubr.f32.mxu0 0.0
        %1913 = vmatmul.mubr.f32.gmra.mrb[0].mxu0 %v1335
        %v1914 = vpop.f32.mrb[0].mxu0
        %v1915 = vadd.f32 0.0, %v1914
        %v1916 = vpop.f32.mrb[0].mxu0
        %1917 = vmatprep.mubr.f32.mxu0 0.0
        %1918 = vmatmul.mubr.f32.gmra.mrb[0].mxu0 %v1337
        %v1919 = vpop.f32.mrb[0].mxu0
        %v1920 = vadd.f32 0.0, %v1919
        %v1921 = vpop.f32.mrb[0].mxu0
        %1922 = vmatprep.mubr.f32.mxu0 0.0
        %1923 = vmatmul.mubr.f32.gmra.mrb[0].mxu0 %v1339
        %v1924 = vpop.f32.mrb[0].mxu0
        %v1925 = vadd.f32 0.0, %v1924
        %v1926 = vpop.f32.mrb[0].mxu0
        %1927 = vmatprep.mubr.f32.mxu0 0.0
        %1928 = vmatmul.mubr.f32.gmra.mrb[0].mxu0 %v1338
        %v1929 = vpop.f32.mrb[0].mxu0
        %v1930 = vadd.f32 0.0, %v1929
        %v1931 = vpop.f32.mrb[0].mxu0
        %1932 = vdwg.mxu0
        %v1933 = vadd.f32 %v1814, %v1890
        %v1934 = vadd.f32 %v1815, %v1895
        %v1935 = vadd.f32 %v1816, %v1900
        %v1936 = vadd.f32 %v1817, %v1905
        %v1937 = vadd.f32 %v1818, %v1910
        %v1938 = vadd.f32 %v1819, %v1915
        %v1939 = vadd.f32 %v1820, %v1920
        %v1940 = vadd.f32 %v1821, %v1925
        %v1941 = vadd.f32 %v1822, %v1930
        %v1951 = vrot.slane %v581, 1
        %v1952 = vrot.slane %v582, 1
        %v1953 = vsel %vm1151, %v1951, %v1952
        %v1954 = vrot.slane %v583, 1
        %v1955 = vsel %vm1151, %v1952, %v1954
        %v1956 = vrot.slane %v584, 1
        %v1957 = vsel %vm1151, %v1954, %v1956
        %v1958 = vrot.slane %v585, 1
        %v1959 = vsel %vm1151, %v1956, %v1958
        %v1960 = vrot.slane %v586, 1
        %v1961 = vsel %vm1151, %v1958, %v1960
        %v1962 = vrot.slane %v587, 1
        %v1963 = vsel %vm1151, %v1960, %v1962
        %v1964 = vrot.slane %v588, 1
        %v1965 = vsel %vm1151, %v1962, %v1964
        %v1966 = vrot.slane %v589, 1
        %v1967 = vsel %vm1151, %v1964, %v1966
        %1977 = vmatprep.subr.mxu0 0.0
        %1978 = vmatpush1.msra.mxu0 %v1126
        %1979 = vmatprep.subr.mxu0 0.0
        %1980 = vmatpush1.msra.mxu0 %v1127
        %1981 = vmatprep.subr.mxu0 0.0
        %1982 = vmatpush1.msra.mxu0 %v1128
        %1983 = vmatprep.subr.mxu0 0.0
        %1984 = vmatpush1.msra.mxu0 %v1129
        %1985 = vmatprep.subr.mxu0 0.0
        %1986 = vmatpush1.msra.mxu0 %v1130
        %1987 = vmatprep.subr.mxu0 0.0
        %1988 = vmatpush1.msra.mxu0 %v1131
        %1989 = vmatprep.subr.mxu0 0.0
        %1990 = vmatpush1.msra.mxu0 %v1132
        %1991 = vmatprep.subr.mxu0 0.0
        %1992 = vmatpush1.msra.mxu0 %v1133
        %1993 = vmatprep.subr.mxu0 0.0
        %1994 = vmatpush1.msra.mxu0 %v1134
        %1995 = vmatprep.subr.mxu0 0.0
        %1996 = vmatpush1.msra.mxu0 %v1135
        %1997 = vmatprep.subr.mxu0 0.0
        %1998 = vmatpush1.msra.mxu0 %v1136
        %1999 = vmatprep.subr.mxu0 0.0
        %2000 = vmatpush1.msra.mxu0 %v1137
        %2001 = vmatprep.subr.mxu0 0.0
        %2002 = vmatpush1.msra.mxu0 %v1138
        %2003 = vmatprep.subr.mxu0 0.0
        %2004 = vmatpush1.msra.mxu0 %v1139
        %2005 = vmatprep.subr.mxu0 0.0
        %2006 = vmatpush1.msra.mxu0 %v1140
        %2007 = vmatprep.subr.mxu0 0.0
        %2008 = vmatpush1.msra.mxu0 %v1141
        %2009 = vmatprep.subr.mxu0 0.0
        %2010 = vmatpush1.msra.mxu0 0.0
        %2011 = vmatprep.subr.mxu0 0.0
        %2012 = vmatpush1.msra.mxu0 0.0
        %2013 = vmatprep.subr.mxu0 0.0
        %2014 = vmatpush1.msra.mxu0 0.0
        %2015 = vmatprep.subr.mxu0 0.0
        %2016 = vmatpush1.msra.mxu0 0.0
        %2017 = vmatprep.subr.mxu0 0.0
        %2018 = vmatpush1.msra.mxu0 0.0
        %2019 = vmatprep.subr.mxu0 0.0
        %2020 = vmatpush1.msra.mxu0 0.0
        %2021 = vmatprep.subr.mxu0 0.0
        %2022 = vmatpush1.msra.mxu0 0.0
        %2023 = vmatprep.subr.mxu0 0.0
        %2024 = vmatpush1.msra.mxu0 0.0
        %2025 = vmatprep.subr.mxu0 0.0
        %2026 = vmatpush1.msra.mxu0 0.0
        %2027 = vmatprep.subr.mxu0 0.0
        %2028 = vmatpush1.msra.mxu0 0.0
        %2029 = vmatprep.subr.mxu0 0.0
        %2030 = vmatpush1.msra.mxu0 0.0
        %2031 = vmatprep.subr.mxu0 0.0
        %2032 = vmatpush1.msra.mxu0 0.0
        %2033 = vmatprep.subr.mxu0 0.0
        %2034 = vmatpush1.msra.mxu0 0.0
        %2035 = vmatprep.subr.mxu0 0.0
        %2036 = vmatpush1.msra.mxu0 0.0
        %2037 = vmatprep.subr.mxu0 0.0
        %2038 = vmatpush1.msra.mxu0 0.0
        %2039 = vmatprep.subr.mxu0 0.0
        %2040 = vmatpush1.msra.mxu0 0.0
        %2041 = vmatprep.mubr.f32.mxu0 0.0
        %2042 = vmatmul.mubr.f32.gmra.mrb[0].mxu0 %v1953
        %v2043 = vpop.f32.mrb[0].mxu0
        %v2044 = vadd.f32 0.0, %v2043
        %v2045 = vpop.f32.mrb[0].mxu0
        %2046 = vmatprep.mubr.f32.mxu0 0.0
        %2047 = vmatmul.mubr.f32.gmra.mrb[0].mxu0 %v1955
        %v2048 = vpop.f32.mrb[0].mxu0
        %v2049 = vadd.f32 0.0, %v2048
        %v2050 = vpop.f32.mrb[0].mxu0
        %2051 = vmatprep.mubr.f32.mxu0 0.0
        %2052 = vmatmul.mubr.f32.gmra.mrb[0].mxu0 %v1957
        %v2053 = vpop.f32.mrb[0].mxu0
        %v2054 = vadd.f32 0.0, %v2053
        %v2055 = vpop.f32.mrb[0].mxu0
        %2056 = vmatprep.mubr.f32.mxu0 0.0
        %2057 = vmatmul.mubr.f32.gmra.mrb[0].mxu0 %v1959
        %v2058 = vpop.f32.mrb[0].mxu0
        %v2059 = vadd.f32 0.0, %v2058
        %v2060 = vpop.f32.mrb[0].mxu0
        %2061 = vmatprep.mubr.f32.mxu0 0.0
        %2062 = vmatmul.mubr.f32.gmra.mrb[0].mxu0 %v1961
        %v2063 = vpop.f32.mrb[0].mxu0
        %v2064 = vadd.f32 0.0, %v2063
        %v2065 = vpop.f32.mrb[0].mxu0
        %2066 = vmatprep.mubr.f32.mxu0 0.0
        %2067 = vmatmul.mubr.f32.gmra.mrb[0].mxu0 %v1963
        %v2068 = vpop.f32.mrb[0].mxu0
        %v2069 = vadd.f32 0.0, %v2068
        %v2070 = vpop.f32.mrb[0].mxu0
        %2071 = vmatprep.mubr.f32.mxu0 0.0
        %2072 = vmatmul.mubr.f32.gmra.mrb[0].mxu0 %v1965
        %v2073 = vpop.f32.mrb[0].mxu0
        %v2074 = vadd.f32 0.0, %v2073
        %v2075 = vpop.f32.mrb[0].mxu0
        %2076 = vmatprep.mubr.f32.mxu0 0.0
        %2077 = vmatmul.mubr.f32.gmra.mrb[0].mxu0 %v1967
        %v2078 = vpop.f32.mrb[0].mxu0
        %v2079 = vadd.f32 0.0, %v2078
        %v2080 = vpop.f32.mrb[0].mxu0
        %2081 = vmatprep.mubr.f32.mxu0 0.0
        %2082 = vmatmul.mubr.f32.gmra.mrb[0].mxu0 %v1966
        %v2083 = vpop.f32.mrb[0].mxu0
        %v2084 = vadd.f32 0.0, %v2083
        %v2085 = vpop.f32.mrb[0].mxu0
        %2086 = vdwg.mxu0
        %v2087 = vadd.f32 %v1933, %v2044
        %v2088 = vadd.f32 %v1934, %v2049
        %v2089 = vadd.f32 %v1935, %v2054
        %v2090 = vadd.f32 %v1936, %v2059
        %v2091 = vadd.f32 %v1937, %v2064
        %v2092 = vadd.f32 %v1938, %v2069
        %v2093 = vadd.f32 %v1939, %v2074
        %v2094 = vadd.f32 %v1940, %v2079
        %v2095 = vadd.f32 %v1941, %v2084
        %v2105 = vrot.slane %v591, 1
        %v2106 = vrot.slane %v592, 1
        %v2107 = vsel %vm1151, %v2105, %v2106
        %v2108 = vrot.slane %v593, 1
        %v2109 = vsel %vm1151, %v2106, %v2108
        %v2110 = vrot.slane %v594, 1
        %v2111 = vsel %vm1151, %v2108, %v2110
        %v2112 = vrot.slane %v595, 1
        %v2113 = vsel %vm1151, %v2110, %v2112
        %v2114 = vrot.slane %v596, 1
        %v2115 = vsel %vm1151, %v2112, %v2114
        %v2116 = vrot.slane %v597, 1
        %v2117 = vsel %vm1151, %v2114, %v2116
        %v2118 = vrot.slane %v598, 1
        %v2119 = vsel %vm1151, %v2116, %v2118
        %v2120 = vrot.slane %v599, 1
        %v2121 = vsel %vm1151, %v2118, %v2120
        %2131 = vmatprep.subr.mxu0 0.0
        %2132 = vmatpush1.msra.mxu0 %v1298
        %2133 = vmatprep.subr.mxu0 0.0
        %2134 = vmatpush1.msra.mxu0 %v1299
        %2135 = vmatprep.subr.mxu0 0.0
        %2136 = vmatpush1.msra.mxu0 %v1300
        %2137 = vmatprep.subr.mxu0 0.0
        %2138 = vmatpush1.msra.mxu0 %v1301
        %2139 = vmatprep.subr.mxu0 0.0
        %2140 = vmatpush1.msra.mxu0 %v1302
        %2141 = vmatprep.subr.mxu0 0.0
        %2142 = vmatpush1.msra.mxu0 %v1303
        %2143 = vmatprep.subr.mxu0 0.0
        %2144 = vmatpush1.msra.mxu0 %v1304
        %2145 = vmatprep.subr.mxu0 0.0
        %2146 = vmatpush1.msra.mxu0 %v1305
        %2147 = vmatprep.subr.mxu0 0.0
        %2148 = vmatpush1.msra.mxu0 %v1306
        %2149 = vmatprep.subr.mxu0 0.0
        %2150 = vmatpush1.msra.mxu0 %v1307
        %2151 = vmatprep.subr.mxu0 0.0
        %2152 = vmatpush1.msra.mxu0 %v1308
        %2153 = vmatprep.subr.mxu0 0.0
        %2154 = vmatpush1.msra.mxu0 %v1309
        %2155 = vmatprep.subr.mxu0 0.0
        %2156 = vmatpush1.msra.mxu0 %v1310
        %2157 = vmatprep.subr.mxu0 0.0
        %2158 = vmatpush1.msra.mxu0 %v1311
        %2159 = vmatprep.subr.mxu0 0.0
        %2160 = vmatpush1.msra.mxu0 %v1312
        %2161 = vmatprep.subr.mxu0 0.0
        %2162 = vmatpush1.msra.mxu0 %v1313
        %2163 = vmatprep.subr.mxu0 0.0
        %2164 = vmatpush1.msra.mxu0 0.0
        %2165 = vmatprep.subr.mxu0 0.0
        %2166 = vmatpush1.msra.mxu0 0.0
        %2167 = vmatprep.subr.mxu0 0.0
        %2168 = vmatpush1.msra.mxu0 0.0
        %2169 = vmatprep.subr.mxu0 0.0
        %2170 = vmatpush1.msra.mxu0 0.0
        %2171 = vmatprep.subr.mxu0 0.0
        %2172 = vmatpush1.msra.mxu0 0.0
        %2173 = vmatprep.subr.mxu0 0.0
        %2174 = vmatpush1.msra.mxu0 0.0
        %2175 = vmatprep.subr.mxu0 0.0
        %2176 = vmatpush1.msra.mxu0 0.0
        %2177 = vmatprep.subr.mxu0 0.0
        %2178 = vmatpush1.msra.mxu0 0.0
        %2179 = vmatprep.subr.mxu0 0.0
        %2180 = vmatpush1.msra.mxu0 0.0
        %2181 = vmatprep.subr.mxu0 0.0
        %2182 = vmatpush1.msra.mxu0 0.0
        %2183 = vmatprep.subr.mxu0 0.0
        %2184 = vmatpush1.msra.mxu0 0.0
        %2185 = vmatprep.subr.mxu0 0.0
        %2186 = vmatpush1.msra.mxu0 0.0
        %2187 = vmatprep.subr.mxu0 0.0
        %2188 = vmatpush1.msra.mxu0 0.0
        %2189 = vmatprep.subr.mxu0 0.0
        %2190 = vmatpush1.msra.mxu0 0.0
        %2191 = vmatprep.subr.mxu0 0.0
        %2192 = vmatpush1.msra.mxu0 0.0
        %2193 = vmatprep.subr.mxu0 0.0
        %2194 = vmatpush1.msra.mxu0 0.0
        %2195 = vmatprep.mubr.f32.mxu0 0.0
        %2196 = vmatmul.mubr.f32.gmra.mrb[0].mxu0 %v2107
        %v2197 = vpop.f32.mrb[0].mxu0
        %v2198 = vadd.f32 0.0, %v2197
        %v2199 = vpop.f32.mrb[0].mxu0
        %2200 = vmatprep.mubr.f32.mxu0 0.0
        %2201 = vmatmul.mubr.f32.gmra.mrb[0].mxu0 %v2109
        %v2202 = vpop.f32.mrb[0].mxu0
        %v2203 = vadd.f32 0.0, %v2202
        %v2204 = vpop.f32.mrb[0].mxu0
        %2205 = vmatprep.mubr.f32.mxu0 0.0
        %2206 = vmatmul.mubr.f32.gmra.mrb[0].mxu0 %v2111
        %v2207 = vpop.f32.mrb[0].mxu0
        %v2208 = vadd.f32 0.0, %v2207
        %v2209 = vpop.f32.mrb[0].mxu0
        %2210 = vmatprep.mubr.f32.mxu0 0.0
        %2211 = vmatmul.mubr.f32.gmra.mrb[0].mxu0 %v2113
        %v2212 = vpop.f32.mrb[0].mxu0
        %v2213 = vadd.f32 0.0, %v2212
        %v2214 = vpop.f32.mrb[0].mxu0
        %2215 = vmatprep.mubr.f32.mxu0 0.0
        %2216 = vmatmul.mubr.f32.gmra.mrb[0].mxu0 %v2115
        %v2217 = vpop.f32.mrb[0].mxu0
        %v2218 = vadd.f32 0.0, %v2217
        %v2219 = vpop.f32.mrb[0].mxu0
        %2220 = vmatprep.mubr.f32.mxu0 0.0
        %2221 = vmatmul.mubr.f32.gmra.mrb[0].mxu0 %v2117
        %v2222 = vpop.f32.mrb[0].mxu0
        %v2223 = vadd.f32 0.0, %v2222
        %v2224 = vpop.f32.mrb[0].mxu0
        %2225 = vmatprep.mubr.f32.mxu0 0.0
        %2226 = vmatmul.mubr.f32.gmra.mrb[0].mxu0 %v2119
        %v2227 = vpop.f32.mrb[0].mxu0
        %v2228 = vadd.f32 0.0, %v2227
        %v2229 = vpop.f32.mrb[0].mxu0
        %2230 = vmatprep.mubr.f32.mxu0 0.0
        %2231 = vmatmul.mubr.f32.gmra.mrb[0].mxu0 %v2121
        %v2232 = vpop.f32.mrb[0].mxu0
        %v2233 = vadd.f32 0.0, %v2232
        %v2234 = vpop.f32.mrb[0].mxu0
        %2235 = vmatprep.mubr.f32.mxu0 0.0
        %2236 = vmatmul.mubr.f32.gmra.mrb[0].mxu0 %v2120
        %v2237 = vpop.f32.mrb[0].mxu0
        %v2238 = vadd.f32 0.0, %v2237
        %v2239 = vpop.f32.mrb[0].mxu0
        %2240 = vdwg.mxu0
        %v2241 = vadd.f32 %v2087, %v2198
        %v2242 = vadd.f32 %v2088, %v2203
        %v2243 = vadd.f32 %v2089, %v2208
        %v2244 = vadd.f32 %v2090, %v2213
        %v2245 = vadd.f32 %v2091, %v2218
        %v2246 = vadd.f32 %v2092, %v2223
        %v2247 = vadd.f32 %v2093, %v2228
        %v2248 = vadd.f32 %v2094, %v2233
        %v2249 = vadd.f32 %v2095, %v2238
        %v2250 = vadd.f32 %v2241, %v1473
        %v2251 = vadd.f32 %v2242, %v1473
        %v2252 = vadd.f32 %v2243, %v1473
        %v2253 = vadd.f32 %v2244, %v1473
        %v2254 = vadd.f32 %v2245, %v1473
        %v2255 = vadd.f32 %v2246, %v1473
        %v2256 = vadd.f32 %v2247, %v1473
        %v2257 = vadd.f32 %v2248, %v1473
        %v2258 = vadd.f32 %v2249, %v1473
        %v2259 = vld [vmem:[%s4] sm:$0x1]
        %v2260 = vld [vmem:[%s3] sm:$0xff]
        %v2261 = vld [vmem:[%s3 + $0x8] sm:$0xff]
        %v2262 = vld [vmem:[%s3 + $0x10] sm:$0xff]
        %v2263 = vld [vmem:[%s3 + $0x18] sm:$0xff]
        %v2264 = vld [vmem:[%s3 + $0x20] sm:$0xff]
        %v2265 = vld [vmem:[%s3 + $0x28] sm:$0xff]
        %v2266 = vld [vmem:[%s3 + $0x30] sm:$0xff]
        %v2267 = vld [vmem:[%s3 + $0x38] sm:$0xff]
        %v2268 = vld [vmem:[%s3 + $0x40] sm:$0xff]
        %v2269 = vld [vmem:[%s3 + $0x48] sm:$0xff]
        %v2270 = vld [vmem:[%s3 + $0x50] sm:$0xff]
        %v2271 = vld [vmem:[%s3 + $0x58] sm:$0xff]
        %v2272 = vld [vmem:[%s3 + $0x60] sm:$0xff]
        %v2273 = vld [vmem:[%s3 + $0x68] sm:$0xff]
        %v2274 = vld [vmem:[%s3 + $0x70] sm:$0xff]
        %v2275 = vld [vmem:[%s3 + $0x78] sm:$0xff]
        %2276 = vmatprep.subr.mxu0 0.0
        %2277 = vmatpush1.msra.mxu0 %v2260
        %2278 = vmatprep.subr.mxu0 0.0
        %2279 = vmatpush1.msra.mxu0 %v2261
        %2280 = vmatprep.subr.mxu0 0.0
        %2281 = vmatpush1.msra.mxu0 %v2262
        %2282 = vmatprep.subr.mxu0 0.0
        %2283 = vmatpush1.msra.mxu0 %v2263
        %2284 = vmatprep.subr.mxu0 0.0
        %2285 = vmatpush1.msra.mxu0 %v2264
        %2286 = vmatprep.subr.mxu0 0.0
        %2287 = vmatpush1.msra.mxu0 %v2265
        %2288 = vmatprep.subr.mxu0 0.0
        %2289 = vmatpush1.msra.mxu0 %v2266
        %2290 = vmatprep.subr.mxu0 0.0
        %2291 = vmatpush1.msra.mxu0 %v2267
        %2292 = vmatprep.subr.mxu0 0.0
        %2293 = vmatpush1.msra.mxu0 %v2268
        %2294 = vmatprep.subr.mxu0 0.0
        %2295 = vmatpush1.msra.mxu0 %v2269
        %2296 = vmatprep.subr.mxu0 0.0
        %2297 = vmatpush1.msra.mxu0 %v2270
        %2298 = vmatprep.subr.mxu0 0.0
        %2299 = vmatpush1.msra.mxu0 %v2271
        %2300 = vmatprep.subr.mxu0 0.0
        %2301 = vmatpush1.msra.mxu0 %v2272
        %2302 = vmatprep.subr.mxu0 0.0
        %2303 = vmatpush1.msra.mxu0 %v2273
        %2304 = vmatprep.subr.mxu0 0.0
        %2305 = vmatpush1.msra.mxu0 %v2274
        %2306 = vmatprep.subr.mxu0 0.0
        %2307 = vmatpush1.msra.mxu0 %v2275
        %2308 = vmatprep.subr.mxu0 0.0
        %2309 = vmatpush1.msra.mxu0 0.0
        %2310 = vmatprep.subr.mxu0 0.0
        %2311 = vmatpush1.msra.mxu0 0.0
        %2312 = vmatprep.subr.mxu0 0.0
        %2313 = vmatpush1.msra.mxu0 0.0
        %2314 = vmatprep.subr.mxu0 0.0
        %2315 = vmatpush1.msra.mxu0 0.0
        %2316 = vmatprep.subr.mxu0 0.0
        %2317 = vmatpush1.msra.mxu0 0.0
        %2318 = vmatprep.subr.mxu0 0.0
        %2319 = vmatpush1.msra.mxu0 0.0
        %2320 = vmatprep.subr.mxu0 0.0
        %2321 = vmatpush1.msra.mxu0 0.0
        %2322 = vmatprep.subr.mxu0 0.0
        %2323 = vmatpush1.msra.mxu0 0.0
        %2324 = vmatprep.subr.mxu0 0.0
        %2325 = vmatpush1.msra.mxu0 0.0
        %2326 = vmatprep.subr.mxu0 0.0
        %2327 = vmatpush1.msra.mxu0 0.0
        %2328 = vmatprep.subr.mxu0 0.0
        %2329 = vmatpush1.msra.mxu0 0.0
        %2330 = vmatprep.subr.mxu0 0.0
        %2331 = vmatpush1.msra.mxu0 0.0
        %2332 = vmatprep.subr.mxu0 0.0
        %2333 = vmatpush1.msra.mxu0 0.0
        %2334 = vmatprep.subr.mxu0 0.0
        %2335 = vmatpush1.msra.mxu0 0.0
        %2336 = vmatprep.subr.mxu0 0.0
        %2337 = vmatpush1.msra.mxu0 0.0
        %2338 = vmatprep.subr.mxu0 0.0
        %2339 = vmatpush1.msra.mxu0 0.0
        %2340 = vmatprep.mubr.f32.mxu0 0.0
        %2341 = vmatmul.mubr.f32.gmra.mrb[0].mxu0 %v1475
        %v2342 = vpop.f32.mrb[0].mxu0
        %v2343 = vadd.f32 0.0, %v2342
        %v2344 = vpop.f32.mrb[0].mxu0
        %2345 = vmatprep.mubr.f32.mxu0 0.0
        %2346 = vmatmul.mubr.f32.gmra.mrb[0].mxu0 %v1476
        %v2347 = vpop.f32.mrb[0].mxu0
        %v2348 = vadd.f32 0.0, %v2347
        %v2349 = vpop.f32.mrb[0].mxu0
        %2350 = vmatprep.mubr.f32.mxu0 0.0
        %2351 = vmatmul.mubr.f32.gmra.mrb[0].mxu0 %v1477
        %v2352 = vpop.f32.mrb[0].mxu0
        %v2353 = vadd.f32 0.0, %v2352
        %v2354 = vpop.f32.mrb[0].mxu0
        %2355 = vmatprep.mubr.f32.mxu0 0.0
        %2356 = vmatmul.mubr.f32.gmra.mrb[0].mxu0 %v1478
        %v2357 = vpop.f32.mrb[0].mxu0
        %v2358 = vadd.f32 0.0, %v2357
        %v2359 = vpop.f32.mrb[0].mxu0
        %2360 = vmatprep.mubr.f32.mxu0 0.0
        %2361 = vmatmul.mubr.f32.gmra.mrb[0].mxu0 %v1479
        %v2362 = vpop.f32.mrb[0].mxu0
        %v2363 = vadd.f32 0.0, %v2362
        %v2364 = vpop.f32.mrb[0].mxu0
        %2365 = vmatprep.mubr.f32.mxu0 0.0
        %2366 = vmatmul.mubr.f32.gmra.mrb[0].mxu0 %v1480
        %v2367 = vpop.f32.mrb[0].mxu0
        %v2368 = vadd.f32 0.0, %v2367
        %v2369 = vpop.f32.mrb[0].mxu0
        %2370 = vmatprep.mubr.f32.mxu0 0.0
        %2371 = vmatmul.mubr.f32.gmra.mrb[0].mxu0 %v1481
        %v2372 = vpop.f32.mrb[0].mxu0
        %v2373 = vadd.f32 0.0, %v2372
        %v2374 = vpop.f32.mrb[0].mxu0
        %2375 = vmatprep.mubr.f32.mxu0 0.0
        %2376 = vmatmul.mubr.f32.gmra.mrb[0].mxu0 %v1482
        %v2377 = vpop.f32.mrb[0].mxu0
        %v2378 = vadd.f32 0.0, %v2377
        %v2379 = vpop.f32.mrb[0].mxu0
        %2380 = vmatprep.mubr.f32.mxu0 0.0
        %2381 = vmatmul.mubr.f32.gmra.mrb[0].mxu0 %v1483
        %v2382 = vpop.f32.mrb[0].mxu0
        %v2383 = vadd.f32 0.0, %v2382
        %v2384 = vpop.f32.mrb[0].mxu0
        %2385 = vdwg.mxu0
        %v2387 = vlaneseq
        %v2388 = vshrl.u32 %v2387, 7
        %v2389 = vsub.s32 0, %v2388
        %v2390 = vrot.slane %v2259, %v2389
        %v2392 = vadd.f32 %v2390, %v2343
        %v2393 = vadd.f32 %v2390, %v2348
        %v2394 = vadd.f32 %v2390, %v2353
        %v2395 = vadd.f32 %v2390, %v2358
        %v2396 = vadd.f32 %v2390, %v2363
        %v2397 = vadd.f32 %v2390, %v2368
        %v2398 = vadd.f32 %v2390, %v2373
        %v2399 = vadd.f32 %v2390, %v2378
        %v2400 = vadd.f32 %v2390, %v2383
        %s2401 = scalar_lea.vmem %s3, 128
        %v2402 = vld [vmem:[%s2401] sm:$0xff]
        %v2403 = vld [vmem:[%s2401 + $0x8] sm:$0xff]
        %v2404 = vld [vmem:[%s2401 + $0x10] sm:$0xff]
        %v2405 = vld [vmem:[%s2401 + $0x18] sm:$0xff]
        %v2406 = vld [vmem:[%s2401 + $0x20] sm:$0xff]
        %v2407 = vld [vmem:[%s2401 + $0x28] sm:$0xff]
        %v2408 = vld [vmem:[%s2401 + $0x30] sm:$0xff]
        %v2409 = vld [vmem:[%s2401 + $0x38] sm:$0xff]
        %v2410 = vld [vmem:[%s2401 + $0x40] sm:$0xff]
        %v2411 = vld [vmem:[%s2401 + $0x48] sm:$0xff]
        %v2412 = vld [vmem:[%s2401 + $0x50] sm:$0xff]
        %v2413 = vld [vmem:[%s2401 + $0x58] sm:$0xff]
        %v2414 = vld [vmem:[%s2401 + $0x60] sm:$0xff]
        %v2415 = vld [vmem:[%s2401 + $0x68] sm:$0xff]
        %v2416 = vld [vmem:[%s2401 + $0x70] sm:$0xff]
        %v2417 = vld [vmem:[%s2401 + $0x78] sm:$0xff]
        %2418 = vmatprep.subr.mxu0 0.0
        %2419 = vmatpush1.msra.mxu0 %v2402
        %2420 = vmatprep.subr.mxu0 0.0
        %2421 = vmatpush1.msra.mxu0 %v2403
        %2422 = vmatprep.subr.mxu0 0.0
        %2423 = vmatpush1.msra.mxu0 %v2404
        %2424 = vmatprep.subr.mxu0 0.0
        %2425 = vmatpush1.msra.mxu0 %v2405
        %2426 = vmatprep.subr.mxu0 0.0
        %2427 = vmatpush1.msra.mxu0 %v2406
        %2428 = vmatprep.subr.mxu0 0.0
        %2429 = vmatpush1.msra.mxu0 %v2407
        %2430 = vmatprep.subr.mxu0 0.0
        %2431 = vmatpush1.msra.mxu0 %v2408
        %2432 = vmatprep.subr.mxu0 0.0
        %2433 = vmatpush1.msra.mxu0 %v2409
        %2434 = vmatprep.subr.mxu0 0.0
        %2435 = vmatpush1.msra.mxu0 %v2410
        %2436 = vmatprep.subr.mxu0 0.0
        %2437 = vmatpush1.msra.mxu0 %v2411
        %2438 = vmatprep.subr.mxu0 0.0
        %2439 = vmatpush1.msra.mxu0 %v2412
        %2440 = vmatprep.subr.mxu0 0.0
        %2441 = vmatpush1.msra.mxu0 %v2413
        %2442 = vmatprep.subr.mxu0 0.0
        %2443 = vmatpush1.msra.mxu0 %v2414
        %2444 = vmatprep.subr.mxu0 0.0
        %2445 = vmatpush1.msra.mxu0 %v2415
        %2446 = vmatprep.subr.mxu0 0.0
        %2447 = vmatpush1.msra.mxu0 %v2416
        %2448 = vmatprep.subr.mxu0 0.0
        %2449 = vmatpush1.msra.mxu0 %v2417
        %2450 = vmatprep.subr.mxu0 0.0
        %2451 = vmatpush1.msra.mxu0 0.0
        %2452 = vmatprep.subr.mxu0 0.0
        %2453 = vmatpush1.msra.mxu0 0.0
        %2454 = vmatprep.subr.mxu0 0.0
        %2455 = vmatpush1.msra.mxu0 0.0
        %2456 = vmatprep.subr.mxu0 0.0
        %2457 = vmatpush1.msra.mxu0 0.0
        %2458 = vmatprep.subr.mxu0 0.0
        %2459 = vmatpush1.msra.mxu0 0.0
        %2460 = vmatprep.subr.mxu0 0.0
        %2461 = vmatpush1.msra.mxu0 0.0
        %2462 = vmatprep.subr.mxu0 0.0
        %2463 = vmatpush1.msra.mxu0 0.0
        %2464 = vmatprep.subr.mxu0 0.0
        %2465 = vmatpush1.msra.mxu0 0.0
        %2466 = vmatprep.subr.mxu0 0.0
        %2467 = vmatpush1.msra.mxu0 0.0
        %2468 = vmatprep.subr.mxu0 0.0
        %2469 = vmatpush1.msra.mxu0 0.0
        %2470 = vmatprep.subr.mxu0 0.0
        %2471 = vmatpush1.msra.mxu0 0.0
        %2472 = vmatprep.subr.mxu0 0.0
        %2473 = vmatpush1.msra.mxu0 0.0
        %2474 = vmatprep.subr.mxu0 0.0
        %2475 = vmatpush1.msra.mxu0 0.0
        %2476 = vmatprep.subr.mxu0 0.0
        %2477 = vmatpush1.msra.mxu0 0.0
        %2478 = vmatprep.subr.mxu0 0.0
        %2479 = vmatpush1.msra.mxu0 0.0
        %2480 = vmatprep.subr.mxu0 0.0
        %2481 = vmatpush1.msra.mxu0 0.0
        %2482 = vmatprep.mubr.f32.mxu0 0.0
        %2483 = vmatmul.mubr.f32.gmra.mrb[0].mxu0 %v2250
        %v2484 = vpop.f32.mrb[0].mxu0
        %v2485 = vadd.f32 0.0, %v2484
        %v2486 = vpop.f32.mrb[0].mxu0
        %2487 = vmatprep.mubr.f32.mxu0 0.0
        %2488 = vmatmul.mubr.f32.gmra.mrb[0].mxu0 %v2251
        %v2489 = vpop.f32.mrb[0].mxu0
        %v2490 = vadd.f32 0.0, %v2489
        %v2491 = vpop.f32.mrb[0].mxu0
        %2492 = vmatprep.mubr.f32.mxu0 0.0
        %2493 = vmatmul.mubr.f32.gmra.mrb[0].mxu0 %v2252
        %v2494 = vpop.f32.mrb[0].mxu0
        %v2495 = vadd.f32 0.0, %v2494
        %v2496 = vpop.f32.mrb[0].mxu0
        %2497 = vmatprep.mubr.f32.mxu0 0.0
        %2498 = vmatmul.mubr.f32.gmra.mrb[0].mxu0 %v2253
        %v2499 = vpop.f32.mrb[0].mxu0
        %v2500 = vadd.f32 0.0, %v2499
        %v2501 = vpop.f32.mrb[0].mxu0
        %2502 = vmatprep.mubr.f32.mxu0 0.0
        %2503 = vmatmul.mubr.f32.gmra.mrb[0].mxu0 %v2254
        %v2504 = vpop.f32.mrb[0].mxu0
        %v2505 = vadd.f32 0.0, %v2504
        %v2506 = vpop.f32.mrb[0].mxu0
        %2507 = vmatprep.mubr.f32.mxu0 0.0
        %2508 = vmatmul.mubr.f32.gmra.mrb[0].mxu0 %v2255
        %v2509 = vpop.f32.mrb[0].mxu0
        %v2510 = vadd.f32 0.0, %v2509
        %v2511 = vpop.f32.mrb[0].mxu0
        %2512 = vmatprep.mubr.f32.mxu0 0.0
        %2513 = vmatmul.mubr.f32.gmra.mrb[0].mxu0 %v2256
        %v2514 = vpop.f32.mrb[0].mxu0
        %v2515 = vadd.f32 0.0, %v2514
        %v2516 = vpop.f32.mrb[0].mxu0
        %2517 = vmatprep.mubr.f32.mxu0 0.0
        %2518 = vmatmul.mubr.f32.gmra.mrb[0].mxu0 %v2257
        %v2519 = vpop.f32.mrb[0].mxu0
        %v2520 = vadd.f32 0.0, %v2519
        %v2521 = vpop.f32.mrb[0].mxu0
        %2522 = vmatprep.mubr.f32.mxu0 0.0
        %2523 = vmatmul.mubr.f32.gmra.mrb[0].mxu0 %v2258
        %v2524 = vpop.f32.mrb[0].mxu0
        %v2525 = vadd.f32 0.0, %v2524
        %v2526 = vpop.f32.mrb[0].mxu0
        %2527 = vdwg.mxu0
        %v2528 = vadd.f32 %v2392, %v2485
        %v2529 = vadd.f32 %v2393, %v2490
        %v2530 = vadd.f32 %v2394, %v2495
        %v2531 = vadd.f32 %v2395, %v2500
        %v2532 = vadd.f32 %v2396, %v2505
        %v2533 = vadd.f32 %v2397, %v2510
        %v2534 = vadd.f32 %v2398, %v2515
        %v2535 = vadd.f32 %v2399, %v2520
        %v2536 = vadd.f32 %v2400, %v2525
        %s2537 = scalar_lea.vmem %s3, 256
        %v2538 = vld [vmem:[%s2537] sm:$0xff]
        %v2539 = vld [vmem:[%s2537 + $0x8] sm:$0xff]
        %v2540 = vld [vmem:[%s2537 + $0x10] sm:$0xff]
        %v2541 = vld [vmem:[%s2537 + $0x18] sm:$0xff]
        %v2542 = vld [vmem:[%s2537 + $0x20] sm:$0xff]
        %v2543 = vld [vmem:[%s2537 + $0x28] sm:$0xff]
        %v2544 = vld [vmem:[%s2537 + $0x30] sm:$0xff]
        %v2545 = vld [vmem:[%s2537 + $0x38] sm:$0xff]
        %v2546 = vld [vmem:[%s2537 + $0x40] sm:$0xff]
        %v2547 = vld [vmem:[%s2537 + $0x48] sm:$0xff]
        %v2548 = vld [vmem:[%s2537 + $0x50] sm:$0xff]
        %v2549 = vld [vmem:[%s2537 + $0x58] sm:$0xff]
        %v2550 = vld [vmem:[%s2537 + $0x60] sm:$0xff]
        %v2551 = vld [vmem:[%s2537 + $0x68] sm:$0xff]
        %v2552 = vld [vmem:[%s2537 + $0x70] sm:$0xff]
        %v2553 = vld [vmem:[%s2537 + $0x78] sm:$0xff]
        %v2563 = vrot.slane %v1475, 1
        %v2564 = vrot.slane %v1476, 1
        %v2565 = vsel %vm1151, %v2563, %v2564
        %v2566 = vrot.slane %v1477, 1
        %v2567 = vsel %vm1151, %v2564, %v2566
        %v2568 = vrot.slane %v1478, 1
        %v2569 = vsel %vm1151, %v2566, %v2568
        %v2570 = vrot.slane %v1479, 1
        %v2571 = vsel %vm1151, %v2568, %v2570
        %v2572 = vrot.slane %v1480, 1
        %v2573 = vsel %vm1151, %v2570, %v2572
        %v2574 = vrot.slane %v1481, 1
        %v2575 = vsel %vm1151, %v2572, %v2574
        %v2576 = vrot.slane %v1482, 1
        %v2577 = vsel %vm1151, %v2574, %v2576
        %v2578 = vrot.slane %v1483, 1
        %v2579 = vsel %vm1151, %v2576, %v2578
        %2589 = vmatprep.subr.mxu0 0.0
        %2590 = vmatpush1.msra.mxu0 %v2538
        %2591 = vmatprep.subr.mxu0 0.0
        %2592 = vmatpush1.msra.mxu0 %v2539
        %2593 = vmatprep.subr.mxu0 0.0
        %2594 = vmatpush1.msra.mxu0 %v2540
        %2595 = vmatprep.subr.mxu0 0.0
        %2596 = vmatpush1.msra.mxu0 %v2541
        %2597 = vmatprep.subr.mxu0 0.0
        %2598 = vmatpush1.msra.mxu0 %v2542
        %2599 = vmatprep.subr.mxu0 0.0
        %2600 = vmatpush1.msra.mxu0 %v2543
        %2601 = vmatprep.subr.mxu0 0.0
        %2602 = vmatpush1.msra.mxu0 %v2544
        %2603 = vmatprep.subr.mxu0 0.0
        %2604 = vmatpush1.msra.mxu0 %v2545
        %2605 = vmatprep.subr.mxu0 0.0
        %2606 = vmatpush1.msra.mxu0 %v2546
        %2607 = vmatprep.subr.mxu0 0.0
        %2608 = vmatpush1.msra.mxu0 %v2547
        %2609 = vmatprep.subr.mxu0 0.0
        %2610 = vmatpush1.msra.mxu0 %v2548
        %2611 = vmatprep.subr.mxu0 0.0
        %2612 = vmatpush1.msra.mxu0 %v2549
        %2613 = vmatprep.subr.mxu0 0.0
        %2614 = vmatpush1.msra.mxu0 %v2550
        %2615 = vmatprep.subr.mxu0 0.0
        %2616 = vmatpush1.msra.mxu0 %v2551
        %2617 = vmatprep.subr.mxu0 0.0
        %2618 = vmatpush1.msra.mxu0 %v2552
        %2619 = vmatprep.subr.mxu0 0.0
        %2620 = vmatpush1.msra.mxu0 %v2553
        %2621 = vmatprep.subr.mxu0 0.0
        %2622 = vmatpush1.msra.mxu0 0.0
        %2623 = vmatprep.subr.mxu0 0.0
        %2624 = vmatpush1.msra.mxu0 0.0
        %2625 = vmatprep.subr.mxu0 0.0
        %2626 = vmatpush1.msra.mxu0 0.0
        %2627 = vmatprep.subr.mxu0 0.0
        %2628 = vmatpush1.msra.mxu0 0.0
        %2629 = vmatprep.subr.mxu0 0.0
        %2630 = vmatpush1.msra.mxu0 0.0
        %2631 = vmatprep.subr.mxu0 0.0
        %2632 = vmatpush1.msra.mxu0 0.0
        %2633 = vmatprep.subr.mxu0 0.0
        %2634 = vmatpush1.msra.mxu0 0.0
        %2635 = vmatprep.subr.mxu0 0.0
        %2636 = vmatpush1.msra.mxu0 0.0
        %2637 = vmatprep.subr.mxu0 0.0
        %2638 = vmatpush1.msra.mxu0 0.0
        %2639 = vmatprep.subr.mxu0 0.0
        %2640 = vmatpush1.msra.mxu0 0.0
        %2641 = vmatprep.subr.mxu0 0.0
        %2642 = vmatpush1.msra.mxu0 0.0
        %2643 = vmatprep.subr.mxu0 0.0
        %2644 = vmatpush1.msra.mxu0 0.0
        %2645 = vmatprep.subr.mxu0 0.0
        %2646 = vmatpush1.msra.mxu0 0.0
        %2647 = vmatprep.subr.mxu0 0.0
        %2648 = vmatpush1.msra.mxu0 0.0
        %2649 = vmatprep.subr.mxu0 0.0
        %2650 = vmatpush1.msra.mxu0 0.0
        %2651 = vmatprep.subr.mxu0 0.0
        %2652 = vmatpush1.msra.mxu0 0.0
        %2653 = vmatprep.mubr.f32.mxu0 0.0
        %2654 = vmatmul.mubr.f32.gmra.mrb[0].mxu0 %v2565
        %v2655 = vpop.f32.mrb[0].mxu0
        %v2656 = vadd.f32 0.0, %v2655
        %v2657 = vpop.f32.mrb[0].mxu0
        %2658 = vmatprep.mubr.f32.mxu0 0.0
        %2659 = vmatmul.mubr.f32.gmra.mrb[0].mxu0 %v2567
        %v2660 = vpop.f32.mrb[0].mxu0
        %v2661 = vadd.f32 0.0, %v2660
        %v2662 = vpop.f32.mrb[0].mxu0
        %2663 = vmatprep.mubr.f32.mxu0 0.0
        %2664 = vmatmul.mubr.f32.gmra.mrb[0].mxu0 %v2569
        %v2665 = vpop.f32.mrb[0].mxu0
        %v2666 = vadd.f32 0.0, %v2665
        %v2667 = vpop.f32.mrb[0].mxu0
        %2668 = vmatprep.mubr.f32.mxu0 0.0
        %2669 = vmatmul.mubr.f32.gmra.mrb[0].mxu0 %v2571
        %v2670 = vpop.f32.mrb[0].mxu0
        %v2671 = vadd.f32 0.0, %v2670
        %v2672 = vpop.f32.mrb[0].mxu0
        %2673 = vmatprep.mubr.f32.mxu0 0.0
        %2674 = vmatmul.mubr.f32.gmra.mrb[0].mxu0 %v2573
        %v2675 = vpop.f32.mrb[0].mxu0
        %v2676 = vadd.f32 0.0, %v2675
        %v2677 = vpop.f32.mrb[0].mxu0
        %2678 = vmatprep.mubr.f32.mxu0 0.0
        %2679 = vmatmul.mubr.f32.gmra.mrb[0].mxu0 %v2575
        %v2680 = vpop.f32.mrb[0].mxu0
        %v2681 = vadd.f32 0.0, %v2680
        %v2682 = vpop.f32.mrb[0].mxu0
        %2683 = vmatprep.mubr.f32.mxu0 0.0
        %2684 = vmatmul.mubr.f32.gmra.mrb[0].mxu0 %v2577
        %v2685 = vpop.f32.mrb[0].mxu0
        %v2686 = vadd.f32 0.0, %v2685
        %v2687 = vpop.f32.mrb[0].mxu0
        %2688 = vmatprep.mubr.f32.mxu0 0.0
        %2689 = vmatmul.mubr.f32.gmra.mrb[0].mxu0 %v2579
        %v2690 = vpop.f32.mrb[0].mxu0
        %v2691 = vadd.f32 0.0, %v2690
        %v2692 = vpop.f32.mrb[0].mxu0
        %2693 = vmatprep.mubr.f32.mxu0 0.0
        %2694 = vmatmul.mubr.f32.gmra.mrb[0].mxu0 %v2578
        %v2695 = vpop.f32.mrb[0].mxu0
        %v2696 = vadd.f32 0.0, %v2695
        %v2697 = vpop.f32.mrb[0].mxu0
        %2698 = vdwg.mxu0
        %v2699 = vadd.f32 %v2528, %v2656
        %v2700 = vadd.f32 %v2529, %v2661
        %v2701 = vadd.f32 %v2530, %v2666
        %v2702 = vadd.f32 %v2531, %v2671
        %v2703 = vadd.f32 %v2532, %v2676
        %v2704 = vadd.f32 %v2533, %v2681
        %v2705 = vadd.f32 %v2534, %v2686
        %v2706 = vadd.f32 %v2535, %v2691
        %v2707 = vadd.f32 %v2536, %v2696
        %s2708 = scalar_lea.vmem %s3, 384
        %v2709 = vld [vmem:[%s2708] sm:$0xff]
        %v2710 = vld [vmem:[%s2708 + $0x8] sm:$0xff]
        %v2711 = vld [vmem:[%s2708 + $0x10] sm:$0xff]
        %v2712 = vld [vmem:[%s2708 + $0x18] sm:$0xff]
        %v2713 = vld [vmem:[%s2708 + $0x20] sm:$0xff]
        %v2714 = vld [vmem:[%s2708 + $0x28] sm:$0xff]
        %v2715 = vld [vmem:[%s2708 + $0x30] sm:$0xff]
        %v2716 = vld [vmem:[%s2708 + $0x38] sm:$0xff]
        %v2717 = vld [vmem:[%s2708 + $0x40] sm:$0xff]
        %v2718 = vld [vmem:[%s2708 + $0x48] sm:$0xff]
        %v2719 = vld [vmem:[%s2708 + $0x50] sm:$0xff]
        %v2720 = vld [vmem:[%s2708 + $0x58] sm:$0xff]
        %v2721 = vld [vmem:[%s2708 + $0x60] sm:$0xff]
        %v2722 = vld [vmem:[%s2708 + $0x68] sm:$0xff]
        %v2723 = vld [vmem:[%s2708 + $0x70] sm:$0xff]
        %v2724 = vld [vmem:[%s2708 + $0x78] sm:$0xff]
        %v2734 = vrot.slane %v2250, 1
        %v2735 = vrot.slane %v2251, 1
        %v2736 = vsel %vm1151, %v2734, %v2735
        %v2737 = vrot.slane %v2252, 1
        %v2738 = vsel %vm1151, %v2735, %v2737
        %v2739 = vrot.slane %v2253, 1
        %v2740 = vsel %vm1151, %v2737, %v2739
        %v2741 = vrot.slane %v2254, 1
        %v2742 = vsel %vm1151, %v2739, %v2741
        %v2743 = vrot.slane %v2255, 1
        %v2744 = vsel %vm1151, %v2741, %v2743
        %v2745 = vrot.slane %v2256, 1
        %v2746 = vsel %vm1151, %v2743, %v2745
        %v2747 = vrot.slane %v2257, 1
        %v2748 = vsel %vm1151, %v2745, %v2747
        %v2749 = vrot.slane %v2258, 1
        %v2750 = vsel %vm1151, %v2747, %v2749
        %2760 = vmatprep.subr.mxu0 0.0
        %2761 = vmatpush1.msra.mxu0 %v2709
        %2762 = vmatprep.subr.mxu0 0.0
        %2763 = vmatpush1.msra.mxu0 %v2710
        %2764 = vmatprep.subr.mxu0 0.0
        %2765 = vmatpush1.msra.mxu0 %v2711
        %2766 = vmatprep.subr.mxu0 0.0
        %2767 = vmatpush1.msra.mxu0 %v2712
        %2768 = vmatprep.subr.mxu0 0.0
        %2769 = vmatpush1.msra.mxu0 %v2713
        %2770 = vmatprep.subr.mxu0 0.0
        %2771 = vmatpush1.msra.mxu0 %v2714
        %2772 = vmatprep.subr.mxu0 0.0
        %2773 = vmatpush1.msra.mxu0 %v2715
        %2774 = vmatprep.subr.mxu0 0.0
        %2775 = vmatpush1.msra.mxu0 %v2716
        %2776 = vmatprep.subr.mxu0 0.0
        %2777 = vmatpush1.msra.mxu0 %v2717
        %2778 = vmatprep.subr.mxu0 0.0
        %2779 = vmatpush1.msra.mxu0 %v2718
        %2780 = vmatprep.subr.mxu0 0.0
        %2781 = vmatpush1.msra.mxu0 %v2719
        %2782 = vmatprep.subr.mxu0 0.0
        %2783 = vmatpush1.msra.mxu0 %v2720
        %2784 = vmatprep.subr.mxu0 0.0
        %2785 = vmatpush1.msra.mxu0 %v2721
        %2786 = vmatprep.subr.mxu0 0.0
        %2787 = vmatpush1.msra.mxu0 %v2722
        %2788 = vmatprep.subr.mxu0 0.0
        %2789 = vmatpush1.msra.mxu0 %v2723
        %2790 = vmatprep.subr.mxu0 0.0
        %2791 = vmatpush1.msra.mxu0 %v2724
        %2792 = vmatprep.subr.mxu0 0.0
        %2793 = vmatpush1.msra.mxu0 0.0
        %2794 = vmatprep.subr.mxu0 0.0
        %2795 = vmatpush1.msra.mxu0 0.0
        %2796 = vmatprep.subr.mxu0 0.0
        %2797 = vmatpush1.msra.mxu0 0.0
        %2798 = vmatprep.subr.mxu0 0.0
        %2799 = vmatpush1.msra.mxu0 0.0
        %2800 = vmatprep.subr.mxu0 0.0
        %2801 = vmatpush1.msra.mxu0 0.0
        %2802 = vmatprep.subr.mxu0 0.0
        %2803 = vmatpush1.msra.mxu0 0.0
        %2804 = vmatprep.subr.mxu0 0.0
        %2805 = vmatpush1.msra.mxu0 0.0
        %2806 = vmatprep.subr.mxu0 0.0
        %2807 = vmatpush1.msra.mxu0 0.0
        %2808 = vmatprep.subr.mxu0 0.0
        %2809 = vmatpush1.msra.mxu0 0.0
        %2810 = vmatprep.subr.mxu0 0.0
        %2811 = vmatpush1.msra.mxu0 0.0
        %2812 = vmatprep.subr.mxu0 0.0
        %2813 = vmatpush1.msra.mxu0 0.0
        %2814 = vmatprep.subr.mxu0 0.0
        %2815 = vmatpush1.msra.mxu0 0.0
        %2816 = vmatprep.subr.mxu0 0.0
        %2817 = vmatpush1.msra.mxu0 0.0
        %2818 = vmatprep.subr.mxu0 0.0
        %2819 = vmatpush1.msra.mxu0 0.0
        %2820 = vmatprep.subr.mxu0 0.0
        %2821 = vmatpush1.msra.mxu0 0.0
        %2822 = vmatprep.subr.mxu0 0.0
        %2823 = vmatpush1.msra.mxu0 0.0
        %2824 = vmatprep.mubr.f32.mxu0 0.0
        %2825 = vmatmul.mubr.f32.gmra.mrb[0].mxu0 %v2736
        %v2826 = vpop.f32.mrb[0].mxu0
        %v2827 = vadd.f32 0.0, %v2826
        %v2828 = vpop.f32.mrb[0].mxu0
        %2829 = vmatprep.mubr.f32.mxu0 0.0
        %2830 = vmatmul.mubr.f32.gmra.mrb[0].mxu0 %v2738
        %v2831 = vpop.f32.mrb[0].mxu0
        %v2832 = vadd.f32 0.0, %v2831
        %v2833 = vpop.f32.mrb[0].mxu0
        %2834 = vmatprep.mubr.f32.mxu0 0.0
        %2835 = vmatmul.mubr.f32.gmra.mrb[0].mxu0 %v2740
        %v2836 = vpop.f32.mrb[0].mxu0
        %v2837 = vadd.f32 0.0, %v2836
        %v2838 = vpop.f32.mrb[0].mxu0
        %2839 = vmatprep.mubr.f32.mxu0 0.0
        %2840 = vmatmul.mubr.f32.gmra.mrb[0].mxu0 %v2742
        %v2841 = vpop.f32.mrb[0].mxu0
        %v2842 = vadd.f32 0.0, %v2841
        %v2843 = vpop.f32.mrb[0].mxu0
        %2844 = vmatprep.mubr.f32.mxu0 0.0
        %2845 = vmatmul.mubr.f32.gmra.mrb[0].mxu0 %v2744
        %v2846 = vpop.f32.mrb[0].mxu0
        %v2847 = vadd.f32 0.0, %v2846
        %v2848 = vpop.f32.mrb[0].mxu0
        %2849 = vmatprep.mubr.f32.mxu0 0.0
        %2850 = vmatmul.mubr.f32.gmra.mrb[0].mxu0 %v2746
        %v2851 = vpop.f32.mrb[0].mxu0
        %v2852 = vadd.f32 0.0, %v2851
        %v2853 = vpop.f32.mrb[0].mxu0
        %2854 = vmatprep.mubr.f32.mxu0 0.0
        %2855 = vmatmul.mubr.f32.gmra.mrb[0].mxu0 %v2748
        %v2856 = vpop.f32.mrb[0].mxu0
        %v2857 = vadd.f32 0.0, %v2856
        %v2858 = vpop.f32.mrb[0].mxu0
        %2859 = vmatprep.mubr.f32.mxu0 0.0
        %2860 = vmatmul.mubr.f32.gmra.mrb[0].mxu0 %v2750
        %v2861 = vpop.f32.mrb[0].mxu0
        %v2862 = vadd.f32 0.0, %v2861
        %v2863 = vpop.f32.mrb[0].mxu0
        %2864 = vmatprep.mubr.f32.mxu0 0.0
        %2865 = vmatmul.mubr.f32.gmra.mrb[0].mxu0 %v2749
        %v2866 = vpop.f32.mrb[0].mxu0
        %v2867 = vadd.f32 0.0, %v2866
        %v2868 = vpop.f32.mrb[0].mxu0
        %2869 = vdwg.mxu0
        %v2870 = vadd.f32 %v2699, %v2827
        %v2871 = vadd.f32 %v2700, %v2832
        %v2872 = vadd.f32 %v2701, %v2837
        %v2873 = vadd.f32 %v2702, %v2842
        %v2874 = vadd.f32 %v2703, %v2847
        %v2875 = vadd.f32 %v2704, %v2852
        %v2876 = vadd.f32 %v2705, %v2857
        %v2877 = vadd.f32 %v2706, %v2862
        %v2878 = vadd.f32 %v2707, %v2867
        %s2879 = scalar_lea.vmem %s3, 512
        %v2880 = vld [vmem:[%s2879] sm:$0xff]
        %v2881 = vld [vmem:[%s2879 + $0x8] sm:$0xff]
        %v2882 = vld [vmem:[%s2879 + $0x10] sm:$0xff]
        %v2883 = vld [vmem:[%s2879 + $0x18] sm:$0xff]
        %v2884 = vld [vmem:[%s2879 + $0x20] sm:$0xff]
        %v2885 = vld [vmem:[%s2879 + $0x28] sm:$0xff]
        %v2886 = vld [vmem:[%s2879 + $0x30] sm:$0xff]
        %v2887 = vld [vmem:[%s2879 + $0x38] sm:$0xff]
        %v2888 = vld [vmem:[%s2879 + $0x40] sm:$0xff]
        %v2889 = vld [vmem:[%s2879 + $0x48] sm:$0xff]
        %v2890 = vld [vmem:[%s2879 + $0x50] sm:$0xff]
        %v2891 = vld [vmem:[%s2879 + $0x58] sm:$0xff]
        %v2892 = vld [vmem:[%s2879 + $0x60] sm:$0xff]
        %v2893 = vld [vmem:[%s2879 + $0x68] sm:$0xff]
        %v2894 = vld [vmem:[%s2879 + $0x70] sm:$0xff]
        %v2895 = vld [vmem:[%s2879 + $0x78] sm:$0xff]
        %vm2896 = vcmask 1045504
        %v2897 = vrot.slane %v1475, 2
        %v2898 = vrot.slane %v1476, 2
        %v2899 = vsel %vm2896, %v2897, %v2898
        %v2900 = vrot.slane %v1477, 2
        %v2901 = vsel %vm2896, %v2898, %v2900
        %v2902 = vrot.slane %v1478, 2
        %v2903 = vsel %vm2896, %v2900, %v2902
        %v2904 = vrot.slane %v1479, 2
        %v2905 = vsel %vm2896, %v2902, %v2904
        %v2906 = vrot.slane %v1480, 2
        %v2907 = vsel %vm2896, %v2904, %v2906
        %v2908 = vrot.slane %v1481, 2
        %v2909 = vsel %vm2896, %v2906, %v2908
        %v2910 = vrot.slane %v1482, 2
        %v2911 = vsel %vm2896, %v2908, %v2910
        %v2912 = vrot.slane %v1483, 2
        %v2913 = vsel %vm2896, %v2910, %v2912
        %2923 = vmatprep.subr.mxu0 0.0
        %2924 = vmatpush1.msra.mxu0 %v2880
        %2925 = vmatprep.subr.mxu0 0.0
        %2926 = vmatpush1.msra.mxu0 %v2881
        %2927 = vmatprep.subr.mxu0 0.0
        %2928 = vmatpush1.msra.mxu0 %v2882
        %2929 = vmatprep.subr.mxu0 0.0
        %2930 = vmatpush1.msra.mxu0 %v2883
        %2931 = vmatprep.subr.mxu0 0.0
        %2932 = vmatpush1.msra.mxu0 %v2884
        %2933 = vmatprep.subr.mxu0 0.0
        %2934 = vmatpush1.msra.mxu0 %v2885
        %2935 = vmatprep.subr.mxu0 0.0
        %2936 = vmatpush1.msra.mxu0 %v2886
        %2937 = vmatprep.subr.mxu0 0.0
        %2938 = vmatpush1.msra.mxu0 %v2887
        %2939 = vmatprep.subr.mxu0 0.0
        %2940 = vmatpush1.msra.mxu0 %v2888
        %2941 = vmatprep.subr.mxu0 0.0
        %2942 = vmatpush1.msra.mxu0 %v2889
        %2943 = vmatprep.subr.mxu0 0.0
        %2944 = vmatpush1.msra.mxu0 %v2890
        %2945 = vmatprep.subr.mxu0 0.0
        %2946 = vmatpush1.msra.mxu0 %v2891
        %2947 = vmatprep.subr.mxu0 0.0
        %2948 = vmatpush1.msra.mxu0 %v2892
        %2949 = vmatprep.subr.mxu0 0.0
        %2950 = vmatpush1.msra.mxu0 %v2893
        %2951 = vmatprep.subr.mxu0 0.0
        %2952 = vmatpush1.msra.mxu0 %v2894
        %2953 = vmatprep.subr.mxu0 0.0
        %2954 = vmatpush1.msra.mxu0 %v2895
        %2955 = vmatprep.subr.mxu0 0.0
        %2956 = vmatpush1.msra.mxu0 0.0
        %2957 = vmatprep.subr.mxu0 0.0
        %2958 = vmatpush1.msra.mxu0 0.0
        %2959 = vmatprep.subr.mxu0 0.0
        %2960 = vmatpush1.msra.mxu0 0.0
        %2961 = vmatprep.subr.mxu0 0.0
        %2962 = vmatpush1.msra.mxu0 0.0
        %2963 = vmatprep.subr.mxu0 0.0
        %2964 = vmatpush1.msra.mxu0 0.0
        %2965 = vmatprep.subr.mxu0 0.0
        %2966 = vmatpush1.msra.mxu0 0.0
        %2967 = vmatprep.subr.mxu0 0.0
        %2968 = vmatpush1.msra.mxu0 0.0
        %2969 = vmatprep.subr.mxu0 0.0
        %2970 = vmatpush1.msra.mxu0 0.0
        %2971 = vmatprep.subr.mxu0 0.0
        %2972 = vmatpush1.msra.mxu0 0.0
        %2973 = vmatprep.subr.mxu0 0.0
        %2974 = vmatpush1.msra.mxu0 0.0
        %2975 = vmatprep.subr.mxu0 0.0
        %2976 = vmatpush1.msra.mxu0 0.0
        %2977 = vmatprep.subr.mxu0 0.0
        %2978 = vmatpush1.msra.mxu0 0.0
        %2979 = vmatprep.subr.mxu0 0.0
        %2980 = vmatpush1.msra.mxu0 0.0
        %2981 = vmatprep.subr.mxu0 0.0
        %2982 = vmatpush1.msra.mxu0 0.0
        %2983 = vmatprep.subr.mxu0 0.0
        %2984 = vmatpush1.msra.mxu0 0.0
        %2985 = vmatprep.subr.mxu0 0.0
        %2986 = vmatpush1.msra.mxu0 0.0
        %2987 = vmatprep.mubr.f32.mxu0 0.0
        %2988 = vmatmul.mubr.f32.gmra.mrb[0].mxu0 %v2899
        %v2989 = vpop.f32.mrb[0].mxu0
        %v2990 = vadd.f32 0.0, %v2989
        %v2991 = vpop.f32.mrb[0].mxu0
        %2992 = vmatprep.mubr.f32.mxu0 0.0
        %2993 = vmatmul.mubr.f32.gmra.mrb[0].mxu0 %v2901
        %v2994 = vpop.f32.mrb[0].mxu0
        %v2995 = vadd.f32 0.0, %v2994
        %v2996 = vpop.f32.mrb[0].mxu0
        %2997 = vmatprep.mubr.f32.mxu0 0.0
        %2998 = vmatmul.mubr.f32.gmra.mrb[0].mxu0 %v2903
        %v2999 = vpop.f32.mrb[0].mxu0
        %v3000 = vadd.f32 0.0, %v2999
        %v3001 = vpop.f32.mrb[0].mxu0
        %3002 = vmatprep.mubr.f32.mxu0 0.0
        %3003 = vmatmul.mubr.f32.gmra.mrb[0].mxu0 %v2905
        %v3004 = vpop.f32.mrb[0].mxu0
        %v3005 = vadd.f32 0.0, %v3004
        %v3006 = vpop.f32.mrb[0].mxu0
        %3007 = vmatprep.mubr.f32.mxu0 0.0
        %3008 = vmatmul.mubr.f32.gmra.mrb[0].mxu0 %v2907
        %v3009 = vpop.f32.mrb[0].mxu0
        %v3010 = vadd.f32 0.0, %v3009
        %v3011 = vpop.f32.mrb[0].mxu0
        %3012 = vmatprep.mubr.f32.mxu0 0.0
        %3013 = vmatmul.mubr.f32.gmra.mrb[0].mxu0 %v2909
        %v3014 = vpop.f32.mrb[0].mxu0
        %v3015 = vadd.f32 0.0, %v3014
        %v3016 = vpop.f32.mrb[0].mxu0
        %3017 = vmatprep.mubr.f32.mxu0 0.0
        %3018 = vmatmul.mubr.f32.gmra.mrb[0].mxu0 %v2911
        %v3019 = vpop.f32.mrb[0].mxu0
        %v3020 = vadd.f32 0.0, %v3019
        %v3021 = vpop.f32.mrb[0].mxu0
        %3022 = vmatprep.mubr.f32.mxu0 0.0
        %3023 = vmatmul.mubr.f32.gmra.mrb[0].mxu0 %v2913
        %v3024 = vpop.f32.mrb[0].mxu0
        %v3025 = vadd.f32 0.0, %v3024
        %v3026 = vpop.f32.mrb[0].mxu0
        %3027 = vmatprep.mubr.f32.mxu0 0.0
        %3028 = vmatmul.mubr.f32.gmra.mrb[0].mxu0 %v2912
        %v3029 = vpop.f32.mrb[0].mxu0
        %v3030 = vadd.f32 0.0, %v3029
        %v3031 = vpop.f32.mrb[0].mxu0
        %3032 = vdwg.mxu0
        %v3033 = vadd.f32 %v2870, %v2990
        %v3034 = vadd.f32 %v2871, %v2995
        %v3035 = vadd.f32 %v2872, %v3000
        %v3036 = vadd.f32 %v2873, %v3005
        %v3037 = vadd.f32 %v2874, %v3010
        %v3038 = vadd.f32 %v2875, %v3015
        %v3039 = vadd.f32 %v2876, %v3020
        %v3040 = vadd.f32 %v2877, %v3025
        %v3041 = vadd.f32 %v2878, %v3030
        %s3042 = scalar_lea.vmem %s3, 640
        %v3043 = vld [vmem:[%s3042] sm:$0xff]
        %v3044 = vld [vmem:[%s3042 + $0x8] sm:$0xff]
        %v3045 = vld [vmem:[%s3042 + $0x10] sm:$0xff]
        %v3046 = vld [vmem:[%s3042 + $0x18] sm:$0xff]
        %v3047 = vld [vmem:[%s3042 + $0x20] sm:$0xff]
        %v3048 = vld [vmem:[%s3042 + $0x28] sm:$0xff]
        %v3049 = vld [vmem:[%s3042 + $0x30] sm:$0xff]
        %v3050 = vld [vmem:[%s3042 + $0x38] sm:$0xff]
        %v3051 = vld [vmem:[%s3042 + $0x40] sm:$0xff]
        %v3052 = vld [vmem:[%s3042 + $0x48] sm:$0xff]
        %v3053 = vld [vmem:[%s3042 + $0x50] sm:$0xff]
        %v3054 = vld [vmem:[%s3042 + $0x58] sm:$0xff]
        %v3055 = vld [vmem:[%s3042 + $0x60] sm:$0xff]
        %v3056 = vld [vmem:[%s3042 + $0x68] sm:$0xff]
        %v3057 = vld [vmem:[%s3042 + $0x70] sm:$0xff]
        %v3058 = vld [vmem:[%s3042 + $0x78] sm:$0xff]
        %v3059 = vrot.slane %v2250, 2
        %v3060 = vrot.slane %v2251, 2
        %v3061 = vsel %vm2896, %v3059, %v3060
        %v3062 = vrot.slane %v2252, 2
        %v3063 = vsel %vm2896, %v3060, %v3062
        %v3064 = vrot.slane %v2253, 2
        %v3065 = vsel %vm2896, %v3062, %v3064
        %v3066 = vrot.slane %v2254, 2
        %v3067 = vsel %vm2896, %v3064, %v3066
        %v3068 = vrot.slane %v2255, 2
        %v3069 = vsel %vm2896, %v3066, %v3068
        %v3070 = vrot.slane %v2256, 2
        %v3071 = vsel %vm2896, %v3068, %v3070
        %v3072 = vrot.slane %v2257, 2
        %v3073 = vsel %vm2896, %v3070, %v3072
        %v3074 = vrot.slane %v2258, 2
        %v3075 = vsel %vm2896, %v3072, %v3074
        %3085 = vmatprep.subr.mxu0 0.0
        %3086 = vmatpush1.msra.mxu0 %v3043
        %3087 = vmatprep.subr.mxu0 0.0
        %3088 = vmatpush1.msra.mxu0 %v3044
        %3089 = vmatprep.subr.mxu0 0.0
        %3090 = vmatpush1.msra.mxu0 %v3045
        %3091 = vmatprep.subr.mxu0 0.0
        %3092 = vmatpush1.msra.mxu0 %v3046
        %3093 = vmatprep.subr.mxu0 0.0
        %3094 = vmatpush1.msra.mxu0 %v3047
        %3095 = vmatprep.subr.mxu0 0.0
        %3096 = vmatpush1.msra.mxu0 %v3048
        %3097 = vmatprep.subr.mxu0 0.0
        %3098 = vmatpush1.msra.mxu0 %v3049
        %3099 = vmatprep.subr.mxu0 0.0
        %3100 = vmatpush1.msra.mxu0 %v3050
        %3101 = vmatprep.subr.mxu0 0.0
        %3102 = vmatpush1.msra.mxu0 %v3051
        %3103 = vmatprep.subr.mxu0 0.0
        %3104 = vmatpush1.msra.mxu0 %v3052
        %3105 = vmatprep.subr.mxu0 0.0
        %3106 = vmatpush1.msra.mxu0 %v3053
        %3107 = vmatprep.subr.mxu0 0.0
        %3108 = vmatpush1.msra.mxu0 %v3054
        %3109 = vmatprep.subr.mxu0 0.0
        %3110 = vmatpush1.msra.mxu0 %v3055
        %3111 = vmatprep.subr.mxu0 0.0
        %3112 = vmatpush1.msra.mxu0 %v3056
        %3113 = vmatprep.subr.mxu0 0.0
        %3114 = vmatpush1.msra.mxu0 %v3057
        %3115 = vmatprep.subr.mxu0 0.0
        %3116 = vmatpush1.msra.mxu0 %v3058
        %3117 = vmatprep.subr.mxu0 0.0
        %3118 = vmatpush1.msra.mxu0 0.0
        %3119 = vmatprep.subr.mxu0 0.0
        %3120 = vmatpush1.msra.mxu0 0.0
        %3121 = vmatprep.subr.mxu0 0.0
        %3122 = vmatpush1.msra.mxu0 0.0
        %3123 = vmatprep.subr.mxu0 0.0
        %3124 = vmatpush1.msra.mxu0 0.0
        %3125 = vmatprep.subr.mxu0 0.0
        %3126 = vmatpush1.msra.mxu0 0.0
        %3127 = vmatprep.subr.mxu0 0.0
        %3128 = vmatpush1.msra.mxu0 0.0
        %3129 = vmatprep.subr.mxu0 0.0
        %3130 = vmatpush1.msra.mxu0 0.0
        %3131 = vmatprep.subr.mxu0 0.0
        %3132 = vmatpush1.msra.mxu0 0.0
        %3133 = vmatprep.subr.mxu0 0.0
        %3134 = vmatpush1.msra.mxu0 0.0
        %3135 = vmatprep.subr.mxu0 0.0
        %3136 = vmatpush1.msra.mxu0 0.0
        %3137 = vmatprep.subr.mxu0 0.0
        %3138 = vmatpush1.msra.mxu0 0.0
        %3139 = vmatprep.subr.mxu0 0.0
        %3140 = vmatpush1.msra.mxu0 0.0
        %3141 = vmatprep.subr.mxu0 0.0
        %3142 = vmatpush1.msra.mxu0 0.0
        %3143 = vmatprep.subr.mxu0 0.0
        %3144 = vmatpush1.msra.mxu0 0.0
        %3145 = vmatprep.subr.mxu0 0.0
        %3146 = vmatpush1.msra.mxu0 0.0
        %3147 = vmatprep.subr.mxu0 0.0
        %3148 = vmatpush1.msra.mxu0 0.0
        %3149 = vmatprep.mubr.f32.mxu0 0.0
        %3150 = vmatmul.mubr.f32.gmra.mrb[0].mxu0 %v3061
        %v3151 = vpop.f32.mrb[0].mxu0
        %v3152 = vadd.f32 0.0, %v3151
        %v3153 = vpop.f32.mrb[0].mxu0
        %3154 = vmatprep.mubr.f32.mxu0 0.0
        %3155 = vmatmul.mubr.f32.gmra.mrb[0].mxu0 %v3063
        %v3156 = vpop.f32.mrb[0].mxu0
        %v3157 = vadd.f32 0.0, %v3156
        %v3158 = vpop.f32.mrb[0].mxu0
        %3159 = vmatprep.mubr.f32.mxu0 0.0
        %3160 = vmatmul.mubr.f32.gmra.mrb[0].mxu0 %v3065
        %v3161 = vpop.f32.mrb[0].mxu0
        %v3162 = vadd.f32 0.0, %v3161
        %v3163 = vpop.f32.mrb[0].mxu0
        %3164 = vmatprep.mubr.f32.mxu0 0.0
        %3165 = vmatmul.mubr.f32.gmra.mrb[0].mxu0 %v3067
        %v3166 = vpop.f32.mrb[0].mxu0
        %v3167 = vadd.f32 0.0, %v3166
        %v3168 = vpop.f32.mrb[0].mxu0
        %3169 = vmatprep.mubr.f32.mxu0 0.0
        %3170 = vmatmul.mubr.f32.gmra.mrb[0].mxu0 %v3069
        %v3171 = vpop.f32.mrb[0].mxu0
        %v3172 = vadd.f32 0.0, %v3171
        %v3173 = vpop.f32.mrb[0].mxu0
        %3174 = vmatprep.mubr.f32.mxu0 0.0
        %3175 = vmatmul.mubr.f32.gmra.mrb[0].mxu0 %v3071
        %v3176 = vpop.f32.mrb[0].mxu0
        %v3177 = vadd.f32 0.0, %v3176
        %v3178 = vpop.f32.mrb[0].mxu0
        %3179 = vmatprep.mubr.f32.mxu0 0.0
        %3180 = vmatmul.mubr.f32.gmra.mrb[0].mxu0 %v3073
        %v3181 = vpop.f32.mrb[0].mxu0
        %v3182 = vadd.f32 0.0, %v3181
        %v3183 = vpop.f32.mrb[0].mxu0
        %3184 = vmatprep.mubr.f32.mxu0 0.0
        %3185 = vmatmul.mubr.f32.gmra.mrb[0].mxu0 %v3075
        %v3186 = vpop.f32.mrb[0].mxu0
        %v3187 = vadd.f32 0.0, %v3186
        %v3188 = vpop.f32.mrb[0].mxu0
        %3189 = vmatprep.mubr.f32.mxu0 0.0
        %3190 = vmatmul.mubr.f32.gmra.mrb[0].mxu0 %v3074
        %v3191 = vpop.f32.mrb[0].mxu0
        %v3192 = vadd.f32 0.0, %v3191
        %v3193 = vpop.f32.mrb[0].mxu0
        %3194 = vdwg.mxu0
        %v3195 = vadd.f32 %v3033, %v3152
        %v3196 = vadd.f32 %v3034, %v3157
        %v3197 = vadd.f32 %v3035, %v3162
        %v3198 = vadd.f32 %v3036, %v3167
        %v3199 = vadd.f32 %v3037, %v3172
        %v3200 = vadd.f32 %v3038, %v3177
        %v3201 = vadd.f32 %v3039, %v3182
        %v3202 = vadd.f32 %v3040, %v3187
        %v3203 = vadd.f32 %v3041, %v3192
        %v3204 = vld [vmem:[%s5] sm:$0xff]
        %v3205 = vld [vmem:[%s5 + $0x8] sm:$0xff]
        %v3206 = vld [vmem:[%s5 + $0x10] sm:$0xff]
        %v3207 = vld [vmem:[%s5 + $0x18] sm:$0xff]
        %v3208 = vld [vmem:[%s5 + $0x20] sm:$0xff]
        %v3209 = vld [vmem:[%s5 + $0x28] sm:$0xff]
        %v3210 = vld [vmem:[%s5 + $0x30] sm:$0xff]
        %v3211 = vld [vmem:[%s5 + $0x38] sm:$0xff]
        %v3212 = vld [vmem:[%s5 + $0x40] sm:$0xff]
        %v3213 = vld [vmem:[%s5 + $0x48] sm:$0xff]
        %v3214 = vld [vmem:[%s5 + $0x50] sm:$0xff]
        %v3215 = vld [vmem:[%s5 + $0x58] sm:$0xff]
        %v3216 = vld [vmem:[%s5 + $0x60] sm:$0xff]
        %v3217 = vld [vmem:[%s5 + $0x68] sm:$0xff]
        %v3218 = vld [vmem:[%s5 + $0x70] sm:$0xff]
        %v3219 = vld [vmem:[%s5 + $0x78] sm:$0xff]
        %s3220 = scalar_lea.vmem %s5, 128
        %v3221 = vld [vmem:[%s3220] sm:$0xff]
        %v3222 = vld [vmem:[%s3220 + $0x8] sm:$0xff]
        %v3223 = vld [vmem:[%s3220 + $0x10] sm:$0xff]
        %v3224 = vld [vmem:[%s3220 + $0x18] sm:$0xff]
        %v3225 = vld [vmem:[%s3220 + $0x20] sm:$0xff]
        %v3226 = vld [vmem:[%s3220 + $0x28] sm:$0xff]
        %v3227 = vld [vmem:[%s3220 + $0x30] sm:$0xff]
        %v3228 = vld [vmem:[%s3220 + $0x38] sm:$0xff]
        %v3229 = vld [vmem:[%s3220 + $0x40] sm:$0xff]
        %v3230 = vld [vmem:[%s3220 + $0x48] sm:$0xff]
        %v3231 = vld [vmem:[%s3220 + $0x50] sm:$0xff]
        %v3232 = vld [vmem:[%s3220 + $0x58] sm:$0xff]
        %v3233 = vld [vmem:[%s3220 + $0x60] sm:$0xff]
        %v3234 = vld [vmem:[%s3220 + $0x68] sm:$0xff]
        %v3235 = vld [vmem:[%s3220 + $0x70] sm:$0xff]
        %v3236 = vld [vmem:[%s3220 + $0x78] sm:$0xff]
        %v3246 = vrot.slane %v3195, 1
        %v3247 = vrot.slane %v3196, 1
        %v3248 = vsel %vm1151, %v3246, %v3247
        %v3249 = vrot.slane %v3197, 1
        %v3250 = vsel %vm1151, %v3247, %v3249
        %v3251 = vrot.slane %v3198, 1
        %v3252 = vsel %vm1151, %v3249, %v3251
        %v3253 = vrot.slane %v3199, 1
        %v3254 = vsel %vm1151, %v3251, %v3253
        %v3255 = vrot.slane %v3200, 1
        %v3256 = vsel %vm1151, %v3253, %v3255
        %v3257 = vrot.slane %v3201, 1
        %v3258 = vsel %vm1151, %v3255, %v3257
        %v3259 = vrot.slane %v3202, 1
        %v3260 = vsel %vm1151, %v3257, %v3259
        %v3261 = vrot.slane %v3203, 1
        %v3262 = vsel %vm1151, %v3259, %v3261
        %3271 = vmatprep.subr.mxu0 0.0
        %3272 = vmatpush1.msra.mxu0 %v3221
        %3273 = vmatprep.subr.mxu0 0.0
        %3274 = vmatpush1.msra.mxu0 %v3222
        %3275 = vmatprep.subr.mxu0 0.0
        %3276 = vmatpush1.msra.mxu0 %v3223
        %3277 = vmatprep.subr.mxu0 0.0
        %3278 = vmatpush1.msra.mxu0 %v3224
        %3279 = vmatprep.subr.mxu0 0.0
        %3280 = vmatpush1.msra.mxu0 %v3225
        %3281 = vmatprep.subr.mxu0 0.0
        %3282 = vmatpush1.msra.mxu0 %v3226
        %3283 = vmatprep.subr.mxu0 0.0
        %3284 = vmatpush1.msra.mxu0 %v3227
        %3285 = vmatprep.subr.mxu0 0.0
        %3286 = vmatpush1.msra.mxu0 %v3228
        %3287 = vmatprep.subr.mxu0 0.0
        %3288 = vmatpush1.msra.mxu0 %v3229
        %3289 = vmatprep.subr.mxu0 0.0
        %3290 = vmatpush1.msra.mxu0 %v3230
        %3291 = vmatprep.subr.mxu0 0.0
        %3292 = vmatpush1.msra.mxu0 %v3231
        %3293 = vmatprep.subr.mxu0 0.0
        %3294 = vmatpush1.msra.mxu0 %v3232
        %3295 = vmatprep.subr.mxu0 0.0
        %3296 = vmatpush1.msra.mxu0 %v3233
        %3297 = vmatprep.subr.mxu0 0.0
        %3298 = vmatpush1.msra.mxu0 %v3234
        %3299 = vmatprep.subr.mxu0 0.0
        %3300 = vmatpush1.msra.mxu0 %v3235
        %3301 = vmatprep.subr.mxu0 0.0
        %3302 = vmatpush1.msra.mxu0 %v3236
        %3303 = vmatprep.subr.mxu0 0.0
        %3304 = vmatpush1.msra.mxu0 0.0
        %3305 = vmatprep.subr.mxu0 0.0
        %3306 = vmatpush1.msra.mxu0 0.0
        %3307 = vmatprep.subr.mxu0 0.0
        %3308 = vmatpush1.msra.mxu0 0.0
        %3309 = vmatprep.subr.mxu0 0.0
        %3310 = vmatpush1.msra.mxu0 0.0
        %3311 = vmatprep.subr.mxu0 0.0
        %3312 = vmatpush1.msra.mxu0 0.0
        %3313 = vmatprep.subr.mxu0 0.0
        %3314 = vmatpush1.msra.mxu0 0.0
        %3315 = vmatprep.subr.mxu0 0.0
        %3316 = vmatpush1.msra.mxu0 0.0
        %3317 = vmatprep.subr.mxu0 0.0
        %3318 = vmatpush1.msra.mxu0 0.0
        %3319 = vmatprep.subr.mxu0 0.0
        %3320 = vmatpush1.msra.mxu0 0.0
        %3321 = vmatprep.subr.mxu0 0.0
        %3322 = vmatpush1.msra.mxu0 0.0
        %3323 = vmatprep.subr.mxu0 0.0
        %3324 = vmatpush1.msra.mxu0 0.0
        %3325 = vmatprep.subr.mxu0 0.0
        %3326 = vmatpush1.msra.mxu0 0.0
        %3327 = vmatprep.subr.mxu0 0.0
        %3328 = vmatpush1.msra.mxu0 0.0
        %3329 = vmatprep.subr.mxu0 0.0
        %3330 = vmatpush1.msra.mxu0 0.0
        %3331 = vmatprep.subr.mxu0 0.0
        %3332 = vmatpush1.msra.mxu0 0.0
        %3333 = vmatprep.subr.mxu0 0.0
        %3334 = vmatpush1.msra.mxu0 0.0
        %3335 = vmatprep.mubr.f32.mxu0 0.0
        %3336 = vmatmul.mubr.f32.gmra.mrb[0].mxu0 %v3248
        %v3337 = vpop.f32.mrb[0].mxu0
        %v3338 = vadd.f32 0.0, %v3337
        %v3339 = vpop.f32.mrb[0].mxu0
        %3340 = vmatprep.mubr.f32.mxu0 0.0
        %3341 = vmatmul.mubr.f32.gmra.mrb[0].mxu0 %v3250
        %v3342 = vpop.f32.mrb[0].mxu0
        %v3343 = vadd.f32 0.0, %v3342
        %v3344 = vpop.f32.mrb[0].mxu0
        %3345 = vmatprep.mubr.f32.mxu0 0.0
        %3346 = vmatmul.mubr.f32.gmra.mrb[0].mxu0 %v3252
        %v3347 = vpop.f32.mrb[0].mxu0
        %v3348 = vadd.f32 0.0, %v3347
        %v3349 = vpop.f32.mrb[0].mxu0
        %3350 = vmatprep.mubr.f32.mxu0 0.0
        %3351 = vmatmul.mubr.f32.gmra.mrb[0].mxu0 %v3254
        %v3352 = vpop.f32.mrb[0].mxu0
        %v3353 = vadd.f32 0.0, %v3352
        %v3354 = vpop.f32.mrb[0].mxu0
        %3355 = vmatprep.mubr.f32.mxu0 0.0
        %3356 = vmatmul.mubr.f32.gmra.mrb[0].mxu0 %v3256
        %v3357 = vpop.f32.mrb[0].mxu0
        %v3358 = vadd.f32 0.0, %v3357
        %v3359 = vpop.f32.mrb[0].mxu0
        %3360 = vmatprep.mubr.f32.mxu0 0.0
        %3361 = vmatmul.mubr.f32.gmra.mrb[0].mxu0 %v3258
        %v3362 = vpop.f32.mrb[0].mxu0
        %v3363 = vadd.f32 0.0, %v3362
        %v3364 = vpop.f32.mrb[0].mxu0
        %3365 = vmatprep.mubr.f32.mxu0 0.0
        %3366 = vmatmul.mubr.f32.gmra.mrb[0].mxu0 %v3260
        %v3367 = vpop.f32.mrb[0].mxu0
        %v3368 = vadd.f32 0.0, %v3367
        %v3369 = vpop.f32.mrb[0].mxu0
        %3370 = vmatprep.mubr.f32.mxu0 0.0
        %3371 = vmatmul.mubr.f32.gmra.mrb[0].mxu0 %v3262
        %v3372 = vpop.f32.mrb[0].mxu0
        %v3373 = vadd.f32 0.0, %v3372
        %v3374 = vpop.f32.mrb[0].mxu0
        %3375 = vdwg.mxu0
        %3376 = vmatprep.subr.mxu0 0.0
        %3377 = vmatpush1.msra.mxu0 %v3204
        %3378 = vmatprep.subr.mxu0 0.0
        %3379 = vmatpush1.msra.mxu0 %v3205
        %3380 = vmatprep.subr.mxu0 0.0
        %3381 = vmatpush1.msra.mxu0 %v3206
        %3382 = vmatprep.subr.mxu0 0.0
        %3383 = vmatpush1.msra.mxu0 %v3207
        %3384 = vmatprep.subr.mxu0 0.0
        %3385 = vmatpush1.msra.mxu0 %v3208
        %3386 = vmatprep.subr.mxu0 0.0
        %3387 = vmatpush1.msra.mxu0 %v3209
        %3388 = vmatprep.subr.mxu0 0.0
        %3389 = vmatpush1.msra.mxu0 %v3210
        %3390 = vmatprep.subr.mxu0 0.0
        %3391 = vmatpush1.msra.mxu0 %v3211
        %3392 = vmatprep.subr.mxu0 0.0
        %3393 = vmatpush1.msra.mxu0 %v3212
        %3394 = vmatprep.subr.mxu0 0.0
        %3395 = vmatpush1.msra.mxu0 %v3213
        %3396 = vmatprep.subr.mxu0 0.0
        %3397 = vmatpush1.msra.mxu0 %v3214
        %3398 = vmatprep.subr.mxu0 0.0
        %3399 = vmatpush1.msra.mxu0 %v3215
        %3400 = vmatprep.subr.mxu0 0.0
        %3401 = vmatpush1.msra.mxu0 %v3216
        %3402 = vmatprep.subr.mxu0 0.0
        %3403 = vmatpush1.msra.mxu0 %v3217
        %3404 = vmatprep.subr.mxu0 0.0
        %3405 = vmatpush1.msra.mxu0 %v3218
        %3406 = vmatprep.subr.mxu0 0.0
        %3407 = vmatpush1.msra.mxu0 %v3219
        %3408 = vmatprep.subr.mxu0 0.0
        %3409 = vmatpush1.msra.mxu0 0.0
        %3410 = vmatprep.subr.mxu0 0.0
        %3411 = vmatpush1.msra.mxu0 0.0
        %3412 = vmatprep.subr.mxu0 0.0
        %3413 = vmatpush1.msra.mxu0 0.0
        %3414 = vmatprep.subr.mxu0 0.0
        %3415 = vmatpush1.msra.mxu0 0.0
        %3416 = vmatprep.subr.mxu0 0.0
        %3417 = vmatpush1.msra.mxu0 0.0
        %3418 = vmatprep.subr.mxu0 0.0
        %3419 = vmatpush1.msra.mxu0 0.0
        %3420 = vmatprep.subr.mxu0 0.0
        %3421 = vmatpush1.msra.mxu0 0.0
        %3422 = vmatprep.subr.mxu0 0.0
        %3423 = vmatpush1.msra.mxu0 0.0
        %3424 = vmatprep.subr.mxu0 0.0
        %3425 = vmatpush1.msra.mxu0 0.0
        %3426 = vmatprep.subr.mxu0 0.0
        %3427 = vmatpush1.msra.mxu0 0.0
        %3428 = vmatprep.subr.mxu0 0.0
        %3429 = vmatpush1.msra.mxu0 0.0
        %3430 = vmatprep.subr.mxu0 0.0
        %3431 = vmatpush1.msra.mxu0 0.0
        %3432 = vmatprep.subr.mxu0 0.0
        %3433 = vmatpush1.msra.mxu0 0.0
        %3434 = vmatprep.subr.mxu0 0.0
        %3435 = vmatpush1.msra.mxu0 0.0
        %3436 = vmatprep.subr.mxu0 0.0
        %3437 = vmatpush1.msra.mxu0 0.0
        %3438 = vmatprep.subr.mxu0 0.0
        %3439 = vmatpush1.msra.mxu0 0.0
        %3440 = vmatprep.mubr.f32.mxu0 0.0
        %3441 = vmatmul.mubr.f32.gmra.mrb[0].mxu0 %v3195
        %v3442 = vpop.f32.mrb[0].mxu0
        %v3443 = vadd.f32 %v3338, %v3442
        %v3444 = vpop.f32.mrb[0].mxu0
        %3445 = vmatprep.mubr.f32.mxu0 0.0
        %3446 = vmatmul.mubr.f32.gmra.mrb[0].mxu0 %v3196
        %v3447 = vpop.f32.mrb[0].mxu0
        %v3448 = vadd.f32 %v3343, %v3447
        %v3449 = vpop.f32.mrb[0].mxu0
        %3450 = vmatprep.mubr.f32.mxu0 0.0
        %3451 = vmatmul.mubr.f32.gmra.mrb[0].mxu0 %v3197
        %v3452 = vpop.f32.mrb[0].mxu0
        %v3453 = vadd.f32 %v3348, %v3452
        %v3454 = vpop.f32.mrb[0].mxu0
        %3455 = vmatprep.mubr.f32.mxu0 0.0
        %3456 = vmatmul.mubr.f32.gmra.mrb[0].mxu0 %v3198
        %v3457 = vpop.f32.mrb[0].mxu0
        %v3458 = vadd.f32 %v3353, %v3457
        %v3459 = vpop.f32.mrb[0].mxu0
        %3460 = vmatprep.mubr.f32.mxu0 0.0
        %3461 = vmatmul.mubr.f32.gmra.mrb[0].mxu0 %v3199
        %v3462 = vpop.f32.mrb[0].mxu0
        %v3463 = vadd.f32 %v3358, %v3462
        %v3464 = vpop.f32.mrb[0].mxu0
        %3465 = vmatprep.mubr.f32.mxu0 0.0
        %3466 = vmatmul.mubr.f32.gmra.mrb[0].mxu0 %v3200
        %v3467 = vpop.f32.mrb[0].mxu0
        %v3468 = vadd.f32 %v3363, %v3467
        %v3469 = vpop.f32.mrb[0].mxu0
        %3470 = vmatprep.mubr.f32.mxu0 0.0
        %3471 = vmatmul.mubr.f32.gmra.mrb[0].mxu0 %v3201
        %v3472 = vpop.f32.mrb[0].mxu0
        %v3473 = vadd.f32 %v3368, %v3472
        %v3474 = vpop.f32.mrb[0].mxu0
        %3475 = vmatprep.mubr.f32.mxu0 0.0
        %3476 = vmatmul.mubr.f32.gmra.mrb[0].mxu0 %v3202
        %v3477 = vpop.f32.mrb[0].mxu0
        %v3478 = vadd.f32 %v3373, %v3477
        %v3479 = vpop.f32.mrb[0].mxu0
        %3480 = vdwg.mxu0
        %s3481 = scalar_lea.vmem %s5, 256
        %v3482 = vld [vmem:[%s3481] sm:$0xff]
        %v3483 = vld [vmem:[%s3481 + $0x8] sm:$0xff]
        %v3484 = vld [vmem:[%s3481 + $0x10] sm:$0xff]
        %v3485 = vld [vmem:[%s3481 + $0x18] sm:$0xff]
        %v3486 = vld [vmem:[%s3481 + $0x20] sm:$0xff]
        %v3487 = vld [vmem:[%s3481 + $0x28] sm:$0xff]
        %v3488 = vld [vmem:[%s3481 + $0x30] sm:$0xff]
        %v3489 = vld [vmem:[%s3481 + $0x38] sm:$0xff]
        %v3490 = vld [vmem:[%s3481 + $0x40] sm:$0xff]
        %v3491 = vld [vmem:[%s3481 + $0x48] sm:$0xff]
        %v3492 = vld [vmem:[%s3481 + $0x50] sm:$0xff]
        %v3493 = vld [vmem:[%s3481 + $0x58] sm:$0xff]
        %v3494 = vld [vmem:[%s3481 + $0x60] sm:$0xff]
        %v3495 = vld [vmem:[%s3481 + $0x68] sm:$0xff]
        %v3496 = vld [vmem:[%s3481 + $0x70] sm:$0xff]
        %v3497 = vld [vmem:[%s3481 + $0x78] sm:$0xff]
        %v3498 = vrot.slane %v3195, 2
        %v3499 = vrot.slane %v3196, 2
        %v3500 = vsel %vm2896, %v3498, %v3499
        %v3501 = vrot.slane %v3197, 2
        %v3502 = vsel %vm2896, %v3499, %v3501
        %v3503 = vrot.slane %v3198, 2
        %v3504 = vsel %vm2896, %v3501, %v3503
        %v3505 = vrot.slane %v3199, 2
        %v3506 = vsel %vm2896, %v3503, %v3505
        %v3507 = vrot.slane %v3200, 2
        %v3508 = vsel %vm2896, %v3505, %v3507
        %v3509 = vrot.slane %v3201, 2
        %v3510 = vsel %vm2896, %v3507, %v3509
        %v3511 = vrot.slane %v3202, 2
        %v3512 = vsel %vm2896, %v3509, %v3511
        %v3513 = vrot.slane %v3203, 2
        %v3514 = vsel %vm2896, %v3511, %v3513
        %3523 = vmatprep.subr.mxu0 0.0
        %3524 = vmatpush1.msra.mxu0 %v3482
        %3525 = vmatprep.subr.mxu0 0.0
        %3526 = vmatpush1.msra.mxu0 %v3483
        %3527 = vmatprep.subr.mxu0 0.0
        %3528 = vmatpush1.msra.mxu0 %v3484
        %3529 = vmatprep.subr.mxu0 0.0
        %3530 = vmatpush1.msra.mxu0 %v3485
        %3531 = vmatprep.subr.mxu0 0.0
        %3532 = vmatpush1.msra.mxu0 %v3486
        %3533 = vmatprep.subr.mxu0 0.0
        %3534 = vmatpush1.msra.mxu0 %v3487
        %3535 = vmatprep.subr.mxu0 0.0
        %3536 = vmatpush1.msra.mxu0 %v3488
        %3537 = vmatprep.subr.mxu0 0.0
        %3538 = vmatpush1.msra.mxu0 %v3489
        %3539 = vmatprep.subr.mxu0 0.0
        %3540 = vmatpush1.msra.mxu0 %v3490
        %3541 = vmatprep.subr.mxu0 0.0
        %3542 = vmatpush1.msra.mxu0 %v3491
        %3543 = vmatprep.subr.mxu0 0.0
        %3544 = vmatpush1.msra.mxu0 %v3492
        %3545 = vmatprep.subr.mxu0 0.0
        %3546 = vmatpush1.msra.mxu0 %v3493
        %3547 = vmatprep.subr.mxu0 0.0
        %3548 = vmatpush1.msra.mxu0 %v3494
        %3549 = vmatprep.subr.mxu0 0.0
        %3550 = vmatpush1.msra.mxu0 %v3495
        %3551 = vmatprep.subr.mxu0 0.0
        %3552 = vmatpush1.msra.mxu0 %v3496
        %3553 = vmatprep.subr.mxu0 0.0
        %3554 = vmatpush1.msra.mxu0 %v3497
        %3555 = vmatprep.subr.mxu0 0.0
        %3556 = vmatpush1.msra.mxu0 0.0
        %3557 = vmatprep.subr.mxu0 0.0
        %3558 = vmatpush1.msra.mxu0 0.0
        %3559 = vmatprep.subr.mxu0 0.0
        %3560 = vmatpush1.msra.mxu0 0.0
        %3561 = vmatprep.subr.mxu0 0.0
        %3562 = vmatpush1.msra.mxu0 0.0
        %3563 = vmatprep.subr.mxu0 0.0
        %3564 = vmatpush1.msra.mxu0 0.0
        %3565 = vmatprep.subr.mxu0 0.0
        %3566 = vmatpush1.msra.mxu0 0.0
        %3567 = vmatprep.subr.mxu0 0.0
        %3568 = vmatpush1.msra.mxu0 0.0
        %3569 = vmatprep.subr.mxu0 0.0
        %3570 = vmatpush1.msra.mxu0 0.0
        %3571 = vmatprep.subr.mxu0 0.0
        %3572 = vmatpush1.msra.mxu0 0.0
        %3573 = vmatprep.subr.mxu0 0.0
        %3574 = vmatpush1.msra.mxu0 0.0
        %3575 = vmatprep.subr.mxu0 0.0
        %3576 = vmatpush1.msra.mxu0 0.0
        %3577 = vmatprep.subr.mxu0 0.0
        %3578 = vmatpush1.msra.mxu0 0.0
        %3579 = vmatprep.subr.mxu0 0.0
        %3580 = vmatpush1.msra.mxu0 0.0
        %3581 = vmatprep.subr.mxu0 0.0
        %3582 = vmatpush1.msra.mxu0 0.0
        %3583 = vmatprep.subr.mxu0 0.0
        %3584 = vmatpush1.msra.mxu0 0.0
        %3585 = vmatprep.subr.mxu0 0.0
        %3586 = vmatpush1.msra.mxu0 0.0
        %3587 = vmatprep.mubr.f32.mxu0 0.0
        %3588 = vmatmul.mubr.f32.gmra.mrb[0].mxu0 %v3500
        %v3589 = vpop.f32.mrb[0].mxu0
        %v3590 = vadd.f32 0.0, %v3589
        %v3591 = vpop.f32.mrb[0].mxu0
        %3592 = vmatprep.mubr.f32.mxu0 0.0
        %3593 = vmatmul.mubr.f32.gmra.mrb[0].mxu0 %v3502
        %v3594 = vpop.f32.mrb[0].mxu0
        %v3595 = vadd.f32 0.0, %v3594
        %v3596 = vpop.f32.mrb[0].mxu0
        %3597 = vmatprep.mubr.f32.mxu0 0.0
        %3598 = vmatmul.mubr.f32.gmra.mrb[0].mxu0 %v3504
        %v3599 = vpop.f32.mrb[0].mxu0
        %v3600 = vadd.f32 0.0, %v3599
        %v3601 = vpop.f32.mrb[0].mxu0
        %3602 = vmatprep.mubr.f32.mxu0 0.0
        %3603 = vmatmul.mubr.f32.gmra.mrb[0].mxu0 %v3506
        %v3604 = vpop.f32.mrb[0].mxu0
        %v3605 = vadd.f32 0.0, %v3604
        %v3606 = vpop.f32.mrb[0].mxu0
        %3607 = vmatprep.mubr.f32.mxu0 0.0
        %3608 = vmatmul.mubr.f32.gmra.mrb[0].mxu0 %v3508
        %v3609 = vpop.f32.mrb[0].mxu0
        %v3610 = vadd.f32 0.0, %v3609
        %v3611 = vpop.f32.mrb[0].mxu0
        %3612 = vmatprep.mubr.f32.mxu0 0.0
        %3613 = vmatmul.mubr.f32.gmra.mrb[0].mxu0 %v3510
        %v3614 = vpop.f32.mrb[0].mxu0
        %v3615 = vadd.f32 0.0, %v3614
        %v3616 = vpop.f32.mrb[0].mxu0
        %3617 = vmatprep.mubr.f32.mxu0 0.0
        %3618 = vmatmul.mubr.f32.gmra.mrb[0].mxu0 %v3512
        %v3619 = vpop.f32.mrb[0].mxu0
        %v3620 = vadd.f32 0.0, %v3619
        %v3621 = vpop.f32.mrb[0].mxu0
        %3622 = vmatprep.mubr.f32.mxu0 0.0
        %3623 = vmatmul.mubr.f32.gmra.mrb[0].mxu0 %v3514
        %v3624 = vpop.f32.mrb[0].mxu0
        %v3625 = vadd.f32 0.0, %v3624
        %v3626 = vpop.f32.mrb[0].mxu0
        %3627 = vdwg.mxu0
        %v3628 = vadd.f32 %v3443, %v3590
        %v3629 = vadd.f32 %v3448, %v3595
        %v3630 = vadd.f32 %v3453, %v3600
        %v3631 = vadd.f32 %v3458, %v3605
        %v3632 = vadd.f32 %v3463, %v3610
        %v3633 = vadd.f32 %v3468, %v3615
        %v3634 = vadd.f32 %v3473, %v3620
        %v3635 = vadd.f32 %v3478, %v3625
        %s3636 = scalar_lea.vmem %s5, 384
        %v3637 = vld [vmem:[%s3636] sm:$0xff]
        %v3638 = vld [vmem:[%s3636 + $0x8] sm:$0xff]
        %v3639 = vld [vmem:[%s3636 + $0x10] sm:$0xff]
        %v3640 = vld [vmem:[%s3636 + $0x18] sm:$0xff]
        %v3641 = vld [vmem:[%s3636 + $0x20] sm:$0xff]
        %v3642 = vld [vmem:[%s3636 + $0x28] sm:$0xff]
        %v3643 = vld [vmem:[%s3636 + $0x30] sm:$0xff]
        %v3644 = vld [vmem:[%s3636 + $0x38] sm:$0xff]
        %v3645 = vld [vmem:[%s3636 + $0x40] sm:$0xff]
        %v3646 = vld [vmem:[%s3636 + $0x48] sm:$0xff]
        %v3647 = vld [vmem:[%s3636 + $0x50] sm:$0xff]
        %v3648 = vld [vmem:[%s3636 + $0x58] sm:$0xff]
        %v3649 = vld [vmem:[%s3636 + $0x60] sm:$0xff]
        %v3650 = vld [vmem:[%s3636 + $0x68] sm:$0xff]
        %v3651 = vld [vmem:[%s3636 + $0x70] sm:$0xff]
        %v3652 = vld [vmem:[%s3636 + $0x78] sm:$0xff]
        %vm3653 = vcmask 1044480
        %v3654 = vrot.slane %v3195, 3
        %v3655 = vrot.slane %v3196, 3
        %v3656 = vsel %vm3653, %v3654, %v3655
        %v3657 = vrot.slane %v3197, 3
        %v3658 = vsel %vm3653, %v3655, %v3657
        %v3659 = vrot.slane %v3198, 3
        %v3660 = vsel %vm3653, %v3657, %v3659
        %v3661 = vrot.slane %v3199, 3
        %v3662 = vsel %vm3653, %v3659, %v3661
        %v3663 = vrot.slane %v3200, 3
        %v3664 = vsel %vm3653, %v3661, %v3663
        %v3665 = vrot.slane %v3201, 3
        %v3666 = vsel %vm3653, %v3663, %v3665
        %v3667 = vrot.slane %v3202, 3
        %v3668 = vsel %vm3653, %v3665, %v3667
        %v3669 = vrot.slane %v3203, 3
        %v3670 = vsel %vm3653, %v3667, %v3669
        %3679 = vmatprep.subr.mxu0 0.0
        %3680 = vmatpush1.msra.mxu0 %v3637
        %3681 = vmatprep.subr.mxu0 0.0
        %3682 = vmatpush1.msra.mxu0 %v3638
        %3683 = vmatprep.subr.mxu0 0.0
        %3684 = vmatpush1.msra.mxu0 %v3639
        %3685 = vmatprep.subr.mxu0 0.0
        %3686 = vmatpush1.msra.mxu0 %v3640
        %3687 = vmatprep.subr.mxu0 0.0
        %3688 = vmatpush1.msra.mxu0 %v3641
        %3689 = vmatprep.subr.mxu0 0.0
        %3690 = vmatpush1.msra.mxu0 %v3642
        %3691 = vmatprep.subr.mxu0 0.0
        %3692 = vmatpush1.msra.mxu0 %v3643
        %3693 = vmatprep.subr.mxu0 0.0
        %3694 = vmatpush1.msra.mxu0 %v3644
        %3695 = vmatprep.subr.mxu0 0.0
        %3696 = vmatpush1.msra.mxu0 %v3645
        %3697 = vmatprep.subr.mxu0 0.0
        %3698 = vmatpush1.msra.mxu0 %v3646
        %3699 = vmatprep.subr.mxu0 0.0
        %3700 = vmatpush1.msra.mxu0 %v3647
        %3701 = vmatprep.subr.mxu0 0.0
        %3702 = vmatpush1.msra.mxu0 %v3648
        %3703 = vmatprep.subr.mxu0 0.0
        %3704 = vmatpush1.msra.mxu0 %v3649
        %3705 = vmatprep.subr.mxu0 0.0
        %3706 = vmatpush1.msra.mxu0 %v3650
        %3707 = vmatprep.subr.mxu0 0.0
        %3708 = vmatpush1.msra.mxu0 %v3651
        %3709 = vmatprep.subr.mxu0 0.0
        %3710 = vmatpush1.msra.mxu0 %v3652
        %3711 = vmatprep.subr.mxu0 0.0
        %3712 = vmatpush1.msra.mxu0 0.0
        %3713 = vmatprep.subr.mxu0 0.0
        %3714 = vmatpush1.msra.mxu0 0.0
        %3715 = vmatprep.subr.mxu0 0.0
        %3716 = vmatpush1.msra.mxu0 0.0
        %3717 = vmatprep.subr.mxu0 0.0
        %3718 = vmatpush1.msra.mxu0 0.0
        %3719 = vmatprep.subr.mxu0 0.0
        %3720 = vmatpush1.msra.mxu0 0.0
        %3721 = vmatprep.subr.mxu0 0.0
        %3722 = vmatpush1.msra.mxu0 0.0
        %3723 = vmatprep.subr.mxu0 0.0
        %3724 = vmatpush1.msra.mxu0 0.0
        %3725 = vmatprep.subr.mxu0 0.0
        %3726 = vmatpush1.msra.mxu0 0.0
        %3727 = vmatprep.subr.mxu0 0.0
        %3728 = vmatpush1.msra.mxu0 0.0
        %3729 = vmatprep.subr.mxu0 0.0
        %3730 = vmatpush1.msra.mxu0 0.0
        %3731 = vmatprep.subr.mxu0 0.0
        %3732 = vmatpush1.msra.mxu0 0.0
        %3733 = vmatprep.subr.mxu0 0.0
        %3734 = vmatpush1.msra.mxu0 0.0
        %3735 = vmatprep.subr.mxu0 0.0
        %3736 = vmatpush1.msra.mxu0 0.0
        %3737 = vmatprep.subr.mxu0 0.0
        %3738 = vmatpush1.msra.mxu0 0.0
        %3739 = vmatprep.subr.mxu0 0.0
        %3740 = vmatpush1.msra.mxu0 0.0
        %3741 = vmatprep.subr.mxu0 0.0
        %3742 = vmatpush1.msra.mxu0 0.0
        %3743 = vmatprep.mubr.f32.mxu0 0.0
        %3744 = vmatmul.mubr.f32.gmra.mrb[0].mxu0 %v3656
        %v3745 = vpop.f32.mrb[0].mxu0
        %v3746 = vadd.f32 0.0, %v3745
        %v3747 = vpop.f32.mrb[0].mxu0
        %3748 = vmatprep.mubr.f32.mxu0 0.0
        %3749 = vmatmul.mubr.f32.gmra.mrb[0].mxu0 %v3658
        %v3750 = vpop.f32.mrb[0].mxu0
        %v3751 = vadd.f32 0.0, %v3750
        %v3752 = vpop.f32.mrb[0].mxu0
        %3753 = vmatprep.mubr.f32.mxu0 0.0
        %3754 = vmatmul.mubr.f32.gmra.mrb[0].mxu0 %v3660
        %v3755 = vpop.f32.mrb[0].mxu0
        %v3756 = vadd.f32 0.0, %v3755
        %v3757 = vpop.f32.mrb[0].mxu0
        %3758 = vmatprep.mubr.f32.mxu0 0.0
        %3759 = vmatmul.mubr.f32.gmra.mrb[0].mxu0 %v3662
        %v3760 = vpop.f32.mrb[0].mxu0
        %v3761 = vadd.f32 0.0, %v3760
        %v3762 = vpop.f32.mrb[0].mxu0
        %3763 = vmatprep.mubr.f32.mxu0 0.0
        %3764 = vmatmul.mubr.f32.gmra.mrb[0].mxu0 %v3664
        %v3765 = vpop.f32.mrb[0].mxu0
        %v3766 = vadd.f32 0.0, %v3765
        %v3767 = vpop.f32.mrb[0].mxu0
        %3768 = vmatprep.mubr.f32.mxu0 0.0
        %3769 = vmatmul.mubr.f32.gmra.mrb[0].mxu0 %v3666
        %v3770 = vpop.f32.mrb[0].mxu0
        %v3771 = vadd.f32 0.0, %v3770
        %v3772 = vpop.f32.mrb[0].mxu0
        %3773 = vmatprep.mubr.f32.mxu0 0.0
        %3774 = vmatmul.mubr.f32.gmra.mrb[0].mxu0 %v3668
        %v3775 = vpop.f32.mrb[0].mxu0
        %v3776 = vadd.f32 0.0, %v3775
        %v3777 = vpop.f32.mrb[0].mxu0
        %3778 = vmatprep.mubr.f32.mxu0 0.0
        %3779 = vmatmul.mubr.f32.gmra.mrb[0].mxu0 %v3670
        %v3780 = vpop.f32.mrb[0].mxu0
        %v3781 = vadd.f32 0.0, %v3780
        %v3782 = vpop.f32.mrb[0].mxu0
        %3783 = vdwg.mxu0
        %v3784 = vadd.f32 %v3628, %v3746
        %v3785 = vadd.f32 %v3629, %v3751
        %v3786 = vadd.f32 %v3630, %v3756
        %v3787 = vadd.f32 %v3631, %v3761
        %v3788 = vadd.f32 %v3632, %v3766
        %v3789 = vadd.f32 %v3633, %v3771
        %v3790 = vadd.f32 %v3634, %v3776
        %v3791 = vadd.f32 %v3635, %v3781
        %s3792 = scalar_lea.vmem %s5, 512
        %v3793 = vld [vmem:[%s3792] sm:$0xff]
        %v3794 = vld [vmem:[%s3792 + $0x8] sm:$0xff]
        %v3795 = vld [vmem:[%s3792 + $0x10] sm:$0xff]
        %v3796 = vld [vmem:[%s3792 + $0x18] sm:$0xff]
        %v3797 = vld [vmem:[%s3792 + $0x20] sm:$0xff]
        %v3798 = vld [vmem:[%s3792 + $0x28] sm:$0xff]
        %v3799 = vld [vmem:[%s3792 + $0x30] sm:$0xff]
        %v3800 = vld [vmem:[%s3792 + $0x38] sm:$0xff]
        %v3801 = vld [vmem:[%s3792 + $0x40] sm:$0xff]
        %v3802 = vld [vmem:[%s3792 + $0x48] sm:$0xff]
        %v3803 = vld [vmem:[%s3792 + $0x50] sm:$0xff]
        %v3804 = vld [vmem:[%s3792 + $0x58] sm:$0xff]
        %v3805 = vld [vmem:[%s3792 + $0x60] sm:$0xff]
        %v3806 = vld [vmem:[%s3792 + $0x68] sm:$0xff]
        %v3807 = vld [vmem:[%s3792 + $0x70] sm:$0xff]
        %v3808 = vld [vmem:[%s3792 + $0x78] sm:$0xff]
        %vm3809 = vcmask 1043456
        %v3810 = vrot.slane %v3195, 4
        %v3811 = vrot.slane %v3196, 4
        %v3812 = vsel %vm3809, %v3810, %v3811
        %v3813 = vrot.slane %v3197, 4
        %v3814 = vsel %vm3809, %v3811, %v3813
        %v3815 = vrot.slane %v3198, 4
        %v3816 = vsel %vm3809, %v3813, %v3815
        %v3817 = vrot.slane %v3199, 4
        %v3818 = vsel %vm3809, %v3815, %v3817
        %v3819 = vrot.slane %v3200, 4
        %v3820 = vsel %vm3809, %v3817, %v3819
        %v3821 = vrot.slane %v3201, 4
        %v3822 = vsel %vm3809, %v3819, %v3821
        %v3823 = vrot.slane %v3202, 4
        %v3824 = vsel %vm3809, %v3821, %v3823
        %v3825 = vrot.slane %v3203, 4
        %v3826 = vsel %vm3809, %v3823, %v3825
        %3835 = vmatprep.subr.mxu0 0.0
        %3836 = vmatpush1.msra.mxu0 %v3793
        %3837 = vmatprep.subr.mxu0 0.0
        %3838 = vmatpush1.msra.mxu0 %v3794
        %3839 = vmatprep.subr.mxu0 0.0
        %3840 = vmatpush1.msra.mxu0 %v3795
        %3841 = vmatprep.subr.mxu0 0.0
        %3842 = vmatpush1.msra.mxu0 %v3796
        %3843 = vmatprep.subr.mxu0 0.0
        %3844 = vmatpush1.msra.mxu0 %v3797
        %3845 = vmatprep.subr.mxu0 0.0
        %3846 = vmatpush1.msra.mxu0 %v3798
        %3847 = vmatprep.subr.mxu0 0.0
        %3848 = vmatpush1.msra.mxu0 %v3799
        %3849 = vmatprep.subr.mxu0 0.0
        %3850 = vmatpush1.msra.mxu0 %v3800
        %3851 = vmatprep.subr.mxu0 0.0
        %3852 = vmatpush1.msra.mxu0 %v3801
        %3853 = vmatprep.subr.mxu0 0.0
        %3854 = vmatpush1.msra.mxu0 %v3802
        %3855 = vmatprep.subr.mxu0 0.0
        %3856 = vmatpush1.msra.mxu0 %v3803
        %3857 = vmatprep.subr.mxu0 0.0
        %3858 = vmatpush1.msra.mxu0 %v3804
        %3859 = vmatprep.subr.mxu0 0.0
        %3860 = vmatpush1.msra.mxu0 %v3805
        %3861 = vmatprep.subr.mxu0 0.0
        %3862 = vmatpush1.msra.mxu0 %v3806
        %3863 = vmatprep.subr.mxu0 0.0
        %3864 = vmatpush1.msra.mxu0 %v3807
        %3865 = vmatprep.subr.mxu0 0.0
        %3866 = vmatpush1.msra.mxu0 %v3808
        %3867 = vmatprep.subr.mxu0 0.0
        %3868 = vmatpush1.msra.mxu0 0.0
        %3869 = vmatprep.subr.mxu0 0.0
        %3870 = vmatpush1.msra.mxu0 0.0
        %3871 = vmatprep.subr.mxu0 0.0
        %3872 = vmatpush1.msra.mxu0 0.0
        %3873 = vmatprep.subr.mxu0 0.0
        %3874 = vmatpush1.msra.mxu0 0.0
        %3875 = vmatprep.subr.mxu0 0.0
        %3876 = vmatpush1.msra.mxu0 0.0
        %3877 = vmatprep.subr.mxu0 0.0
        %3878 = vmatpush1.msra.mxu0 0.0
        %3879 = vmatprep.subr.mxu0 0.0
        %3880 = vmatpush1.msra.mxu0 0.0
        %3881 = vmatprep.subr.mxu0 0.0
        %3882 = vmatpush1.msra.mxu0 0.0
        %3883 = vmatprep.subr.mxu0 0.0
        %3884 = vmatpush1.msra.mxu0 0.0
        %3885 = vmatprep.subr.mxu0 0.0
        %3886 = vmatpush1.msra.mxu0 0.0
        %3887 = vmatprep.subr.mxu0 0.0
        %3888 = vmatpush1.msra.mxu0 0.0
        %3889 = vmatprep.subr.mxu0 0.0
        %3890 = vmatpush1.msra.mxu0 0.0
        %3891 = vmatprep.subr.mxu0 0.0
        %3892 = vmatpush1.msra.mxu0 0.0
        %3893 = vmatprep.subr.mxu0 0.0
        %3894 = vmatpush1.msra.mxu0 0.0
        %3895 = vmatprep.subr.mxu0 0.0
        %3896 = vmatpush1.msra.mxu0 0.0
        %3897 = vmatprep.subr.mxu0 0.0
        %3898 = vmatpush1.msra.mxu0 0.0
        %3899 = vmatprep.mubr.f32.mxu0 0.0
        %3900 = vmatmul.mubr.f32.gmra.mrb[0].mxu0 %v3812
        %v3901 = vpop.f32.mrb[0].mxu0
        %v3902 = vadd.f32 0.0, %v3901
        %v3903 = vpop.f32.mrb[0].mxu0
        %3904 = vmatprep.mubr.f32.mxu0 0.0
        %3905 = vmatmul.mubr.f32.gmra.mrb[0].mxu0 %v3814
        %v3906 = vpop.f32.mrb[0].mxu0
        %v3907 = vadd.f32 0.0, %v3906
        %v3908 = vpop.f32.mrb[0].mxu0
        %3909 = vmatprep.mubr.f32.mxu0 0.0
        %3910 = vmatmul.mubr.f32.gmra.mrb[0].mxu0 %v3816
        %v3911 = vpop.f32.mrb[0].mxu0
        %v3912 = vadd.f32 0.0, %v3911
        %v3913 = vpop.f32.mrb[0].mxu0
        %3914 = vmatprep.mubr.f32.mxu0 0.0
        %3915 = vmatmul.mubr.f32.gmra.mrb[0].mxu0 %v3818
        %v3916 = vpop.f32.mrb[0].mxu0
        %v3917 = vadd.f32 0.0, %v3916
        %v3918 = vpop.f32.mrb[0].mxu0
        %3919 = vmatprep.mubr.f32.mxu0 0.0
        %3920 = vmatmul.mubr.f32.gmra.mrb[0].mxu0 %v3820
        %v3921 = vpop.f32.mrb[0].mxu0
        %v3922 = vadd.f32 0.0, %v3921
        %v3923 = vpop.f32.mrb[0].mxu0
        %3924 = vmatprep.mubr.f32.mxu0 0.0
        %3925 = vmatmul.mubr.f32.gmra.mrb[0].mxu0 %v3822
        %v3926 = vpop.f32.mrb[0].mxu0
        %v3927 = vadd.f32 0.0, %v3926
        %v3928 = vpop.f32.mrb[0].mxu0
        %3929 = vmatprep.mubr.f32.mxu0 0.0
        %3930 = vmatmul.mubr.f32.gmra.mrb[0].mxu0 %v3824
        %v3931 = vpop.f32.mrb[0].mxu0
        %v3932 = vadd.f32 0.0, %v3931
        %v3933 = vpop.f32.mrb[0].mxu0
        %3934 = vmatprep.mubr.f32.mxu0 0.0
        %3935 = vmatmul.mubr.f32.gmra.mrb[0].mxu0 %v3826
        %v3936 = vpop.f32.mrb[0].mxu0
        %v3937 = vadd.f32 0.0, %v3936
        %v3938 = vpop.f32.mrb[0].mxu0
        %3939 = vdwg.mxu0
        %v3940 = vadd.f32 %v3784, %v3902
        %v3941 = vadd.f32 %v3785, %v3907
        %v3942 = vadd.f32 %v3786, %v3912
        %v3943 = vadd.f32 %v3787, %v3917
        %v3944 = vadd.f32 %v3788, %v3922
        %v3945 = vadd.f32 %v3789, %v3927
        %v3946 = vadd.f32 %v3790, %v3932
        %v3947 = vadd.f32 %v3791, %v3937
        %v3948 = vld [vmem:[%s6] sm:$0x1]
        %v3950 = vlaneseq
        %v3951 = vshrl.u32 %v3950, 7
        %v3952 = vsub.s32 0, %v3951
        %v3953 = vrot.slane %v3948, %v3952
        %v3955 = vadd.f32 %v3940, %v3953
        %v3956 = vadd.f32 %v3941, %v3953
        %v3957 = vadd.f32 %v3942, %v3953
        %v3958 = vadd.f32 %v3943, %v3953
        %v3959 = vadd.f32 %v3944, %v3953
        %v3960 = vadd.f32 %v3945, %v3953
        %v3961 = vadd.f32 %v3946, %v3953
        %v3962 = vadd.f32 %v3947, %v3953
        %v3963 = vlaneseq
        %v3964 = vshrl.u32 %v3963, 7
        %v3965 = vlaneseq
        %v3966 = vand.u32 %v3965, 127
        %v3967 = vmul.u32 %v3964, 8
        %vm3968 = vcmp.eq.s32.totalorder %v3966, %v3967
        %v3969 = vsel %vm3968, 1, 0
        %v3970 = vcvt.s32.f32 %v3969
        %vm3971 = vcmask 523264
        %v3973 = vsel %vm3971, %v3970, 0
        %3975 = vmatprep.subr.mxu0 0.0
        %3976 = vmatpush1.msra.mxu0 %v3955
        %3977 = vmatprep.subr.mxu0 0.0
        %3978 = vmatpush1.msra.mxu0 %v3956
        %3979 = vmatprep.subr.mxu0 0.0
        %3980 = vmatpush1.msra.mxu0 %v3957
        %3981 = vmatprep.subr.mxu0 0.0
        %3982 = vmatpush1.msra.mxu0 %v3958
        %3983 = vmatprep.subr.mxu0 0.0
        %3984 = vmatpush1.msra.mxu0 %v3959
        %3985 = vmatprep.subr.mxu0 0.0
        %3986 = vmatpush1.msra.mxu0 %v3960
        %3987 = vmatprep.subr.mxu0 0.0
        %3988 = vmatpush1.msra.mxu0 %v3961
        %3989 = vmatprep.subr.mxu0 0.0
        %3990 = vmatpush1.msra.mxu0 %v3962
        %3991 = vmatprep.subr.mxu0 0.0
        %3992 = vmatpush1.msra.mxu0 0.0
        %3993 = vmatprep.subr.mxu0 0.0
        %3994 = vmatpush1.msra.mxu0 0.0
        %3995 = vmatprep.subr.mxu0 0.0
        %3996 = vmatpush1.msra.mxu0 0.0
        %3997 = vmatprep.subr.mxu0 0.0
        %3998 = vmatpush1.msra.mxu0 0.0
        %3999 = vmatprep.subr.mxu0 0.0
        %4000 = vmatpush1.msra.mxu0 0.0
        %4001 = vmatprep.subr.mxu0 0.0
        %4002 = vmatpush1.msra.mxu0 0.0
        %4003 = vmatprep.subr.mxu0 0.0
        %4004 = vmatpush1.msra.mxu0 0.0
        %4005 = vmatprep.subr.mxu0 0.0
        %4006 = vmatpush1.msra.mxu0 0.0
        %4007 = vmatprep.subr.mxu0 0.0
        %4008 = vmatpush1.msra.mxu0 0.0
        %4009 = vmatprep.subr.mxu0 0.0
        %4010 = vmatpush1.msra.mxu0 0.0
        %4011 = vmatprep.subr.mxu0 0.0
        %4012 = vmatpush1.msra.mxu0 0.0
        %4013 = vmatprep.subr.mxu0 0.0
        %4014 = vmatpush1.msra.mxu0 0.0
        %4015 = vmatprep.subr.mxu0 0.0
        %4016 = vmatpush1.msra.mxu0 0.0
        %4017 = vmatprep.subr.mxu0 0.0
        %4018 = vmatpush1.msra.mxu0 0.0
        %4019 = vmatprep.subr.mxu0 0.0
        %4020 = vmatpush1.msra.mxu0 0.0
        %4021 = vmatprep.subr.mxu0 0.0
        %4022 = vmatpush1.msra.mxu0 0.0
        %4023 = vmatprep.subr.mxu0 0.0
        %4024 = vmatpush1.msra.mxu0 0.0
        %4025 = vmatprep.subr.mxu0 0.0
        %4026 = vmatpush1.msra.mxu0 0.0
        %4027 = vmatprep.subr.mxu0 0.0
        %4028 = vmatpush1.msra.mxu0 0.0
        %4029 = vmatprep.subr.mxu0 0.0
        %4030 = vmatpush1.msra.mxu0 0.0
        %4031 = vmatprep.subr.mxu0 0.0
        %4032 = vmatpush1.msra.mxu0 0.0
        %4033 = vmatprep.subr.mxu0 0.0
        %4034 = vmatpush1.msra.mxu0 0.0
        %4035 = vmatprep.subr.mxu0 0.0
        %4036 = vmatpush1.msra.mxu0 0.0
        %4037 = vmatprep.subr.mxu0 0.0
        %4038 = vmatpush1.msra.mxu0 0.0
        %4039 = vmatprep.mubr.f32.mxu0 0.0
        %4040 = vmatmul.mubr.f32.gmra.mrb[0].mxu0 %v3973
        %v4041 = vpop.f32.mrb[0].mxu0
        %v4042 = vadd.f32 0.0, %v4041
        %v4043 = vpop.f32.mrb[0].mxu0
        %4044 = vdwg.mxu0
        %v4045 = vmax.f32 %v4042, 0.0
        %v4046 = vld [vmem:[%s7] sm:$0xff]
        %v4047 = vld [vmem:[%s7 + $0x8] sm:$0xff]
        %v4048 = vld [vmem:[%s7 + $0x10] sm:$0xff]
        %v4049 = vld [vmem:[%s7 + $0x18] sm:$0xff]
        %v4050 = vld [vmem:[%s7 + $0x20] sm:$0xff]
        %v4051 = vld [vmem:[%s7 + $0x28] sm:$0xff]
        %v4052 = vld [vmem:[%s7 + $0x30] sm:$0xff]
        %v4053 = vld [vmem:[%s7 + $0x38] sm:$0xff]
        %v4054 = vld [vmem:[%s7 + $0x40] sm:$0xff]
        %v4055 = vld [vmem:[%s7 + $0x48] sm:$0xff]
        %v4056 = vld [vmem:[%s7 + $0x50] sm:$0xff]
        %v4057 = vld [vmem:[%s7 + $0x58] sm:$0xff]
        %v4058 = vld [vmem:[%s7 + $0x60] sm:$0xff]
        %v4059 = vld [vmem:[%s7 + $0x68] sm:$0xff]
        %v4060 = vld [vmem:[%s7 + $0x70] sm:$0xff]
        %v4061 = vld [vmem:[%s7 + $0x78] sm:$0xff]
        %v4062 = vld [vmem:[%s8] sm:$0x1]
        %v4064 = vlaneseq
        %v4065 = vshrl.u32 %v4064, 7
        %v4066 = vsub.s32 0, %v4065
        %v4067 = vrot.slane %v4062, %v4066
        %4069 = vmatprep.subr.mxu0 0.0
        %4070 = vmatpush1.msra.mxu0 %v4046
        %4071 = vmatprep.subr.mxu0 0.0
        %4072 = vmatpush1.msra.mxu0 %v4047
        %4073 = vmatprep.subr.mxu0 0.0
        %4074 = vmatpush1.msra.mxu0 %v4048
        %4075 = vmatprep.subr.mxu0 0.0
        %4076 = vmatpush1.msra.mxu0 %v4049
        %4077 = vmatprep.subr.mxu0 0.0
        %4078 = vmatpush1.msra.mxu0 %v4050
        %4079 = vmatprep.subr.mxu0 0.0
        %4080 = vmatpush1.msra.mxu0 %v4051
        %4081 = vmatprep.subr.mxu0 0.0
        %4082 = vmatpush1.msra.mxu0 %v4052
        %4083 = vmatprep.subr.mxu0 0.0
        %4084 = vmatpush1.msra.mxu0 %v4053
        %4085 = vmatprep.subr.mxu0 0.0
        %4086 = vmatpush1.msra.mxu0 %v4054
        %4087 = vmatprep.subr.mxu0 0.0
        %4088 = vmatpush1.msra.mxu0 %v4055
        %4089 = vmatprep.subr.mxu0 0.0
        %4090 = vmatpush1.msra.mxu0 %v4056
        %4091 = vmatprep.subr.mxu0 0.0
        %4092 = vmatpush1.msra.mxu0 %v4057
        %4093 = vmatprep.subr.mxu0 0.0
        %4094 = vmatpush1.msra.mxu0 %v4058
        %4095 = vmatprep.subr.mxu0 0.0
        %4096 = vmatpush1.msra.mxu0 %v4059
        %4097 = vmatprep.subr.mxu0 0.0
        %4098 = vmatpush1.msra.mxu0 %v4060
        %4099 = vmatprep.subr.mxu0 0.0
        %4100 = vmatpush1.msra.mxu0 %v4061
        %4101 = vmatprep.subr.mxu0 0.0
        %4102 = vmatpush1.msra.mxu0 0.0
        %4103 = vmatprep.subr.mxu0 0.0
        %4104 = vmatpush1.msra.mxu0 0.0
        %4105 = vmatprep.subr.mxu0 0.0
        %4106 = vmatpush1.msra.mxu0 0.0
        %4107 = vmatprep.subr.mxu0 0.0
        %4108 = vmatpush1.msra.mxu0 0.0
        %4109 = vmatprep.subr.mxu0 0.0
        %4110 = vmatpush1.msra.mxu0 0.0
        %4111 = vmatprep.subr.mxu0 0.0
        %4112 = vmatpush1.msra.mxu0 0.0
        %4113 = vmatprep.subr.mxu0 0.0
        %4114 = vmatpush1.msra.mxu0 0.0
        %4115 = vmatprep.subr.mxu0 0.0
        %4116 = vmatpush1.msra.mxu0 0.0
        %4117 = vmatprep.subr.mxu0 0.0
        %4118 = vmatpush1.msra.mxu0 0.0
        %4119 = vmatprep.subr.mxu0 0.0
        %4120 = vmatpush1.msra.mxu0 0.0
        %4121 = vmatprep.subr.mxu0 0.0
        %4122 = vmatpush1.msra.mxu0 0.0
        %4123 = vmatprep.subr.mxu0 0.0
        %4124 = vmatpush1.msra.mxu0 0.0
        %4125 = vmatprep.subr.mxu0 0.0
        %4126 = vmatpush1.msra.mxu0 0.0
        %4127 = vmatprep.subr.mxu0 0.0
        %4128 = vmatpush1.msra.mxu0 0.0
        %4129 = vmatprep.subr.mxu0 0.0
        %4130 = vmatpush1.msra.mxu0 0.0
        %4131 = vmatprep.subr.mxu0 0.0
        %4132 = vmatpush1.msra.mxu0 0.0
        %4133 = vmatprep.mubr.f32.mxu0 0.0
        %4134 = vmatmul.mubr.f32.gmra.mrb[0].mxu0 %v4045
        %v4135 = vpop.f32.mrb[0].mxu0
        %v4136 = vadd.f32 %v4067, %v4135
        %v4137 = vpop.f32.mrb[0].mxu0
        %4138 = vdwg.mxu0
        %v4139 = vmax.f32 %v4136, 0.0
        %v4140 = vld [vmem:[%s9] sm:$0xff]
        %v4141 = vld [vmem:[%s9 + $0x8] sm:$0xff]
        %v4142 = vld [vmem:[%s9 + $0x10] sm:$0xff]
        %v4143 = vld [vmem:[%s9 + $0x18] sm:$0xff]
        %v4144 = vld [vmem:[%s9 + $0x20] sm:$0xff]
        %v4145 = vld [vmem:[%s9 + $0x28] sm:$0xff]
        %v4146 = vld [vmem:[%s9 + $0x30] sm:$0xff]
        %v4147 = vld [vmem:[%s9 + $0x38] sm:$0xff]
        %v4148 = vld [vmem:[%s9 + $0x40] sm:$0xff]
        %v4149 = vld [vmem:[%s9 + $0x48] sm:$0xff]
        %v4150 = vld [vmem:[%s9 + $0x50] sm:$0xff]
        %v4151 = vld [vmem:[%s9 + $0x58] sm:$0xff]
        %v4152 = vld [vmem:[%s9 + $0x60] sm:$0xff]
        %v4153 = vld [vmem:[%s9 + $0x68] sm:$0xff]
        %v4154 = vld [vmem:[%s9 + $0x70] sm:$0xff]
        %v4155 = vld [vmem:[%s9 + $0x78] sm:$0xff]
        %v4156 = vld [vmem:[%s10] sm:$0x1]
        %v4158 = vlaneseq
        %v4159 = vshrl.u32 %v4158, 7
        %v4160 = vsub.s32 0, %v4159
        %v4161 = vrot.slane %v4156, %v4160
        %4163 = vmatprep.subr.mxu0 0.0
        %4164 = vmatpush1.msra.mxu0 %v4140
        %4165 = vmatprep.subr.mxu0 0.0
        %4166 = vmatpush1.msra.mxu0 %v4141
        %4167 = vmatprep.subr.mxu0 0.0
        %4168 = vmatpush1.msra.mxu0 %v4142
        %4169 = vmatprep.subr.mxu0 0.0
        %4170 = vmatpush1.msra.mxu0 %v4143
        %4171 = vmatprep.subr.mxu0 0.0
        %4172 = vmatpush1.msra.mxu0 %v4144
        %4173 = vmatprep.subr.mxu0 0.0
        %4174 = vmatpush1.msra.mxu0 %v4145
        %4175 = vmatprep.subr.mxu0 0.0
        %4176 = vmatpush1.msra.mxu0 %v4146
        %4177 = vmatprep.subr.mxu0 0.0
        %4178 = vmatpush1.msra.mxu0 %v4147
        %4179 = vmatprep.subr.mxu0 0.0
        %4180 = vmatpush1.msra.mxu0 %v4148
        %4181 = vmatprep.subr.mxu0 0.0
        %4182 = vmatpush1.msra.mxu0 %v4149
        %4183 = vmatprep.subr.mxu0 0.0
        %4184 = vmatpush1.msra.mxu0 %v4150
        %4185 = vmatprep.subr.mxu0 0.0
        %4186 = vmatpush1.msra.mxu0 %v4151
        %4187 = vmatprep.subr.mxu0 0.0
        %4188 = vmatpush1.msra.mxu0 %v4152
        %4189 = vmatprep.subr.mxu0 0.0
        %4190 = vmatpush1.msra.mxu0 %v4153
        %4191 = vmatprep.subr.mxu0 0.0
        %4192 = vmatpush1.msra.mxu0 %v4154
        %4193 = vmatprep.subr.mxu0 0.0
        %4194 = vmatpush1.msra.mxu0 %v4155
        %4195 = vmatprep.subr.mxu0 0.0
        %4196 = vmatpush1.msra.mxu0 0.0
        %4197 = vmatprep.subr.mxu0 0.0
        %4198 = vmatpush1.msra.mxu0 0.0
        %4199 = vmatprep.subr.mxu0 0.0
        %4200 = vmatpush1.msra.mxu0 0.0
        %4201 = vmatprep.subr.mxu0 0.0
        %4202 = vmatpush1.msra.mxu0 0.0
        %4203 = vmatprep.subr.mxu0 0.0
        %4204 = vmatpush1.msra.mxu0 0.0
        %4205 = vmatprep.subr.mxu0 0.0
        %4206 = vmatpush1.msra.mxu0 0.0
        %4207 = vmatprep.subr.mxu0 0.0
        %4208 = vmatpush1.msra.mxu0 0.0
        %4209 = vmatprep.subr.mxu0 0.0
        %4210 = vmatpush1.msra.mxu0 0.0
        %4211 = vmatprep.subr.mxu0 0.0
        %4212 = vmatpush1.msra.mxu0 0.0
        %4213 = vmatprep.subr.mxu0 0.0
        %4214 = vmatpush1.msra.mxu0 0.0
        %4215 = vmatprep.subr.mxu0 0.0
        %4216 = vmatpush1.msra.mxu0 0.0
        %4217 = vmatprep.subr.mxu0 0.0
        %4218 = vmatpush1.msra.mxu0 0.0
        %4219 = vmatprep.subr.mxu0 0.0
        %4220 = vmatpush1.msra.mxu0 0.0
        %4221 = vmatprep.subr.mxu0 0.0
        %4222 = vmatpush1.msra.mxu0 0.0
        %4223 = vmatprep.subr.mxu0 0.0
        %4224 = vmatpush1.msra.mxu0 0.0
        %4225 = vmatprep.subr.mxu0 0.0
        %4226 = vmatpush1.msra.mxu0 0.0
        %4227 = vmatprep.mubr.f32.mxu0 0.0
        %4228 = vmatmul.mubr.f32.gmra.mrb[0].mxu0 %v4139
        %v4229 = vpop.f32.mrb[0].mxu0
        %v4230 = vadd.f32 %v4161, %v4229
        %v4231 = vpop.f32.mrb[0].mxu0
        %4232 = vdwg.mxu0
        %4233 = vst [vmem:[%s559] sm:$0xff] %v4230
        %s4234 = sand.u32 %s269, 1
        %s4235 = scalar_lea.sflag [#allocation4], %s4234
        %s4236 = sand.u32 %s269, 1
        %s4237 = smul.addr %s4236, 8
        %s4238 = scalar_lea.vmem [#allocation3], %s4237
        // Predicated region
        $region103: #{lenet5_forward.1} parent=97 // pred_check
          %p4239 = pneg %p279
        $region104: #{lenet5_forward.1} parent=97 // pred_check_branch
          %4241 = sbr.rel (%p4239) target = $region106
        $region105: #{lenet5_forward.1} parent=97 // pred_region
          %s4243 = ssub.s32 128, 128
          %4244 = vsyncadd %s4235, %s4243
          %s4245 = smul.addr %s25, 128
          %s4246 = scalar_lea.hbm %s11, %s4245
          %s4248 = sshll.u32 %s4238, 4
          %s4249 = int_to_ptr.vmem [resolvable:$true] %s4248
          %4251 = dma.vmem_to_hbm [thread:$0]  %s4249, 128, %s4246, %s4235
        $region106: #{lenet5_forward.1} parent=97 // pred_fallthru
          _
      $region98: #{lenet5_forward.1} parent=5 // pred_fallthru
        _
      %p4252 = scmp.le.s32.totalorder 2, %s20
      // Predicated region
      $region107: #{lenet5_forward.1} parent=5 // pred_check
        %p4253 = pneg %p4252
      $region108: #{lenet5_forward.1} parent=5 // pred_check_branch
        %4255 = sbr.rel (%p4253) target = $region110
      $region109: #{lenet5_forward.1} parent=5 // pred_region
        %s4256 = ssub.s32 %s20, 2
        // Predicated region
        $region111: #{lenet5_forward.1} parent=109 // pred_check
          %p4257 = pneg %p285
        $region112: #{lenet5_forward.1} parent=109 // pred_check_branch
          %4259 = sbr.rel (%p4257) target = $region114
        $region113: #{lenet5_forward.1} parent=109 // pred_region
          %s4260 = sand.u32 %s270, 1
          %s4261 = scalar_lea.sflag [#allocation4], %s4260
          %s4262 = sand.u32 %s270, 1
          %s4263 = smul.addr %s4262, 8
          %s4264 = scalar_lea.vmem [#allocation3], %s4263
          %4265 = dma.done %s4261, 128
        $region114: #{lenet5_forward.1} parent=109 // pred_fallthru
          _
      $region110: #{lenet5_forward.1} parent=5 // pred_fallthru
        _
    $region6: #{lenet5_forward.1} parent=1 // loop_footer
      %s24 = sadd.s32 1, %s20
    $region7: #{lenet5_forward.1} parent=1 // loop_footer_branch
      %19 = sbr.rel target = $region3
    $region8: #{lenet5_forward.1} parent=1 // loop_exit
      _
    %4266 = vsyncpa [#allocation4], 1
    %s4267 = scalar_lea.sflag [#allocation4], 1
    %4268 = vsyncpa %s4267, 1

</llo_original>
